<compile_context>
chip_gen: v6e
topology: v6e:2x2x1
jax: 0.10.0
libtpu: 0.0.40
codegen_flags: <defaults>
</compile_context>

<pallas_src>
import functools

import jax
import jax.numpy as jnp
from jax.experimental import pallas as pl
from jax.experimental.pallas import tpu as pltpu

LN_EPS = 1e-5


def _round_up(n, m):
    return ((n + m - 1) // m) * m


def _cdiv(a, b):
    return -(-a // b)


def _vmem_capacity_bytes():
    """Physical VMEM per TensorCore; conservative (v7x) fallback if query fails."""
    try:
        cap = getattr(pltpu.get_tpu_info(), "vmem_capacity_bytes", None)
        if cap:
            return int(cap)
    except Exception:
        pass
    return 64 << 20


def _layer_norm(x, gamma, beta):
    # x: (tm, D) f32 ; gamma/beta: (1, D) f32
    mean = jnp.mean(x, axis=-1, keepdims=True)
    centered = x - mean
    var = jnp.mean(centered * centered, axis=-1, keepdims=True)
    inv = jax.lax.rsqrt(var + LN_EPS)
    return centered * inv * gamma + beta


def _const_spec(shape, n_grid_axes, single):
    """BlockSpec for a grid-constant operand; single-buffer it when possible."""
    if n_grid_axes == 1:
        idx = lambda i: (0,) * len(shape)
    else:
        idx = lambda i, h: (0,) * len(shape)
    if single:
        try:
            return pl.BlockSpec(shape, idx, pipeline_mode=pl.Buffered(1))
        except Exception:
            pass
    return pl.BlockSpec(shape, idx)


# --------------------------------------------------------------------------
# Kernel A: weights fully resident in VMEM, H chunked inside the kernel.
# --------------------------------------------------------------------------
def _ffn_resident_kernel(x_ref, w1_ref, b1_ref, w2_ref, b2_ref, g_ref, be_ref,
                         o_ref, *, pre_lnorm, h_chunk):
    x = x_ref[...].astype(jnp.float32)            # (tm, D) f32 epilogue math
    gamma = g_ref[...]                            # (1, D)
    beta = be_ref[...]                            # (1, D)

    h_in = _layer_norm(x, gamma, beta) if pre_lnorm else x
    h_in_bf = h_in.astype(jnp.bfloat16)           # MXU operand (f32 accumulate)

    tm = x_ref.shape[0]
    D = w2_ref.shape[1]
    H = w1_ref.shape[1]
    n_chunks = H // h_chunk

    # Chunk the inner dimension: the live post-ReLU intermediate is
    # (tm, h_chunk) f32 instead of (tm, H) f32, keeping the MXU (not the
    # load/store slots / spills) as the binding unit.  Static slices of the
    # resident weight refs are zero-cost views.
    acc = jnp.zeros((tm, D), jnp.float32)
    for c in range(n_chunks):
        lo = c * h_chunk
        hc = jnp.dot(h_in_bf, w1_ref[:, lo:lo + h_chunk],
                     preferred_element_type=jnp.float32)
        hc = jnp.maximum(hc + b1_ref[:, lo:lo + h_chunk], 0.0)   # bias + ReLU
        # TODO(synk): dropout omitted (identity at inference/eval time).
        acc = acc + jnp.dot(hc.astype(jnp.bfloat16), w2_ref[lo:lo + h_chunk, :],
                            preferred_element_type=jnp.float32)

    y = acc + b2_ref[...]
    out = (y + x) if pre_lnorm else (x + _layer_norm(y, gamma, beta))
    o_ref[...] = out.astype(o_ref.dtype)


# --------------------------------------------------------------------------
# Kernel B: H streamed as a second ("arbitrary") grid axis with an f32
# accumulator in scratch — used when the weights outgrow the VMEM budget.
# --------------------------------------------------------------------------
def _ffn_stream_kernel(x_ref, w1_ref, b1_ref, w2_ref, b2_ref, g_ref, be_ref,
                       o_ref, acc_ref, *, pre_lnorm):
    h_idx = pl.program_id(1)

    @pl.when(h_idx == 0)
    def _():
        acc_ref[...] = jnp.zeros_like(acc_ref)

    x = x_ref[...].astype(jnp.float32)
    gamma = g_ref[...]
    beta = be_ref[...]
    h_in = _layer_norm(x, gamma, beta) if pre_lnorm else x

    hc = jnp.dot(h_in.astype(jnp.bfloat16), w1_ref[...],
                 preferred_element_type=jnp.float32)
    hc = jnp.maximum(hc + b1_ref[...], 0.0)
    # TODO(synk): dropout omitted (identity at inference/eval time).
    acc_ref[...] += jnp.dot(hc.astype(jnp.bfloat16), w2_ref[...],
                            preferred_element_type=jnp.float32)

    @pl.when(h_idx == pl.num_programs(1) - 1)
    def _():
        y = acc_ref[...] + b2_ref[...]
        out = (y + x) if pre_lnorm else (x + _layer_norm(y, gamma, beta))
        o_ref[...] = out.astype(o_ref.dtype)


def prepare_ff_params(params):
    """One-time conversion to the kernel's dtypes/layout.

    Hoists the f32->bf16 weight cast (and bias reshapes) out of the per-call
    path so it is not re-issued (and re-written to HBM) on every forward.
    """
    D, H = params["w1"].shape
    return {
        "w1": params["w1"].astype(jnp.bfloat16),           # (D, H)  = PyTorch W1.T
        "w2": params["w2"].astype(jnp.bfloat16),           # (H, D)  = PyTorch W2.T
        "b1": params["b1"].reshape(1, H).astype(jnp.float32),
        "b2": params["b2"].reshape(1, D).astype(jnp.float32),
        "ln_gamma": params["ln_gamma"].reshape(1, D).astype(jnp.float32),
        "ln_beta": params["ln_beta"].reshape(1, D).astype(jnp.float32),
    }


def positionwise_ff(x, params, *, pre_lnorm, tm=None, h_chunk=512,
                    h_block=None, force_stream=False):
    """Forward of Transformer-XL PositionwiseFeedForward (eval mode).

    x: (T, B, D).  params as produced by prepare_ff_params (raw f32 params are
    also accepted; they are converted per call).  Weights are stored (in, out),
    i.e. the kernel computes x @ w (== PyTorch x @ W.T).  Best performance when
    D and H are multiples of 128 (lane-dense tiles; 256 on v6e/v7x).
    """
    T, B, D = x.shape
    H = params["w1"].shape[1]
    N = T * B
    itemsize = jnp.dtype(x.dtype).itemsize

    vmem_cap = _vmem_capacity_bytes()
    weight_bytes = 2 * 2 * D * H                     # bf16 w1 + w2, one copy

    # ---- operands (all no-ops when params came from prepare_ff_params) ----
    w1 = params["w1"]
    w2 = params["w2"]
    if w1.dtype != jnp.bfloat16:
        w1 = w1.astype(jnp.bfloat16)
    if w2.dtype != jnp.bfloat16:
        w2 = w2.astype(jnp.bfloat16)
    b1 = jnp.asarray(params["b1"], jnp.float32).reshape(1, H)
    b2 = jnp.asarray(params["b2"], jnp.float32).reshape(1, D)
    gamma = jnp.asarray(params["ln_gamma"], jnp.float32).reshape(1, D)
    beta = jnp.asarray(params["ln_beta"], jnp.float32).reshape(1, D)

    # ---- row tile: multiple of 8; large on 128-MiB chips, 256 on v7x; shrink
    # for small N so there are >= ~8 grid steps (pipeline overlap, 2 TCs). ----
    if tm is None:
        tm = 512 if vmem_cap >= (100 << 20) else 256
    tm = _round_up(max(8, min(tm, _round_up(N, 8))), 8)
    while tm > 64 and _cdiv(N, tm) < 8:
        tm //= 2
    tm = max(8, _round_up(tm, 8))
    n_pad = _round_up(N, tm)
    n_rows = n_pad // tm

    x2 = x.reshape(N, D)
    if n_pad != N:
        # Zero rows pass safely through LN (rsqrt(eps) finite) and are sliced off.
        x2 = jnp.pad(x2, ((0, n_pad - N), (0, 0)))

    # ---- path selection: resident weights vs streamed H-blocks ----
    stream = force_stream or (weight_bytes > vmem_cap // 3)
    th = None
    if stream:
        th = h_block
        if th is None:
            th = next((c for c in (1024, 512, 256, 128) if c <= H and H % c == 0), None)
        if th is None or H % th != 0:
            stream = False           # H not cleanly tileable; fall back to resident

    if not stream:
        if h_chunk and h_chunk < H and H % h_chunk == 0:
            h_inner = h_chunk
        else:
            h_inner = next((c for c in (512, 256, 128) if c < H and H % c == 0), H)

    flops = 4 * n_pad * D * H
    vmem_ceiling = max(vmem_cap - (8 << 20), 32 << 20)   # respect physical VMEM

    def _call(single_buffer):
        if not stream:
            est = weight_bytes                          # single-buffered weights
            est += 2 * 2 * tm * D * itemsize            # x / out tiles, 2 buffers
            est += 2 * tm * h_inner * 4                 # chunk intermediates (f32)
            est += 4 * tm * D * 4                       # acc / LN temporaries (f32)
            if not single_buffer:
                est += weight_bytes                     # fallback: 2 weight buffers
            vmem_limit = int(min(max(est + (8 << 20), 32 << 20), vmem_ceiling))
            cost = pl.CostEstimate(
                flops=flops, transcendentals=n_pad,
                bytes_accessed=2 * n_pad * D * itemsize + weight_bytes)

            kernel = functools.partial(_ffn_resident_kernel,
                                       pre_lnorm=pre_lnorm, h_chunk=h_inner)
            return pl.pallas_call(
                kernel,
                out_shape=jax.ShapeDtypeStruct((n_pad, D), x.dtype),
                grid_spec=pltpu.PrefetchScalarGridSpec(
                    num_scalar_prefetch=0,
                    grid=(n_rows,),
                    in_specs=[
                        pl.BlockSpec((tm, D), lambda i: (i, 0)),        # x rows
                        _const_spec((D, H), 1, single_buffer),          # w1
                        _const_spec((1, H), 1, single_buffer),          # b1
                        _const_spec((H, D), 1, single_buffer),          # w2
                        _const_spec((1, D), 1, single_buffer),          # b2
                        _const_spec((1, D), 1, single_buffer),          # gamma
                        _const_spec((1, D), 1, single_buffer),          # beta
                    ],
                    out_specs=pl.BlockSpec((tm, D), lambda i: (i, 0)),
                ),
                compiler_params=pltpu.CompilerParams(
                    dimension_semantics=("parallel",),
                    vmem_limit_bytes=vmem_limit),
                cost_estimate=cost,
            )(x2, w1, b1, w2, b2, gamma, beta)

        # ---- streaming path: grid (rows, H-blocks), f32 accumulator scratch ----
        n_h = H // th
        est = 2 * 2 * 2 * D * th                        # w1/w2 chunks, 2 buffers (bf16)
        est += 2 * 2 * tm * D * itemsize                # x / out tiles, 2 buffers
        est += tm * D * 4                               # accumulator scratch
        est += 2 * tm * th * 4 + 3 * tm * D * 4         # f32 intermediates
        vmem_limit = int(min(max(est + (8 << 20), 32 << 20), vmem_ceiling))
        cost = pl.CostEstimate(
            flops=flops, transcendentals=n_pad * n_h,
            bytes_accessed=2 * n_pad * D * itemsize + n_rows * weight_bytes)

        kernel = functools.partial(_ffn_stream_kernel, pre_lnorm=pre_lnorm)
        return pl.pallas_call(
            kernel,
            out_shape=jax.ShapeDtypeStruct((n_pad, D), x.dtype),
            grid_spec=pltpu.PrefetchScalarGridSpec(
                num_scalar_prefetch=0,
                grid=(n_rows, n_h),
                in_specs=[
                    pl.BlockSpec((tm, D), lambda i, h: (i, 0)),   # x rows (resident per i)
                    pl.BlockSpec((D, th), lambda i, h: (0, h)),   # w1 column block
                    pl.BlockSpec((1, th), lambda i, h: (0, h)),   # b1 block
                    pl.BlockSpec((th, D), lambda i, h: (h, 0)),   # w2 row block
                    _const_spec((1, D), 2, single_buffer),        # b2
                    _const_spec((1, D), 2, single_buffer),        # gamma
                    _const_spec((1, D), 2, single_buffer),        # beta
                ],
                out_specs=pl.BlockSpec((tm, D), lambda i, h: (i, 0)),
                scratch_shapes=[pltpu.VMEM((tm, D), jnp.float32)],
            ),
            compiler_params=pltpu.CompilerParams(
                dimension_semantics=("parallel", "arbitrary"),
                vmem_limit_bytes=vmem_limit),
            cost_estimate=cost,
        )(x2, w1, b1, w2, b2, gamma, beta)

    try:
        out2 = _call(True)          # single-buffered constant operands
    except Exception:
        out2 = _call(False)         # conservative fallback (double-buffered)

    if n_pad != N:
        out2 = out2[:N]
    return out2.reshape(T, B, D)


def positionwise_ff_ref(x, params, *, pre_lnorm):
    """Pure-JAX f32 reference mirroring the PyTorch module (eval mode)."""
    def ln(v):
        m = jnp.mean(v, axis=-1, keepdims=True)
        c = v - m
        var = jnp.mean(c * c, axis=-1, keepdims=True)
        return c * jax.lax.rsqrt(var + LN_EPS) * params["ln_gamma"] + params["ln_beta"]

    def net(v):
        h = jnp.maximum(v @ params["w1"] + params["b1"], 0.0)
        return h @ params["w2"] + params["b2"]

    if pre_lnorm:
        return net(ln(x)) + x
    return x + ln(net(x))


if __name__ == "__main__":
    T, B = 64, 8            # N = 512 rows
    D, Hdim = 128, 1024     # lane-aligned; H is chunked at 512 inside the kernel

    key = jax.random.PRNGKey(0)
    kx, k1, k2, k3, k4, k5, k6 = jax.random.split(key, 7)

    x = jax.random.normal(kx, (T, B, D), dtype=jnp.float32)
    raw_params = {
        # Stored (in, out) so the kernel computes x @ w (== PyTorch x @ W.T).
        "w1": jax.random.normal(k1, (D, Hdim), dtype=jnp.float32) * 0.1,
        "b1": jax.random.normal(k2, (Hdim,), dtype=jnp.float32) * 0.1,
        "w2": jax.random.normal(k3, (Hdim, D), dtype=jnp.float32) * 0.1,
        "b2": jax.random.normal(k4, (D,), dtype=jnp.float32) * 0.1,
        "ln_gamma": 1.0 + 0.1 * jax.random.normal(k5, (D,), dtype=jnp.float32),
        "ln_beta": 0.1 * jax.random.normal(k6, (D,), dtype=jnp.float32),
    }
    # Hoist the bf16 weight cast out of the per-call path (one-time prep).
    params = prepare_ff_params(raw_params)

    TOL = dict(atol=5e-2, rtol=5e-2)   # bf16 MXU operands, f32 accumulate/epilogue
    ref_post = positionwise_ff_ref(x, raw_params, pre_lnorm=False)
    ref_pre = positionwise_ff_ref(x, raw_params, pre_lnorm=True)

    # Resident-weights path (in-kernel H chunking), both LN placements.
    out = jax.block_until_ready(positionwise_ff(x, params, pre_lnorm=False))
    assert out.shape == x.shape
    assert jnp.allclose(out, ref_post, **TOL), "mismatch vs reference (post-lnorm)"

    out_pre = jax.block_until_ready(positionwise_ff(x, params, pre_lnorm=True))
    assert jnp.allclose(out_pre, ref_pre, **TOL), "mismatch vs reference (pre-lnorm)"

    # Grid-level H-streaming path (used when weights outgrow ~1/3 of VMEM).
    out_st = jax.block_until_ready(
        positionwise_ff(x, params, pre_lnorm=False, force_stream=True, h_block=256))
    assert jnp.allclose(out_st, ref_post, **TOL), "mismatch vs reference (stream, post-lnorm)"

    out_st_pre = jax.block_until_ready(
        positionwise_ff(x, params, pre_lnorm=True, force_stream=True, h_block=256))
    assert jnp.allclose(out_st_pre, ref_pre, **TOL), "mismatch vs reference (stream, pre-lnorm)"

    # Row-padding path (N not a multiple of tm).
    xs = x[:5, :3]          # N = 15 -> tm shrinks to 16, one padded row
    out_s = jax.block_until_ready(positionwise_ff(xs, params, pre_lnorm=False))
    ref_s = positionwise_ff_ref(xs, raw_params, pre_lnorm=False)
    assert jnp.allclose(out_s, ref_s, **TOL), "mismatch vs reference (padded rows)"

    print("KERNEL_OK")
</pallas_src>

<mosaic_0001>
module attributes {stable_mosaic.version = 11 : i64} {
  func.func @_ffn_resident_kernel(%arg0: i32, %arg1: memref<64x128xf32, #tpu.memory_space<vmem>>, %arg2: memref<128x1024xbf16, #tpu.memory_space<vmem>>, %arg3: memref<1x1024xf32, #tpu.memory_space<vmem>>, %arg4: memref<1024x128xbf16, #tpu.memory_space<vmem>>, %arg5: memref<1x128xf32, #tpu.memory_space<vmem>>, %arg6: memref<1x128xf32, #tpu.memory_space<vmem>>, %arg7: memref<1x128xf32, #tpu.memory_space<vmem>>, %arg8: memref<64x128xf32, #tpu.memory_space<vmem>>) attributes {dimension_semantics = [#tpu.dimension_semantics<parallel>], iteration_bounds = array<i64: 8>, scalar_prefetch = 0 : i64, scratch_operands = 0 : i64, tpu.core_type = #tpu.core_type<tc>, window_params = [{transform_indices = @transform_0, window_bounds = array<i64: 64, 128>}, {pipeline_mode = #tpu.pipeline_mode<synchronous>, transform_indices = @transform_1, window_bounds = array<i64: 128, 1024>}, {pipeline_mode = #tpu.pipeline_mode<synchronous>, transform_indices = @transform_2, window_bounds = array<i64: 1, 1024>}, {pipeline_mode = #tpu.pipeline_mode<synchronous>, transform_indices = @transform_3, window_bounds = array<i64: 1024, 128>}, {pipeline_mode = #tpu.pipeline_mode<synchronous>, transform_indices = @transform_4, window_bounds = array<i64: 1, 128>}, {pipeline_mode = #tpu.pipeline_mode<synchronous>, transform_indices = @transform_5, window_bounds = array<i64: 1, 128>}, {pipeline_mode = #tpu.pipeline_mode<synchronous>, transform_indices = @transform_6, window_bounds = array<i64: 1, 128>}, {transform_indices = @transform_7, window_bounds = array<i64: 64, 128>}]} {
    %c0 = arith.constant 0 : index
    %c0_0 = arith.constant 0 : index
    %0 = vector.load %arg1[%c0, %c0_0] : memref<64x128xf32, #tpu.memory_space<vmem>>, vector<64x128xf32>
    %c0_1 = arith.constant 0 : index
    %c0_2 = arith.constant 0 : index
    %1 = vector.load %arg6[%c0_1, %c0_2] : memref<1x128xf32, #tpu.memory_space<vmem>>, vector<1x128xf32>
    %c0_3 = arith.constant 0 : index
    %c0_4 = arith.constant 0 : index
    %2 = vector.load %arg7[%c0_3, %c0_4] : memref<1x128xf32, #tpu.memory_space<vmem>>, vector<1x128xf32>
    %3 = arith.truncf %0 : vector<64x128xf32> to vector<64x128xbf16>
    %cst = arith.constant 0.000000e+00 : f32
    %4 = vector.broadcast %cst : f32 to vector<64x128xf32>
    %c0_5 = arith.constant 0 : index
    %c0_6 = arith.constant 0 : index
    %5 = vector.load %arg2[%c0_5, %c0_6] : memref<128x1024xbf16, #tpu.memory_space<vmem>>, vector<128x512xbf16>
    %cst_7 = arith.constant dense<0.000000e+00> : vector<64x512xf32>
    %6 = tpu.matmul %3, %5, %cst_7 {dimension_numbers = #tpu.dot_dimension_numbers<[1], [0], [0], [1], [0, 0, 1, 1], [], []>} : vector<64x128xbf16>, vector<128x512xbf16>, vector<64x512xf32> -> vector<64x512xf32>
    %c0_8 = arith.constant 0 : index
    %c0_9 = arith.constant 0 : index
    %7 = vector.load %arg3[%c0_8, %c0_9] : memref<1x1024xf32, #tpu.memory_space<vmem>>, vector<1x512xf32>
    %8 = vector.broadcast %7 : vector<1x512xf32> to vector<64x512xf32>
    %9 = arith.addf %6, %8 : vector<64x512xf32>
    %cst_10 = arith.constant 0.000000e+00 : f32
    %10 = vector.broadcast %cst_10 : f32 to vector<64x512xf32>
    %11 = arith.maximumf %9, %10 : vector<64x512xf32>
    %12 = arith.truncf %11 : vector<64x512xf32> to vector<64x512xbf16>
    %c0_11 = arith.constant 0 : index
    %c0_12 = arith.constant 0 : index
    %13 = vector.load %arg4[%c0_11, %c0_12] : memref<1024x128xbf16, #tpu.memory_space<vmem>>, vector<512x128xbf16>
    %cst_13 = arith.constant dense<0.000000e+00> : vector<64x128xf32>
    %14 = tpu.matmul %12, %13, %cst_13 {dimension_numbers = #tpu.dot_dimension_numbers<[1], [0], [0], [1], [0, 0, 1, 1], [], []>} : vector<64x512xbf16>, vector<512x128xbf16>, vector<64x128xf32> -> vector<64x128xf32>
    %15 = arith.addf %4, %14 : vector<64x128xf32>
    %c0_14 = arith.constant 0 : index
    %c512 = arith.constant 512 : index
    %16 = vector.load %arg2[%c0_14, %c512] : memref<128x1024xbf16, #tpu.memory_space<vmem>>, vector<128x512xbf16>
    %cst_15 = arith.constant dense<0.000000e+00> : vector<64x512xf32>
    %17 = tpu.matmul %3, %16, %cst_15 {dimension_numbers = #tpu.dot_dimension_numbers<[1], [0], [0], [1], [0, 0, 1, 1], [], []>} : vector<64x128xbf16>, vector<128x512xbf16>, vector<64x512xf32> -> vector<64x512xf32>
    %c0_16 = arith.constant 0 : index
    %c512_17 = arith.constant 512 : index
    %18 = vector.load %arg3[%c0_16, %c512_17] : memref<1x1024xf32, #tpu.memory_space<vmem>>, vector<1x512xf32>
    %19 = vector.broadcast %18 : vector<1x512xf32> to vector<64x512xf32>
    %20 = arith.addf %17, %19 : vector<64x512xf32>
    %cst_18 = arith.constant 0.000000e+00 : f32
    %21 = vector.broadcast %cst_18 : f32 to vector<64x512xf32>
    %22 = arith.maximumf %20, %21 : vector<64x512xf32>
    %23 = arith.truncf %22 : vector<64x512xf32> to vector<64x512xbf16>
    %c512_19 = arith.constant 512 : index
    %c0_20 = arith.constant 0 : index
    %24 = vector.load %arg4[%c512_19, %c0_20] : memref<1024x128xbf16, #tpu.memory_space<vmem>>, vector<512x128xbf16>
    %cst_21 = arith.constant dense<0.000000e+00> : vector<64x128xf32>
    %25 = tpu.matmul %23, %24, %cst_21 {dimension_numbers = #tpu.dot_dimension_numbers<[1], [0], [0], [1], [0, 0, 1, 1], [], []>} : vector<64x512xbf16>, vector<512x128xbf16>, vector<64x128xf32> -> vector<64x128xf32>
    %26 = arith.addf %15, %25 : vector<64x128xf32>
    %c0_22 = arith.constant 0 : index
    %c0_23 = arith.constant 0 : index
    %27 = vector.load %arg5[%c0_22, %c0_23] : memref<1x128xf32, #tpu.memory_space<vmem>>, vector<1x128xf32>
    %28 = vector.broadcast %27 : vector<1x128xf32> to vector<64x128xf32>
    %29 = arith.addf %26, %28 : vector<64x128xf32>
    %cst_24 = arith.constant dense<0.000000e+00> : vector<64xf32>
    %30 = vector.multi_reduction <add>, %29, %cst_24 [1] : vector<64x128xf32> to vector<64xf32>
    %31 = vector.shape_cast %30 : vector<64xf32> to vector<64x1xf32>
    %cst_25 = arith.constant 1.280000e+02 : f32
    %32 = vector.broadcast %cst_25 : f32 to vector<64x1xf32>
    %33 = arith.divf %31, %32 : vector<64x1xf32>
    %34 = vector.broadcast %33 : vector<64x1xf32> to vector<64x128xf32>
    %35 = arith.subf %29, %34 : vector<64x128xf32>
    %36 = arith.mulf %35, %35 : vector<64x128xf32>
    %cst_26 = arith.constant dense<0.000000e+00> : vector<64xf32>
    %37 = vector.multi_reduction <add>, %36, %cst_26 [1] : vector<64x128xf32> to vector<64xf32>
    %38 = vector.shape_cast %37 : vector<64xf32> to vector<64x1xf32>
    %cst_27 = arith.constant 1.280000e+02 : f32
    %39 = vector.broadcast %cst_27 : f32 to vector<64x1xf32>
    %40 = arith.divf %38, %39 : vector<64x1xf32>
    %cst_28 = arith.constant 9.99999974E-6 : f32
    %41 = vector.broadcast %cst_28 : f32 to vector<64x1xf32>
    %42 = arith.addf %40, %41 : vector<64x1xf32>
    %43 = math.rsqrt %42 : vector<64x1xf32>
    %44 = vector.broadcast %43 : vector<64x1xf32> to vector<64x128xf32>
    %45 = arith.mulf %35, %44 : vector<64x128xf32>
    %46 = vector.broadcast %1 : vector<1x128xf32> to vector<64x128xf32>
    %47 = arith.mulf %45, %46 : vector<64x128xf32>
    %48 = vector.broadcast %2 : vector<1x128xf32> to vector<64x128xf32>
    %49 = arith.addf %47, %48 : vector<64x128xf32>
    %50 = arith.addf %0, %49 : vector<64x128xf32>
    %c0_29 = arith.constant 0 : index
    %c0_30 = arith.constant 0 : index
    %51 = vector.load %arg8[%c0_29, %c0_30] : memref<64x128xf32, #tpu.memory_space<vmem>>, vector<64x128xf32>
    tpu.vector_store %arg8[%c0_29, %c0_30], %50 {strides = array<i32>} : memref<64x128xf32, #tpu.memory_space<vmem>>, vector<64x128xf32>,
    return
  }
  func.func @transform_0(%arg0: i32) -> (i32, i32) {
    %c0_i32 = arith.constant 0 : i32
    %c0_i32_0 = arith.constant 0 : i32
    return %arg0, %c0_i32 : i32, i32
  }
  func.func @transform_1(%arg0: i32) -> (i32, i32) {
    %c0_i32 = arith.constant 0 : i32
    %c0_i32_0 = arith.constant 0 : i32
    %c0_i32_1 = arith.constant 0 : i32
    return %c0_i32, %c0_i32_0 : i32, i32
  }
  func.func @transform_2(%arg0: i32) -> (i32, i32) {
    %c0_i32 = arith.constant 0 : i32
    %c0_i32_0 = arith.constant 0 : i32
    %c0_i32_1 = arith.constant 0 : i32
    return %c0_i32, %c0_i32_0 : i32, i32
  }
  func.func @transform_3(%arg0: i32) -> (i32, i32) {
    %c0_i32 = arith.constant 0 : i32
    %c0_i32_0 = arith.constant 0 : i32
    %c0_i32_1 = arith.constant 0 : i32
    return %c0_i32, %c0_i32_0 : i32, i32
  }
  func.func @transform_4(%arg0: i32) -> (i32, i32) {
    %c0_i32 = arith.constant 0 : i32
    %c0_i32_0 = arith.constant 0 : i32
    %c0_i32_1 = arith.constant 0 : i32
    return %c0_i32, %c0_i32_0 : i32, i32
  }
  func.func @transform_5(%arg0: i32) -> (i32, i32) {
    %c0_i32 = arith.constant 0 : i32
    %c0_i32_0 = arith.constant 0 : i32
    %c0_i32_1 = arith.constant 0 : i32
    return %c0_i32, %c0_i32_0 : i32, i32
  }
  func.func @transform_6(%arg0: i32) -> (i32, i32) {
    %c0_i32 = arith.constant 0 : i32
    %c0_i32_0 = arith.constant 0 : i32
    %c0_i32_1 = arith.constant 0 : i32
    return %c0_i32, %c0_i32_0 : i32, i32
  }
  func.func @transform_7(%arg0: i32) -> (i32, i32) {
    %c0_i32 = arith.constant 0 : i32
    %c0_i32_0 = arith.constant 0 : i32
    return %arg0, %c0_i32 : i32, i32
  }
}

module attributes {stable_mosaic.version = 11 : i64} {
  func.func @_ffn_resident_kernel(%arg0: i32, %arg1: memref<64x128xf32, #tpu.memory_space<vmem>>, %arg2: memref<128x1024xbf16, #tpu.memory_space<vmem>>, %arg3: memref<1x1024xf32, #tpu.memory_space<vmem>>, %arg4: memref<1024x128xbf16, #tpu.memory_space<vmem>>, %arg5: memref<1x128xf32, #tpu.memory_space<vmem>>, %arg6: memref<1x128xf32, #tpu.memory_space<vmem>>, %arg7: memref<1x128xf32, #tpu.memory_space<vmem>>, %arg8: memref<64x128xf32, #tpu.memory_space<vmem>>) attributes {dimension_semantics = [#tpu.dimension_semantics<parallel>], iteration_bounds = array<i64: 8>, scalar_prefetch = 0 : i64, scratch_operands = 0 : i64, tpu.core_type = #tpu.core_type<tc>, window_params = [{transform_indices = @transform_0, window_bounds = array<i64: 64, 128>}, {pipeline_mode = #tpu.pipeline_mode<synchronous>, transform_indices = @transform_1, window_bounds = array<i64: 128, 1024>}, {pipeline_mode = #tpu.pipeline_mode<synchronous>, transform_indices = @transform_2, window_bounds = array<i64: 1, 1024>}, {pipeline_mode = #tpu.pipeline_mode<synchronous>, transform_indices = @transform_3, window_bounds = array<i64: 1024, 128>}, {pipeline_mode = #tpu.pipeline_mode<synchronous>, transform_indices = @transform_4, window_bounds = array<i64: 1, 128>}, {pipeline_mode = #tpu.pipeline_mode<synchronous>, transform_indices = @transform_5, window_bounds = array<i64: 1, 128>}, {pipeline_mode = #tpu.pipeline_mode<synchronous>, transform_indices = @transform_6, window_bounds = array<i64: 1, 128>}, {transform_indices = @transform_7, window_bounds = array<i64: 64, 128>}]} {
    %c0 = arith.constant 0 : index
    %c0_0 = arith.constant 0 : index
    %0 = vector.load %arg1[%c0, %c0_0] : memref<64x128xf32, #tpu.memory_space<vmem>>, vector<64x128xf32>
    %c0_1 = arith.constant 0 : index
    %c0_2 = arith.constant 0 : index
    %1 = vector.load %arg6[%c0_1, %c0_2] : memref<1x128xf32, #tpu.memory_space<vmem>>, vector<1x128xf32>
    %c0_3 = arith.constant 0 : index
    %c0_4 = arith.constant 0 : index
    %2 = vector.load %arg7[%c0_3, %c0_4] : memref<1x128xf32, #tpu.memory_space<vmem>>, vector<1x128xf32>
    %3 = arith.truncf %0 : vector<64x128xf32> to vector<64x128xbf16>
    %cst = arith.constant 0.000000e+00 : f32
    %4 = vector.broadcast %cst : f32 to vector<64x128xf32>
    %c0_5 = arith.constant 0 : index
    %c0_6 = arith.constant 0 : index
    %5 = vector.load %arg2[%c0_5, %c0_6] : memref<128x1024xbf16, #tpu.memory_space<vmem>>, vector<128x512xbf16>
    %cst_7 = arith.constant dense<0.000000e+00> : vector<64x512xf32>
    %6 = tpu.matmul %3, %5, %cst_7 {dimension_numbers = #tpu.dot_dimension_numbers<[1], [0], [0], [1], [0, 0, 1, 1], [], []>} : vector<64x128xbf16>, vector<128x512xbf16>, vector<64x512xf32> -> vector<64x512xf32>
    %c0_8 = arith.constant 0 : index
    %c0_9 = arith.constant 0 : index
    %7 = vector.load %arg3[%c0_8, %c0_9] : memref<1x1024xf32, #tpu.memory_space<vmem>>, vector<1x512xf32>
    %8 = vector.broadcast %7 : vector<1x512xf32> to vector<64x512xf32>
    %9 = arith.addf %6, %8 : vector<64x512xf32>
    %cst_10 = arith.constant 0.000000e+00 : f32
    %10 = vector.broadcast %cst_10 : f32 to vector<64x512xf32>
    %11 = arith.maximumf %9, %10 : vector<64x512xf32>
    %12 = arith.truncf %11 : vector<64x512xf32> to vector<64x512xbf16>
    %c0_11 = arith.constant 0 : index
    %c0_12 = arith.constant 0 : index
    %13 = vector.load %arg4[%c0_11, %c0_12] : memref<1024x128xbf16, #tpu.memory_space<vmem>>, vector<512x128xbf16>
    %cst_13 = arith.constant dense<0.000000e+00> : vector<64x128xf32>
    %14 = tpu.matmul %12, %13, %cst_13 {dimension_numbers = #tpu.dot_dimension_numbers<[1], [0], [0], [1], [0, 0, 1, 1], [], []>} : vector<64x512xbf16>, vector<512x128xbf16>, vector<64x128xf32> -> vector<64x128xf32>
    %15 = arith.addf %4, %14 : vector<64x128xf32>
    %c0_14 = arith.constant 0 : index
    %c512 = arith.constant 512 : index
    %16 = vector.load %arg2[%c0_14, %c512] : memref<128x1024xbf16, #tpu.memory_space<vmem>>, vector<128x512xbf16>
    %cst_15 = arith.constant dense<0.000000e+00> : vector<64x512xf32>
    %17 = tpu.matmul %3, %16, %cst_15 {dimension_numbers = #tpu.dot_dimension_numbers<[1], [0], [0], [1], [0, 0, 1, 1], [], []>} : vector<64x128xbf16>, vector<128x512xbf16>, vector<64x512xf32> -> vector<64x512xf32>
    %c0_16 = arith.constant 0 : index
    %c512_17 = arith.constant 512 : index
    %18 = vector.load %arg3[%c0_16, %c512_17] : memref<1x1024xf32, #tpu.memory_space<vmem>>, vector<1x512xf32>
    %19 = vector.broadcast %18 : vector<1x512xf32> to vector<64x512xf32>
    %20 = arith.addf %17, %19 : vector<64x512xf32>
    %cst_18 = arith.constant 0.000000e+00 : f32
    %21 = vector.broadcast %cst_18 : f32 to vector<64x512xf32>
    %22 = arith.maximumf %20, %21 : vector<64x512xf32>
    %23 = arith.truncf %22 : vector<64x512xf32> to vector<64x512xbf16>
    %c512_19 = arith.constant 512 : index
    %c0_20 = arith.constant 0 : index
    %24 = vector.load %arg4[%c512_19, %c0_20] : memref<1024x128xbf16, #tpu.memory_space<vmem>>, vector<512x128xbf16>
    %cst_21 = arith.constant dense<0.000000e+00> : vector<64x128xf32>
    %25 = tpu.matmul %23, %24, %cst_21 {dimension_numbers = #tpu.dot_dimension_numbers<[1], [0], [0], [1], [0, 0, 1, 1], [], []>} : vector<64x512xbf16>, vector<512x128xbf16>, vector<64x128xf32> -> vector<64x128xf32>
    %26 = arith.addf %15, %25 : vector<64x128xf32>
    %c0_22 = arith.constant 0 : index
    %c0_23 = arith.constant 0 : index
    %27 = vector.load %arg5[%c0_22, %c0_23] : memref<1x128xf32, #tpu.memory_space<vmem>>, vector<1x128xf32>
    %28 = vector.broadcast %27 : vector<1x128xf32> to vector<64x128xf32>
    %29 = arith.addf %26, %28 : vector<64x128xf32>
    %cst_24 = arith.constant dense<0.000000e+00> : vector<64xf32>
    %30 = vector.multi_reduction <add>, %29, %cst_24 [1] : vector<64x128xf32> to vector<64xf32>
    %31 = vector.shape_cast %30 : vector<64xf32> to vector<64x1xf32>
    %cst_25 = arith.constant 1.280000e+02 : f32
    %32 = vector.broadcast %cst_25 : f32 to vector<64x1xf32>
    %33 = arith.divf %31, %32 : vector<64x1xf32>
    %34 = vector.broadcast %33 : vector<64x1xf32> to vector<64x128xf32>
    %35 = arith.subf %29, %34 : vector<64x128xf32>
    %36 = arith.mulf %35, %35 : vector<64x128xf32>
    %cst_26 = arith.constant dense<0.000000e+00> : vector<64xf32>
    %37 = vector.multi_reduction <add>, %36, %cst_26 [1] : vector<64x128xf32> to vector<64xf32>
    %38 = vector.shape_cast %37 : vector<64xf32> to vector<64x1xf32>
    %cst_27 = arith.constant 1.280000e+02 : f32
    %39 = vector.broadcast %cst_27 : f32 to vector<64x1xf32>
    %40 = arith.divf %38, %39 : vector<64x1xf32>
    %cst_28 = arith.constant 9.99999974E-6 : f32
    %41 = vector.broadcast %cst_28 : f32 to vector<64x1xf32>
    %42 = arith.addf %40, %41 : vector<64x1xf32>
    %43 = math.rsqrt %42 : vector<64x1xf32>
    %44 = vector.broadcast %43 : vector<64x1xf32> to vector<64x128xf32>
    %45 = arith.mulf %35, %44 : vector<64x128xf32>
    %46 = vector.broadcast %1 : vector<1x128xf32> to vector<64x128xf32>
    %47 = arith.mulf %45, %46 : vector<64x128xf32>
    %48 = vector.broadcast %2 : vector<1x128xf32> to vector<64x128xf32>
    %49 = arith.addf %47, %48 : vector<64x128xf32>
    %50 = arith.addf %0, %49 : vector<64x128xf32>
    %c0_29 = arith.constant 0 : index
    %c0_30 = arith.constant 0 : index
    %51 = vector.load %arg8[%c0_29, %c0_30] : memref<64x128xf32, #tpu.memory_space<vmem>>, vector<64x128xf32>
    tpu.vector_store %arg8[%c0_29, %c0_30], %50 {strides = array<i32>} : memref<64x128xf32, #tpu.memory_space<vmem>>, vector<64x128xf32>,
    return
  }
  func.func @transform_0(%arg0: i32) -> (i32, i32) {
    %c0_i32 = arith.constant 0 : i32
    %c0_i32_0 = arith.constant 0 : i32
    return %arg0, %c0_i32 : i32, i32
  }
  func.func @transform_1(%arg0: i32) -> (i32, i32) {
    %c0_i32 = arith.constant 0 : i32
    %c0_i32_0 = arith.constant 0 : i32
    %c0_i32_1 = arith.constant 0 : i32
    return %c0_i32, %c0_i32_0 : i32, i32
  }
  func.func @transform_2(%arg0: i32) -> (i32, i32) {
    %c0_i32 = arith.constant 0 : i32
    %c0_i32_0 = arith.constant 0 : i32
    %c0_i32_1 = arith.constant 0 : i32
    return %c0_i32, %c0_i32_0 : i32, i32
  }
  func.func @transform_3(%arg0: i32) -> (i32, i32) {
    %c0_i32 = arith.constant 0 : i32
    %c0_i32_0 = arith.constant 0 : i32
    %c0_i32_1 = arith.constant 0 : i32
    return %c0_i32, %c0_i32_0 : i32, i32
  }
  func.func @transform_4(%arg0: i32) -> (i32, i32) {
    %c0_i32 = arith.constant 0 : i32
    %c0_i32_0 = arith.constant 0 : i32
    %c0_i32_1 = arith.constant 0 : i32
    return %c0_i32, %c0_i32_0 : i32, i32
  }
  func.func @transform_5(%arg0: i32) -> (i32, i32) {
    %c0_i32 = arith.constant 0 : i32
    %c0_i32_0 = arith.constant 0 : i32
    %c0_i32_1 = arith.constant 0 : i32
    return %c0_i32, %c0_i32_0 : i32, i32
  }
  func.func @transform_6(%arg0: i32) -> (i32, i32) {
    %c0_i32 = arith.constant 0 : i32
    %c0_i32_0 = arith.constant 0 : i32
    %c0_i32_1 = arith.constant 0 : i32
    return %c0_i32, %c0_i32_0 : i32, i32
  }
  func.func @transform_7(%arg0: i32) -> (i32, i32) {
    %c0_i32 = arith.constant 0 : i32
    %c0_i32_0 = arith.constant 0 : i32
    return %arg0, %c0_i32 : i32, i32
  }
}

</mosaic_0001>

<llo_original>
// kernel: tpu_custom_call.1
$region0: #{tpu_custom_call.1}
  #allocation0 [shape = 'u32[]', space=smem, size = 0x4, offset = 0x4, fixed_abs, tag = 'smem constant byte address 0x4 - core index']
  #allocation1 [shape = 'u32[144,128]{1,0:T(1,128)}', space=vmem, size = 0x12000, scoped, tag = 'internal scratch']
  %s0 = inlined_call_operand.hbm [shape: f32[512,128], index: 0, kind: input, shape index: {}]
  %s1 = inlined_call_operand.hbm [shape: bf16[128,1024], index: 1, kind: input, shape index: {}]
  %s2 = inlined_call_operand.hbm [shape: f32[1,1024], index: 2, kind: input, shape index: {}]
  %s3 = inlined_call_operand.hbm [shape: bf16[1024,128], index: 3, kind: input, shape index: {}]
  %s4 = inlined_call_operand.vmem [shape: f32[1,128], index: 4, kind: input, shape index: {}]
  %s5 = inlined_call_operand.vmem [shape: f32[1,128], index: 5, kind: input, shape index: {}]
  %s6 = inlined_call_operand.vmem [shape: f32[1,128], index: 6, kind: input, shape index: {}]
  %s7 = inlined_call_operand.hbm [shape: f32[512,128], index: 7, kind: output, shape index: {}]
  %s8 = sld [smem:[#allocation0]]
  $region77: #{tpu_custom_call.1} parent=0
    _
  %s10 = ssub.s32 1, %s8
  %s11 = scalar_select 0, %s10, %s8
  $region1: #{tpu_custom_call.1} parent=0
    #allocation2 [shape = 'u8[65536]{0}', space=vmem, size = 0x10000, scoped, tag = 'input window, operand 0']
    #allocation3 [shape = 's32[2]{0}', space=sflag, size = 0x8, scoped, tag = 'scoped memory for tpu_custom_call.1']
    #allocation4 [shape = 's32[2]{0}', space=sflag, size = 0x8, scoped, tag = 'scoped memory for tpu_custom_call.1']
    #allocation5 [shape = 'u8[262144]{0}', space=vmem, size = 0x40000, scoped, tag = 'input window, operand 1, single buffered']
    #allocation6 [shape = 's32[1]{0}', space=sflag, size = 0x4, scoped, tag = 'scoped memory for tpu_custom_call.1']
    #allocation7 [shape = 'u8[4096]{0}', space=vmem, size = 0x1000, scoped, tag = 'input window, operand 2, single buffered']
    #allocation8 [shape = 'u8[262144]{0}', space=vmem, size = 0x40000, scoped, tag = 'input window, operand 3, single buffered']
    #allocation9 [shape = 's32[1]{0}', space=sflag, size = 0x4, scoped, tag = 'scoped memory for tpu_custom_call.1']
    #allocation10 [shape = 'u8[65536]{0}', space=vmem, size = 0x10000, scoped, tag = 'output window, operand 0']
    %12 = vsyncpa [#allocation3], 0
    %s13 = scalar_lea.sflag [#allocation3], 1
    %14 = vsyncpa %s13, 0
    %15 = vsyncpa [#allocation6], 0
    %16 = vsyncpa [#allocation9], 0
    %17 = vsyncpa [#allocation4], 0
    %s18 = scalar_lea.sflag [#allocation4], 1
    %19 = vsyncpa %s18, 0
    loop: start=0, step=1, limit=10
    $region2: #{tpu_custom_call.1} parent=1 // loop_pre_header
      _
    $region3: #{tpu_custom_call.1} parent=1 // loop_header
      %s21 = sphi 0, %s25
      %p22 = scmp.ge.s32.totalorder %s21, 10
      %s31 = sphi 0, %s33
      %s34 = sphi 0, %s31
      %s35 = sphi 0, %s34
      %s51 = sphi 0, %s35
      %s55 = sphi 0, %s55
      %s57 = sphi 0, %s55
      %s58 = sphi 0, %s57
      %s72 = sphi 0, %s58
      %s76 = sphi 0, %s76
      %s78 = sphi 0, %s76
      %s79 = sphi 0, %s78
      %s93 = sphi 0, %s79
      %s97 = sphi 0, %s97
      %s99 = sphi 0, %s97
      %s100 = sphi 0, %s99
      %s114 = sphi 0, %s100
      %s118 = sphi 0, %s118
      %s120 = sphi 0, %s118
      %s121 = sphi 0, %s120
      %s135 = sphi 0, %s121
      %s139 = sphi 0, %s139
      %s141 = sphi 0, %s139
      %s142 = sphi 0, %s141
      %s156 = sphi 0, %s142
      %s160 = sphi 0, %s160
      %s162 = sphi 0, %s160
      %s163 = sphi 0, %s162
      %s177 = sphi 0, %s163
      %s183 = sphi 0, %s185
      %s186 = sphi 0, %s183
      %s187 = sphi 0, %s186
      %s203 = sphi 0, %s187
    $region4: #{tpu_custom_call.1} parent=1 // loop_header_branch
      %24 = sbr.rel (%p22) target = $region8
    $region5: #{tpu_custom_call.1} parent=1 // loop_body
      %s26 = ssub.s32 %s21, 1
      %s27 = ssub.s32 %s21, 2
      %s28 = sadd.s32 %s21, 1
      %s29 = ssub.s32 %s21, %s28
      %p30 = scmp.eq.s32.totalorder %s29, 0
      %s32 = sadd.s32 %s31, 1
      %s33 = scalar_select %p30, %s31, %s32
      %p36 = pneg %p30
      %p37 = scmp.eq.s32.totalorder %s21, 7
      %p38 = por %p36, %p37
      %p39 = scmp.ne.s32.totalorder %s31, %s34
      %p40 = scmp.eq.s32.totalorder %s21, 0
      %p41 = por %p39, %p40
      %p42 = scmp.ne.s32.totalorder %s31, %s34
      %p43 = scmp.eq.s32.totalorder %s26, 7
      %p44 = por %p42, %p43
      %p45 = scmp.ne.s32.totalorder %s34, %s35
      %p46 = scmp.eq.s32.totalorder %s26, 0
      %p47 = por %p45, %p46
      %p48 = scmp.ne.s32.totalorder %s34, %s35
      %p49 = scmp.eq.s32.totalorder %s27, 7
      %p50 = por %p48, %p49
      %p52 = scmp.ne.s32.totalorder %s35, %s51
      %p53 = scmp.eq.s32.totalorder %s27, 0
      %p54 = por %p52, %p53
      %s56 = sadd.s32 %s55, 1
      %p59 = scmp.eq.s32.totalorder %s21, 7
      %p60 = scmp.ne.s32.totalorder %s55, %s57
      %p61 = scmp.eq.s32.totalorder %s21, 0
      %p62 = por %p60, %p61
      %p63 = scmp.ne.s32.totalorder %s55, %s57
      %p64 = scmp.eq.s32.totalorder %s26, 7
      %p65 = por %p63, %p64
      %p66 = scmp.ne.s32.totalorder %s57, %s58
      %p67 = scmp.eq.s32.totalorder %s26, 0
      %p68 = por %p66, %p67
      %p69 = scmp.ne.s32.totalorder %s57, %s58
      %p70 = scmp.eq.s32.totalorder %s27, 7
      %p71 = por %p69, %p70
      %p73 = scmp.ne.s32.totalorder %s58, %s72
      %p74 = scmp.eq.s32.totalorder %s27, 0
      %p75 = por %p73, %p74
      %s77 = sadd.s32 %s76, 1
      %p80 = scmp.eq.s32.totalorder %s21, 7
      %p81 = scmp.ne.s32.totalorder %s76, %s78
      %p82 = scmp.eq.s32.totalorder %s21, 0
      %p83 = por %p81, %p82
      %p84 = scmp.ne.s32.totalorder %s76, %s78
      %p85 = scmp.eq.s32.totalorder %s26, 7
      %p86 = por %p84, %p85
      %p87 = scmp.ne.s32.totalorder %s78, %s79
      %p88 = scmp.eq.s32.totalorder %s26, 0
      %p89 = por %p87, %p88
      %p90 = scmp.ne.s32.totalorder %s78, %s79
      %p91 = scmp.eq.s32.totalorder %s27, 7
      %p92 = por %p90, %p91
      %p94 = scmp.ne.s32.totalorder %s79, %s93
      %p95 = scmp.eq.s32.totalorder %s27, 0
      %p96 = por %p94, %p95
      %s98 = sadd.s32 %s97, 1
      %p101 = scmp.eq.s32.totalorder %s21, 7
      %p102 = scmp.ne.s32.totalorder %s97, %s99
      %p103 = scmp.eq.s32.totalorder %s21, 0
      %p104 = por %p102, %p103
      %p105 = scmp.ne.s32.totalorder %s97, %s99
      %p106 = scmp.eq.s32.totalorder %s26, 7
      %p107 = por %p105, %p106
      %p108 = scmp.ne.s32.totalorder %s99, %s100
      %p109 = scmp.eq.s32.totalorder %s26, 0
      %p110 = por %p108, %p109
      %p111 = scmp.ne.s32.totalorder %s99, %s100
      %p112 = scmp.eq.s32.totalorder %s27, 7
      %p113 = por %p111, %p112
      %p115 = scmp.ne.s32.totalorder %s100, %s114
      %p116 = scmp.eq.s32.totalorder %s27, 0
      %p117 = por %p115, %p116
      %s119 = sadd.s32 %s118, 1
      %p122 = scmp.eq.s32.totalorder %s21, 7
      %p123 = scmp.ne.s32.totalorder %s118, %s120
      %p124 = scmp.eq.s32.totalorder %s21, 0
      %p125 = por %p123, %p124
      %p126 = scmp.ne.s32.totalorder %s118, %s120
      %p127 = scmp.eq.s32.totalorder %s26, 7
      %p128 = por %p126, %p127
      %p129 = scmp.ne.s32.totalorder %s120, %s121
      %p130 = scmp.eq.s32.totalorder %s26, 0
      %p131 = por %p129, %p130
      %p132 = scmp.ne.s32.totalorder %s120, %s121
      %p133 = scmp.eq.s32.totalorder %s27, 7
      %p134 = por %p132, %p133
      %p136 = scmp.ne.s32.totalorder %s121, %s135
      %p137 = scmp.eq.s32.totalorder %s27, 0
      %p138 = por %p136, %p137
      %s140 = sadd.s32 %s139, 1
      %p143 = scmp.eq.s32.totalorder %s21, 7
      %p144 = scmp.ne.s32.totalorder %s139, %s141
      %p145 = scmp.eq.s32.totalorder %s21, 0
      %p146 = por %p144, %p145
      %p147 = scmp.ne.s32.totalorder %s139, %s141
      %p148 = scmp.eq.s32.totalorder %s26, 7
      %p149 = por %p147, %p148
      %p150 = scmp.ne.s32.totalorder %s141, %s142
      %p151 = scmp.eq.s32.totalorder %s26, 0
      %p152 = por %p150, %p151
      %p153 = scmp.ne.s32.totalorder %s141, %s142
      %p154 = scmp.eq.s32.totalorder %s27, 7
      %p155 = por %p153, %p154
      %p157 = scmp.ne.s32.totalorder %s142, %s156
      %p158 = scmp.eq.s32.totalorder %s27, 0
      %p159 = por %p157, %p158
      %s161 = sadd.s32 %s160, 1
      %p164 = scmp.eq.s32.totalorder %s21, 7
      %p165 = scmp.ne.s32.totalorder %s160, %s162
      %p166 = scmp.eq.s32.totalorder %s21, 0
      %p167 = por %p165, %p166
      %p168 = scmp.ne.s32.totalorder %s160, %s162
      %p169 = scmp.eq.s32.totalorder %s26, 7
      %p170 = por %p168, %p169
      %p171 = scmp.ne.s32.totalorder %s162, %s163
      %p172 = scmp.eq.s32.totalorder %s26, 0
      %p173 = por %p171, %p172
      %p174 = scmp.ne.s32.totalorder %s162, %s163
      %p175 = scmp.eq.s32.totalorder %s27, 7
      %p176 = por %p174, %p175
      %p178 = scmp.ne.s32.totalorder %s163, %s177
      %p179 = scmp.eq.s32.totalorder %s27, 0
      %p180 = por %p178, %p179
      %s181 = ssub.s32 %s21, %s28
      %p182 = scmp.eq.s32.totalorder %s181, 0
      %s184 = sadd.s32 %s183, 1
      %s185 = scalar_select %p182, %s183, %s184
      %p188 = pneg %p182
      %p189 = scmp.eq.s32.totalorder %s21, 7
      %p190 = por %p188, %p189
      %p191 = scmp.ne.s32.totalorder %s183, %s186
      %p192 = scmp.eq.s32.totalorder %s21, 0
      %p193 = por %p191, %p192
      %p194 = scmp.ne.s32.totalorder %s183, %s186
      %p195 = scmp.eq.s32.totalorder %s26, 7
      %p196 = por %p194, %p195
      %p197 = scmp.ne.s32.totalorder %s186, %s187
      %p198 = scmp.eq.s32.totalorder %s26, 0
      %p199 = por %p197, %p198
      %p200 = scmp.ne.s32.totalorder %s186, %s187
      %p201 = scmp.eq.s32.totalorder %s27, 7
      %p202 = por %p200, %p201
      %p204 = scmp.ne.s32.totalorder %s187, %s203
      %p205 = scmp.eq.s32.totalorder %s27, 0
      %p206 = por %p204, %p205
      %p207 = scmp.le.s32.totalorder 1, %s21
      %p208 = scmp.lt.s32.totalorder %s21, 9
      %p209 = pnand %p207, %p208
      %p210 = pneg %p209
      // Predicated region
      $region9: #{tpu_custom_call.1} parent=5 // pred_check
        _
      $region10: #{tpu_custom_call.1} parent=5 // pred_check_branch
        %212 = sbr.rel (%p209) target = $region12
      $region11: #{tpu_custom_call.1} parent=5 // pred_region
        %s213 = ssub.s32 %s21, 1
        // Predicated region
        $region13: #{tpu_custom_call.1} parent=11 // pred_check
          %p214 = pneg %p68
        $region14: #{tpu_custom_call.1} parent=11 // pred_check_branch
          %216 = sbr.rel (%p214) target = $region16
        $region15: #{tpu_custom_call.1} parent=11 // pred_region
          %s218 = ssub.s32 8192, 8192
          %219 = vsyncadd [#allocation6], %s218
          %s220 = sshll.u32 [#allocation5], 4
          %s221 = int_to_ptr.vmem [resolvable:$true] %s220
          %226 = dma.hbm_to_vmem [thread:$0]  %s1, 8192, %s221, [#allocation6], 512, 512, 32
        $region16: #{tpu_custom_call.1} parent=11 // pred_fallthru
          _
        // Predicated region
        $region17: #{tpu_custom_call.1} parent=11 // pred_check
          %p227 = pneg %p89
        $region18: #{tpu_custom_call.1} parent=11 // pred_check_branch
          %229 = sbr.rel (%p227) target = $region20
        $region19: #{tpu_custom_call.1} parent=11 // pred_region
          %s231 = ssub.s32 128, 128
          %232 = vsyncadd [#allocation6], %s231
          %s234 = sshll.u32 [#allocation7], 4
          %s235 = int_to_ptr.vmem [resolvable:$true] %s234
          %237 = dma.hbm_to_vmem [thread:$0]  %s2, 128, %s235, [#allocation6]
        $region20: #{tpu_custom_call.1} parent=11 // pred_fallthru
          _
        // Predicated region
        $region21: #{tpu_custom_call.1} parent=11 // pred_check
          %p238 = pneg %p110
        $region22: #{tpu_custom_call.1} parent=11 // pred_check_branch
          %240 = sbr.rel (%p238) target = $region24
        $region23: #{tpu_custom_call.1} parent=11 // pred_region
          %s242 = ssub.s32 8192, 8192
          %243 = vsyncadd [#allocation9], %s242
          %s244 = sshll.u32 [#allocation8], 4
          %s245 = int_to_ptr.vmem [resolvable:$true] %s244
          %250 = dma.hbm_to_vmem [thread:$0]  %s3, 8192, %s245, [#allocation9], 64, 64, 4
        $region24: #{tpu_custom_call.1} parent=11 // pred_fallthru
          _
        // Predicated region
        $region25: #{tpu_custom_call.1} parent=11 // pred_check
          %p251 = pneg %p131
        $region26: #{tpu_custom_call.1} parent=11 // pred_check_branch
          %253 = sbr.rel (%p251) target = $region28
        $region27: #{tpu_custom_call.1} parent=11 // pred_region
          _
        $region28: #{tpu_custom_call.1} parent=11 // pred_fallthru
          _
        // Predicated region
        $region29: #{tpu_custom_call.1} parent=11 // pred_check
          %p254 = pneg %p152
        $region30: #{tpu_custom_call.1} parent=11 // pred_check_branch
          %256 = sbr.rel (%p254) target = $region32
        $region31: #{tpu_custom_call.1} parent=11 // pred_region
          _
        $region32: #{tpu_custom_call.1} parent=11 // pred_fallthru
          _
        // Predicated region
        $region33: #{tpu_custom_call.1} parent=11 // pred_check
          %p257 = pneg %p173
        $region34: #{tpu_custom_call.1} parent=11 // pred_check_branch
          %259 = sbr.rel (%p257) target = $region36
        $region35: #{tpu_custom_call.1} parent=11 // pred_region
          _
        $region36: #{tpu_custom_call.1} parent=11 // pred_fallthru
          _
      $region12: #{tpu_custom_call.1} parent=5 // pred_fallthru
        _
      %p260 = scmp.lt.s32.totalorder %s21, 8
      // Predicated region
      $region37: #{tpu_custom_call.1} parent=5 // pred_check
        %p261 = pneg %p260
      $region38: #{tpu_custom_call.1} parent=5 // pred_check_branch
        %263 = sbr.rel (%p261) target = $region40
      $region39: #{tpu_custom_call.1} parent=5 // pred_region
        // Predicated region
        $region41: #{tpu_custom_call.1} parent=39 // pred_check
          %p264 = pneg %p41
        $region42: #{tpu_custom_call.1} parent=39 // pred_check_branch
          %266 = sbr.rel (%p264) target = $region44
        $region43: #{tpu_custom_call.1} parent=39 // pred_region
          %s267 = sand.u32 %s31, 1
          %s268 = scalar_lea.sflag [#allocation3], %s267
          %s269 = sand.u32 %s31, 1
          %s270 = smul.addr %s269, 64
          %s271 = scalar_lea.vmem [#allocation2], %s270
          %s272 = smul.u32 8, %s21
          %s274 = ssub.s32 1024, 1024
          %275 = vsyncadd %s268, %s274
          %s276 = smul.addr %s272, 128
          %s277 = scalar_lea.hbm %s0, %s276
          %s278 = sshll.u32 %s271, 4
          %s279 = int_to_ptr.vmem [resolvable:$true] %s278
          %284 = dma.hbm_to_vmem [thread:$0]  %s277, 1024, %s279, %s268, 128, 128, 8
        $region44: #{tpu_custom_call.1} parent=39 // pred_fallthru
          _
      $region40: #{tpu_custom_call.1} parent=5 // pred_fallthru
        _
      %p285 = scmp.le.s32.totalorder 1, %s21
      %p286 = scmp.lt.s32.totalorder %s21, 9
      %p287 = pnand %p285, %p286
      %p288 = pneg %p287
      // Predicated region
      $region45: #{tpu_custom_call.1} parent=5 // pred_check
        _
      $region46: #{tpu_custom_call.1} parent=5 // pred_check_branch
        %290 = sbr.rel (%p287) target = $region48
      $region47: #{tpu_custom_call.1} parent=5 // pred_region
        %s291 = ssub.s32 %s21, 1
        %s292 = sand.u32 %s34, 1
        %s293 = scalar_lea.sflag [#allocation3], %s292
        %s294 = sand.u32 %s34, 1
        %s295 = smul.addr %s294, 64
        %s296 = scalar_lea.vmem [#allocation2], %s295
        // Predicated region
        $region49: #{tpu_custom_call.1} parent=47 // pred_check
          %p297 = pneg %p47
        $region50: #{tpu_custom_call.1} parent=47 // pred_check_branch
          %299 = sbr.rel (%p297) target = $region52
        $region51: #{tpu_custom_call.1} parent=47 // pred_region
          %300 = dma.done %s293, 1024
        $region52: #{tpu_custom_call.1} parent=47 // pred_fallthru
          _
        // Predicated region
        $region53: #{tpu_custom_call.1} parent=47 // pred_check
          %p301 = pneg %p68
        $region54: #{tpu_custom_call.1} parent=47 // pred_check_branch
          %303 = sbr.rel (%p301) target = $region56
        $region55: #{tpu_custom_call.1} parent=47 // pred_region
          %304 = dma.done [#allocation6], 8192
        $region56: #{tpu_custom_call.1} parent=47 // pred_fallthru
          _
        // Predicated region
        $region57: #{tpu_custom_call.1} parent=47 // pred_check
          %p305 = pneg %p89
        $region58: #{tpu_custom_call.1} parent=47 // pred_check_branch
          %307 = sbr.rel (%p305) target = $region60
        $region59: #{tpu_custom_call.1} parent=47 // pred_region
          %308 = dma.done [#allocation6], 128
        $region60: #{tpu_custom_call.1} parent=47 // pred_fallthru
          _
        // Predicated region
        $region61: #{tpu_custom_call.1} parent=47 // pred_check
          %p309 = pneg %p110
        $region62: #{tpu_custom_call.1} parent=47 // pred_check_branch
          %311 = sbr.rel (%p309) target = $region64
        $region63: #{tpu_custom_call.1} parent=47 // pred_region
          %312 = dma.done [#allocation9], 8192
        $region64: #{tpu_custom_call.1} parent=47 // pred_fallthru
          _
        %s313 = sand.u32 %s34, 1
        %s314 = scalar_lea.sflag [#allocation3], %s313
        %s315 = sand.u32 %s34, 1
        %s316 = smul.addr %s315, 64
        %s317 = scalar_lea.vmem [#allocation2], %s316
        %p318 = pneg %p47
        %p319 = pneg %p44
        %p320 = pneg %p68
        %p321 = pneg %p65
        %p322 = pneg %p89
        %p323 = pneg %p86
        %p324 = pneg %p110
        %p325 = pneg %p107
        %p326 = pneg %p131
        %p327 = pneg %p128
        %p328 = pneg %p152
        %p329 = pneg %p149
        %p330 = pneg %p173
        %p331 = pneg %p170
        %p332 = pneg %p199
        %p333 = pneg %p196
        %s334 = sand.u32 %s186, 1
        %s335 = scalar_lea.sflag [#allocation4], %s334
        %s336 = sand.u32 %s186, 1
        %s337 = smul.addr %s336, 64
        %s338 = scalar_lea.vmem [#allocation10], %s337
        %s339 = smul.u32 8, %s26
        %s340 = smul.u32 8, %s26
        %v342 = vld [vmem:[%s296] sm:$0xff]
        %v343 = vld [vmem:[%s296 + $0x8] sm:$0xff]
        %v344 = vld [vmem:[%s296 + $0x10] sm:$0xff]
        %v345 = vld [vmem:[%s296 + $0x18] sm:$0xff]
        %v346 = vld [vmem:[%s296 + $0x20] sm:$0xff]
        %v347 = vld [vmem:[%s296 + $0x28] sm:$0xff]
        %v348 = vld [vmem:[%s296 + $0x30] sm:$0xff]
        %v349 = vld [vmem:[%s296 + $0x38] sm:$0xff]
        %v350 = vld [vmem:[%s5] sm:$0x1]
        %v351 = vld [vmem:[%s6] sm:$0x1]
        %v352 = vpack.c.bf16 %v343, %v342
        %v353 = vpack.c.bf16 %v345, %v344
        %v354 = vpack.c.bf16 %v347, %v346
        %v355 = vpack.c.bf16 %v349, %v348
        %v356 = vld [vmem:[#allocation5] sm:$0xff]
        %v357 = vld [vmem:[#allocation5 + $0x8] sm:$0xff]
        %v358 = vld [vmem:[#allocation5 + $0x20] sm:$0xff]
        %v359 = vld [vmem:[#allocation5 + $0x28] sm:$0xff]
        %v360 = vld [vmem:[#allocation5 + $0x40] sm:$0xff]
        %v361 = vld [vmem:[#allocation5 + $0x48] sm:$0xff]
        %v362 = vld [vmem:[#allocation5 + $0x60] sm:$0xff]
        %v363 = vld [vmem:[#allocation5 + $0x68] sm:$0xff]
        %v364 = vld [vmem:[#allocation5 + $0x80] sm:$0xff]
        %v365 = vld [vmem:[#allocation5 + $0x88] sm:$0xff]
        %v366 = vld [vmem:[#allocation5 + $0xa0] sm:$0xff]
        %v367 = vld [vmem:[#allocation5 + $0xa8] sm:$0xff]
        %v368 = vld [vmem:[#allocation5 + $0xc0] sm:$0xff]
        %v369 = vld [vmem:[#allocation5 + $0xc8] sm:$0xff]
        %v370 = vld [vmem:[#allocation5 + $0xe0] sm:$0xff]
        %v371 = vld [vmem:[#allocation5 + $0xe8] sm:$0xff]
        %v372 = vld [vmem:[#allocation5 + $0x100] sm:$0xff]
        %v373 = vld [vmem:[#allocation5 + $0x108] sm:$0xff]
        %v374 = vld [vmem:[#allocation5 + $0x120] sm:$0xff]
        %v375 = vld [vmem:[#allocation5 + $0x128] sm:$0xff]
        %v376 = vld [vmem:[#allocation5 + $0x140] sm:$0xff]
        %v377 = vld [vmem:[#allocation5 + $0x148] sm:$0xff]
        %v378 = vld [vmem:[#allocation5 + $0x160] sm:$0xff]
        %v379 = vld [vmem:[#allocation5 + $0x168] sm:$0xff]
        %v380 = vld [vmem:[#allocation5 + $0x180] sm:$0xff]
        %v381 = vld [vmem:[#allocation5 + $0x188] sm:$0xff]
        %v382 = vld [vmem:[#allocation5 + $0x1a0] sm:$0xff]
        %v383 = vld [vmem:[#allocation5 + $0x1a8] sm:$0xff]
        %v384 = vld [vmem:[#allocation5 + $0x1c0] sm:$0xff]
        %v385 = vld [vmem:[#allocation5 + $0x1c8] sm:$0xff]
        %v386 = vld [vmem:[#allocation5 + $0x1e0] sm:$0xff]
        %v387 = vld [vmem:[#allocation5 + $0x1e8] sm:$0xff]
        %v388 = vld [vmem:[#allocation7] sm:$0xf]
        %v390 = vlaneseq
        %v391 = vshrl.u32 %v390, 7
        %v392 = vsub.s32 0, %v391
        %v393 = vrot.slane %v388, %v392
        %v394 = vlaneseq
        %v395 = vshrl.u32 %v394, 7
        %v396 = vsub.s32 1, %v395
        %v397 = vrot.slane %v388, %v396
        %v398 = vlaneseq
        %v399 = vshrl.u32 %v398, 7
        %v400 = vsub.s32 2, %v399
        %v401 = vrot.slane %v388, %v400
        %v402 = vlaneseq
        %v403 = vshrl.u32 %v402, 7
        %v404 = vsub.s32 3, %v403
        %v405 = vrot.slane %v388, %v404
        %v442 = vunpack.c.l.b16 %v356
        %v443 = vunpack.c.h.b16 %v356
        %v444 = vunpack.c.l.b16 %v357
        %v445 = vunpack.c.h.b16 %v357
        %v446 = vunpack.c.l.b16 %v358
        %v447 = vunpack.c.h.b16 %v358
        %v448 = vunpack.c.l.b16 %v359
        %v449 = vunpack.c.h.b16 %v359
        %v450 = vunpack.c.l.b16 %v360
        %v451 = vunpack.c.h.b16 %v360
        %v452 = vunpack.c.l.b16 %v361
        %v453 = vunpack.c.h.b16 %v361
        %v454 = vunpack.c.l.b16 %v362
        %v455 = vunpack.c.h.b16 %v362
        %v456 = vunpack.c.l.b16 %v363
        %v457 = vunpack.c.h.b16 %v363
        %v458 = vunpack.c.l.b16 %v364
        %v459 = vunpack.c.h.b16 %v364
        %v460 = vunpack.c.l.b16 %v365
        %v461 = vunpack.c.h.b16 %v365
        %v462 = vunpack.c.l.b16 %v366
        %v463 = vunpack.c.h.b16 %v366
        %v464 = vunpack.c.l.b16 %v367
        %v465 = vunpack.c.h.b16 %v367
        %v466 = vunpack.c.l.b16 %v368
        %v467 = vunpack.c.h.b16 %v368
        %v468 = vunpack.c.l.b16 %v369
        %v469 = vunpack.c.h.b16 %v369
        %v470 = vunpack.c.l.b16 %v370
        %v471 = vunpack.c.h.b16 %v370
        %v472 = vunpack.c.l.b16 %v371
        %v473 = vunpack.c.h.b16 %v371
        %v474 = vunpack.c.l.b16 %v372
        %v475 = vunpack.c.h.b16 %v372
        %v476 = vunpack.c.l.b16 %v373
        %v477 = vunpack.c.h.b16 %v373
        %v478 = vunpack.c.l.b16 %v374
        %v479 = vunpack.c.h.b16 %v374
        %v480 = vunpack.c.l.b16 %v375
        %v481 = vunpack.c.h.b16 %v375
        %v482 = vunpack.c.l.b16 %v376
        %v483 = vunpack.c.h.b16 %v376
        %v484 = vunpack.c.l.b16 %v377
        %v485 = vunpack.c.h.b16 %v377
        %v486 = vunpack.c.l.b16 %v378
        %v487 = vunpack.c.h.b16 %v378
        %v488 = vunpack.c.l.b16 %v379
        %v489 = vunpack.c.h.b16 %v379
        %v490 = vunpack.c.l.b16 %v380
        %v491 = vunpack.c.h.b16 %v380
        %v492 = vunpack.c.l.b16 %v381
        %v493 = vunpack.c.h.b16 %v381
        %v494 = vunpack.c.l.b16 %v382
        %v495 = vunpack.c.h.b16 %v382
        %v496 = vunpack.c.l.b16 %v383
        %v497 = vunpack.c.h.b16 %v383
        %v498 = vunpack.c.l.b16 %v384
        %v499 = vunpack.c.h.b16 %v384
        %v500 = vunpack.c.l.b16 %v385
        %v501 = vunpack.c.h.b16 %v385
        %v502 = vunpack.c.l.b16 %v386
        %v503 = vunpack.c.h.b16 %v386
        %v504 = vunpack.c.l.b16 %v387
        %v505 = vunpack.c.h.b16 %v387
        %v506 = vpack.c.b16 %v446, %v442
        %v507 = vpack.c.b16 %v447, %v443
        %v508 = vpack.c.b16 %v448, %v444
        %v509 = vpack.c.b16 %v449, %v445
        %v510 = vpack.c.b16 %v454, %v450
        %v511 = vpack.c.b16 %v455, %v451
        %v512 = vpack.c.b16 %v456, %v452
        %v513 = vpack.c.b16 %v457, %v453
        %v514 = vpack.c.b16 %v462, %v458
        %v515 = vpack.c.b16 %v463, %v459
        %v516 = vpack.c.b16 %v464, %v460
        %v517 = vpack.c.b16 %v465, %v461
        %v518 = vpack.c.b16 %v470, %v466
        %v519 = vpack.c.b16 %v471, %v467
        %v520 = vpack.c.b16 %v472, %v468
        %v521 = vpack.c.b16 %v473, %v469
        %v522 = vpack.c.b16 %v478, %v474
        %v523 = vpack.c.b16 %v479, %v475
        %v524 = vpack.c.b16 %v480, %v476
        %v525 = vpack.c.b16 %v481, %v477
        %v526 = vpack.c.b16 %v486, %v482
        %v527 = vpack.c.b16 %v487, %v483
        %v528 = vpack.c.b16 %v488, %v484
        %v529 = vpack.c.b16 %v489, %v485
        %v530 = vpack.c.b16 %v494, %v490
        %v531 = vpack.c.b16 %v495, %v491
        %v532 = vpack.c.b16 %v496, %v492
        %v533 = vpack.c.b16 %v497, %v493
        %v534 = vpack.c.b16 %v502, %v498
        %v535 = vpack.c.b16 %v503, %v499
        %v536 = vpack.c.b16 %v504, %v500
        %v537 = vpack.c.b16 %v505, %v501
        %570 = vmatprep.subr.bf16.mxu0 %v535
        %571 = vmatpush1.bf16.msra.mxu0 %v534
        %572 = vmatprep.subr.bf16.mxu0 %v531
        %573 = vmatpush1.bf16.msra.mxu0 %v530
        %574 = vmatprep.subr.bf16.mxu0 %v527
        %575 = vmatpush1.bf16.msra.mxu0 %v526
        %576 = vmatprep.subr.bf16.mxu0 %v523
        %577 = vmatpush1.bf16.msra.mxu0 %v522
        %578 = vmatprep.subr.bf16.mxu0 %v519
        %579 = vmatpush1.bf16.msra.mxu0 %v518
        %580 = vmatprep.subr.bf16.mxu0 %v515
        %581 = vmatpush1.bf16.msra.mxu0 %v514
        %582 = vmatprep.subr.bf16.mxu0 %v511
        %583 = vmatpush1.bf16.msra.mxu0 %v510
        %584 = vmatprep.subr.bf16.mxu0 %v507
        %585 = vmatpush1.bf16.msra.mxu0 %v506
        %586 = vmatprep.subr.bf16.mxu0 0
        %587 = vmatpush2.bf16.msra.mxu0 0
        %588 = vmatprep.subr.bf16.mxu0 0
        %589 = vmatpush2.bf16.msra.mxu0 0
        %590 = vmatprep.subr.bf16.mxu0 0
        %591 = vmatpush2.bf16.msra.mxu0 0
        %592 = vmatprep.subr.bf16.mxu0 0
        %593 = vmatpush2.bf16.msra.mxu0 0
        %594 = vmatprep.subr.bf16.mxu0 0
        %595 = vmatpush2.bf16.msra.mxu0 0
        %596 = vmatprep.subr.bf16.mxu0 0
        %597 = vmatpush2.bf16.msra.mxu0 0
        %598 = vmatprep.subr.bf16.mxu0 0
        %599 = vmatpush2.bf16.msra.mxu0 0
        %600 = vmatprep.subr.bf16.mxu0 0
        %601 = vmatpush2.bf16.msra.mxu0 0
        %602 = vmatprep.mubr.bf16.mxu0 0
        %603 = vmatmul.mubr.bf16.gmra.mxu0 %v352
        %v604 = vpop.f32.mrf.mxu0
        %v605 = vadd.f32 %v393, %v604
        %v606 = vpop.f32.mrf.mxu0
        %v607 = vadd.f32 %v397, %v606
        %v608 = vpop.f32.mrf.mxu0
        %v609 = vadd.f32 %v393, %v608
        %v610 = vpop.f32.mrf.mxu0
        %v611 = vadd.f32 %v397, %v610
        %612 = vmatprep.mubr.bf16.mxu0 0
        %613 = vmatmul.mubr.bf16.gmra.mxu0 %v353
        %v614 = vpop.f32.mrf.mxu0
        %v615 = vadd.f32 %v393, %v614
        %v616 = vpop.f32.mrf.mxu0
        %v617 = vadd.f32 %v397, %v616
        %v618 = vpop.f32.mrf.mxu0
        %v619 = vadd.f32 %v393, %v618
        %v620 = vpop.f32.mrf.mxu0
        %v621 = vadd.f32 %v397, %v620
        %622 = vmatprep.mubr.bf16.mxu0 0
        %623 = vmatmul.mubr.bf16.gmra.mxu0 %v354
        %v624 = vpop.f32.mrf.mxu0
        %v625 = vadd.f32 %v393, %v624
        %v626 = vpop.f32.mrf.mxu0
        %v627 = vadd.f32 %v397, %v626
        %v628 = vpop.f32.mrf.mxu0
        %v629 = vadd.f32 %v393, %v628
        %v630 = vpop.f32.mrf.mxu0
        %v631 = vadd.f32 %v397, %v630
        %632 = vmatprep.mubr.bf16.mxu0 0
        %633 = vmatmul.mubr.bf16.gmra.mxu0 %v355
        %v634 = vpop.f32.mrf.mxu0
        %v635 = vadd.f32 %v393, %v634
        %v636 = vpop.f32.mrf.mxu0
        %v637 = vadd.f32 %v397, %v636
        %v638 = vpop.f32.mrf.mxu0
        %v639 = vadd.f32 %v393, %v638
        %v640 = vpop.f32.mrf.mxu0
        %v641 = vadd.f32 %v397, %v640
        %642 = vdwg.mxu0
        %643 = vmatprep.subr.bf16.mxu0 %v537
        %644 = vmatpush1.bf16.msra.mxu0 %v536
        %645 = vmatprep.subr.bf16.mxu0 %v533
        %646 = vmatpush1.bf16.msra.mxu0 %v532
        %647 = vmatprep.subr.bf16.mxu0 %v529
        %648 = vmatpush1.bf16.msra.mxu0 %v528
        %649 = vmatprep.subr.bf16.mxu0 %v525
        %650 = vmatpush1.bf16.msra.mxu0 %v524
        %651 = vmatprep.subr.bf16.mxu0 %v521
        %652 = vmatpush1.bf16.msra.mxu0 %v520
        %653 = vmatprep.subr.bf16.mxu0 %v517
        %654 = vmatpush1.bf16.msra.mxu0 %v516
        %655 = vmatprep.subr.bf16.mxu0 %v513
        %656 = vmatpush1.bf16.msra.mxu0 %v512
        %657 = vmatprep.subr.bf16.mxu0 %v509
        %658 = vmatpush1.bf16.msra.mxu0 %v508
        %659 = vmatprep.subr.bf16.mxu0 0
        %660 = vmatpush2.bf16.msra.mxu0 0
        %661 = vmatprep.subr.bf16.mxu0 0
        %662 = vmatpush2.bf16.msra.mxu0 0
        %663 = vmatprep.subr.bf16.mxu0 0
        %664 = vmatpush2.bf16.msra.mxu0 0
        %665 = vmatprep.subr.bf16.mxu0 0
        %666 = vmatpush2.bf16.msra.mxu0 0
        %667 = vmatprep.subr.bf16.mxu0 0
        %668 = vmatpush2.bf16.msra.mxu0 0
        %669 = vmatprep.subr.bf16.mxu0 0
        %670 = vmatpush2.bf16.msra.mxu0 0
        %671 = vmatprep.subr.bf16.mxu0 0
        %672 = vmatpush2.bf16.msra.mxu0 0
        %673 = vmatprep.subr.bf16.mxu0 0
        %674 = vmatpush2.bf16.msra.mxu0 0
        %675 = vmatprep.mubr.bf16.mxu0 0
        %676 = vmatmul.mubr.bf16.gmra.mxu0 %v352
        %v677 = vpop.f32.mrf.mxu0
        %v678 = vadd.f32 %v401, %v677
        %v679 = vpop.f32.mrf.mxu0
        %v680 = vadd.f32 %v405, %v679
        %v681 = vpop.f32.mrf.mxu0
        %v682 = vadd.f32 %v401, %v681
        %v683 = vpop.f32.mrf.mxu0
        %v684 = vadd.f32 %v405, %v683
        %685 = vmatprep.mubr.bf16.mxu0 0
        %686 = vmatmul.mubr.bf16.gmra.mxu0 %v353
        %v687 = vpop.f32.mrf.mxu0
        %v688 = vadd.f32 %v401, %v687
        %v689 = vpop.f32.mrf.mxu0
        %v690 = vadd.f32 %v405, %v689
        %v691 = vpop.f32.mrf.mxu0
        %v692 = vadd.f32 %v401, %v691
        %v693 = vpop.f32.mrf.mxu0
        %v694 = vadd.f32 %v405, %v693
        %695 = vmatprep.mubr.bf16.mxu0 0
        %696 = vmatmul.mubr.bf16.gmra.mxu0 %v354
        %v697 = vpop.f32.mrf.mxu0
        %v698 = vadd.f32 %v401, %v697
        %v699 = vpop.f32.mrf.mxu0
        %v700 = vadd.f32 %v405, %v699
        %v701 = vpop.f32.mrf.mxu0
        %v702 = vadd.f32 %v401, %v701
        %v703 = vpop.f32.mrf.mxu0
        %v704 = vadd.f32 %v405, %v703
        %705 = vmatprep.mubr.bf16.mxu0 0
        %706 = vmatmul.mubr.bf16.gmra.mxu0 %v355
        %v707 = vpop.f32.mrf.mxu0
        %v708 = vadd.f32 %v401, %v707
        %v709 = vpop.f32.mrf.mxu0
        %v710 = vadd.f32 %v405, %v709
        %v711 = vpop.f32.mrf.mxu0
        %v712 = vadd.f32 %v401, %v711
        %v713 = vpop.f32.mrf.mxu0
        %v714 = vadd.f32 %v405, %v713
        %715 = vdwg.mxu0
        %v716 = vmax.f32 %v605, 0.0
        %v717 = vmax.f32 %v607, 0.0
        %v718 = vmax.f32 %v678, 0.0
        %v719 = vmax.f32 %v680, 0.0
        %v720 = vmax.f32 %v609, 0.0
        %v721 = vmax.f32 %v611, 0.0
        %v722 = vmax.f32 %v682, 0.0
        %v723 = vmax.f32 %v684, 0.0
        %v724 = vmax.f32 %v615, 0.0
        %v725 = vmax.f32 %v617, 0.0
        %v726 = vmax.f32 %v688, 0.0
        %v727 = vmax.f32 %v690, 0.0
        %v728 = vmax.f32 %v619, 0.0
        %v729 = vmax.f32 %v621, 0.0
        %v730 = vmax.f32 %v692, 0.0
        %v731 = vmax.f32 %v694, 0.0
        %v732 = vmax.f32 %v625, 0.0
        %v733 = vmax.f32 %v627, 0.0
        %v734 = vmax.f32 %v698, 0.0
        %v735 = vmax.f32 %v700, 0.0
        %v736 = vmax.f32 %v629, 0.0
        %v737 = vmax.f32 %v631, 0.0
        %v738 = vmax.f32 %v702, 0.0
        %v739 = vmax.f32 %v704, 0.0
        %v740 = vmax.f32 %v635, 0.0
        %v741 = vmax.f32 %v637, 0.0
        %v742 = vmax.f32 %v708, 0.0
        %v743 = vmax.f32 %v710, 0.0
        %v744 = vmax.f32 %v639, 0.0
        %v745 = vmax.f32 %v641, 0.0
        %v746 = vmax.f32 %v712, 0.0
        %v747 = vmax.f32 %v714, 0.0
        %v748 = vpack.c.bf16 %v720, %v716
        %v749 = vpack.c.bf16 %v721, %v717
        %v750 = vpack.c.bf16 %v722, %v718
        %v751 = vpack.c.bf16 %v723, %v719
        %v752 = vpack.c.bf16 %v728, %v724
        %v753 = vpack.c.bf16 %v729, %v725
        %v754 = vpack.c.bf16 %v730, %v726
        %v755 = vpack.c.bf16 %v731, %v727
        %v756 = vpack.c.bf16 %v736, %v732
        %v757 = vpack.c.bf16 %v737, %v733
        %v758 = vpack.c.bf16 %v738, %v734
        %v759 = vpack.c.bf16 %v739, %v735
        %v760 = vpack.c.bf16 %v744, %v740
        %v761 = vpack.c.bf16 %v745, %v741
        %v762 = vpack.c.bf16 %v746, %v742
        %v763 = vpack.c.bf16 %v747, %v743
        %v764 = vld [vmem:[#allocation8] sm:$0xf]
        %v765 = vld [vmem:[#allocation8 + $0x4] sm:$0xf]
        %v766 = vld [vmem:[#allocation8 + $0x8] sm:$0xf]
        %v767 = vld [vmem:[#allocation8 + $0xc] sm:$0xf]
        %v768 = vld [vmem:[#allocation8 + $0x10] sm:$0xf]
        %v769 = vld [vmem:[#allocation8 + $0x14] sm:$0xf]
        %v770 = vld [vmem:[#allocation8 + $0x18] sm:$0xf]
        %v771 = vld [vmem:[#allocation8 + $0x1c] sm:$0xf]
        %v772 = vld [vmem:[#allocation8 + $0x20] sm:$0xf]
        %v773 = vld [vmem:[#allocation8 + $0x24] sm:$0xf]
        %v774 = vld [vmem:[#allocation8 + $0x28] sm:$0xf]
        %v775 = vld [vmem:[#allocation8 + $0x2c] sm:$0xf]
        %v776 = vld [vmem:[#allocation8 + $0x30] sm:$0xf]
        %v777 = vld [vmem:[#allocation8 + $0x34] sm:$0xf]
        %v778 = vld [vmem:[#allocation8 + $0x38] sm:$0xf]
        %v779 = vld [vmem:[#allocation8 + $0x3c] sm:$0xf]
        %v780 = vld [vmem:[#allocation8 + $0x40] sm:$0xf]
        %v781 = vld [vmem:[#allocation8 + $0x44] sm:$0xf]
        %v782 = vld [vmem:[#allocation8 + $0x48] sm:$0xf]
        %v783 = vld [vmem:[#allocation8 + $0x4c] sm:$0xf]
        %v784 = vld [vmem:[#allocation8 + $0x50] sm:$0xf]
        %v785 = vld [vmem:[#allocation8 + $0x54] sm:$0xf]
        %v786 = vld [vmem:[#allocation8 + $0x58] sm:$0xf]
        %v787 = vld [vmem:[#allocation8 + $0x5c] sm:$0xf]
        %v788 = vld [vmem:[#allocation8 + $0x60] sm:$0xf]
        %v789 = vld [vmem:[#allocation8 + $0x64] sm:$0xf]
        %v790 = vld [vmem:[#allocation8 + $0x68] sm:$0xf]
        %v791 = vld [vmem:[#allocation8 + $0x6c] sm:$0xf]
        %v792 = vld [vmem:[#allocation8 + $0x70] sm:$0xf]
        %v793 = vld [vmem:[#allocation8 + $0x74] sm:$0xf]
        %v794 = vld [vmem:[#allocation8 + $0x78] sm:$0xf]
        %v795 = vld [vmem:[#allocation8 + $0x7c] sm:$0xf]
        %v796 = vld [vmem:[#allocation8 + $0x80] sm:$0xf]
        %v797 = vld [vmem:[#allocation8 + $0x84] sm:$0xf]
        %v798 = vld [vmem:[#allocation8 + $0x88] sm:$0xf]
        %v799 = vld [vmem:[#allocation8 + $0x8c] sm:$0xf]
        %v800 = vld [vmem:[#allocation8 + $0x90] sm:$0xf]
        %v801 = vld [vmem:[#allocation8 + $0x94] sm:$0xf]
        %v802 = vld [vmem:[#allocation8 + $0x98] sm:$0xf]
        %v803 = vld [vmem:[#allocation8 + $0x9c] sm:$0xf]
        %v804 = vld [vmem:[#allocation8 + $0xa0] sm:$0xf]
        %v805 = vld [vmem:[#allocation8 + $0xa4] sm:$0xf]
        %v806 = vld [vmem:[#allocation8 + $0xa8] sm:$0xf]
        %v807 = vld [vmem:[#allocation8 + $0xac] sm:$0xf]
        %v808 = vld [vmem:[#allocation8 + $0xb0] sm:$0xf]
        %v809 = vld [vmem:[#allocation8 + $0xb4] sm:$0xf]
        %v810 = vld [vmem:[#allocation8 + $0xb8] sm:$0xf]
        %v811 = vld [vmem:[#allocation8 + $0xbc] sm:$0xf]
        %v812 = vld [vmem:[#allocation8 + $0xc0] sm:$0xf]
        %v813 = vld [vmem:[#allocation8 + $0xc4] sm:$0xf]
        %v814 = vld [vmem:[#allocation8 + $0xc8] sm:$0xf]
        %v815 = vld [vmem:[#allocation8 + $0xcc] sm:$0xf]
        %v816 = vld [vmem:[#allocation8 + $0xd0] sm:$0xf]
        %v817 = vld [vmem:[#allocation8 + $0xd4] sm:$0xf]
        %v818 = vld [vmem:[#allocation8 + $0xd8] sm:$0xf]
        %v819 = vld [vmem:[#allocation8 + $0xdc] sm:$0xf]
        %v820 = vld [vmem:[#allocation8 + $0xe0] sm:$0xf]
        %v821 = vld [vmem:[#allocation8 + $0xe4] sm:$0xf]
        %v822 = vld [vmem:[#allocation8 + $0xe8] sm:$0xf]
        %v823 = vld [vmem:[#allocation8 + $0xec] sm:$0xf]
        %v824 = vld [vmem:[#allocation8 + $0xf0] sm:$0xf]
        %v825 = vld [vmem:[#allocation8 + $0xf4] sm:$0xf]
        %v826 = vld [vmem:[#allocation8 + $0xf8] sm:$0xf]
        %v827 = vld [vmem:[#allocation8 + $0xfc] sm:$0xf]
        %v828 = vld [vmem:[#allocation5 + $0x10] sm:$0xff]
        %v829 = vld [vmem:[#allocation5 + $0x18] sm:$0xff]
        %v830 = vld [vmem:[#allocation5 + $0x30] sm:$0xff]
        %v831 = vld [vmem:[#allocation5 + $0x38] sm:$0xff]
        %v832 = vld [vmem:[#allocation5 + $0x50] sm:$0xff]
        %v833 = vld [vmem:[#allocation5 + $0x58] sm:$0xff]
        %v834 = vld [vmem:[#allocation5 + $0x70] sm:$0xff]
        %v835 = vld [vmem:[#allocation5 + $0x78] sm:$0xff]
        %v836 = vld [vmem:[#allocation5 + $0x90] sm:$0xff]
        %v837 = vld [vmem:[#allocation5 + $0x98] sm:$0xff]
        %v838 = vld [vmem:[#allocation5 + $0xb0] sm:$0xff]
        %v839 = vld [vmem:[#allocation5 + $0xb8] sm:$0xff]
        %v840 = vld [vmem:[#allocation5 + $0xd0] sm:$0xff]
        %v841 = vld [vmem:[#allocation5 + $0xd8] sm:$0xff]
        %v842 = vld [vmem:[#allocation5 + $0xf0] sm:$0xff]
        %v843 = vld [vmem:[#allocation5 + $0xf8] sm:$0xff]
        %v844 = vld [vmem:[#allocation5 + $0x110] sm:$0xff]
        %v845 = vld [vmem:[#allocation5 + $0x118] sm:$0xff]
        %v846 = vld [vmem:[#allocation5 + $0x130] sm:$0xff]
        %v847 = vld [vmem:[#allocation5 + $0x138] sm:$0xff]
        %v848 = vld [vmem:[#allocation5 + $0x150] sm:$0xff]
        %v849 = vld [vmem:[#allocation5 + $0x158] sm:$0xff]
        %v850 = vld [vmem:[#allocation5 + $0x170] sm:$0xff]
        %v851 = vld [vmem:[#allocation5 + $0x178] sm:$0xff]
        %v852 = vld [vmem:[#allocation5 + $0x190] sm:$0xff]
        %v853 = vld [vmem:[#allocation5 + $0x198] sm:$0xff]
        %v854 = vld [vmem:[#allocation5 + $0x1b0] sm:$0xff]
        %v855 = vld [vmem:[#allocation5 + $0x1b8] sm:$0xff]
        %v856 = vld [vmem:[#allocation5 + $0x1d0] sm:$0xff]
        %v857 = vld [vmem:[#allocation5 + $0x1d8] sm:$0xff]
        %v858 = vld [vmem:[#allocation5 + $0x1f0] sm:$0xff]
        %v859 = vld [vmem:[#allocation5 + $0x1f8] sm:$0xff]
        %v860 = vld [vmem:[#allocation7 + $0x4] sm:$0xf]
        %v862 = vlaneseq
        %v863 = vshrl.u32 %v862, 7
        %v864 = vsub.s32 0, %v863
        %v865 = vrot.slane %v860, %v864
        %v866 = vlaneseq
        %v867 = vshrl.u32 %v866, 7
        %v868 = vsub.s32 1, %v867
        %v869 = vrot.slane %v860, %v868
        %v870 = vlaneseq
        %v871 = vshrl.u32 %v870, 7
        %v872 = vsub.s32 2, %v871
        %v873 = vrot.slane %v860, %v872
        %v874 = vlaneseq
        %v875 = vshrl.u32 %v874, 7
        %v876 = vsub.s32 3, %v875
        %v877 = vrot.slane %v860, %v876
        %v914 = vunpack.c.l.b16 %v828
        %v915 = vunpack.c.h.b16 %v828
        %v916 = vunpack.c.l.b16 %v829
        %v917 = vunpack.c.h.b16 %v829
        %v918 = vunpack.c.l.b16 %v830
        %v919 = vunpack.c.h.b16 %v830
        %v920 = vunpack.c.l.b16 %v831
        %v921 = vunpack.c.h.b16 %v831
        %v922 = vunpack.c.l.b16 %v832
        %v923 = vunpack.c.h.b16 %v832
        %v924 = vunpack.c.l.b16 %v833
        %v925 = vunpack.c.h.b16 %v833
        %v926 = vunpack.c.l.b16 %v834
        %v927 = vunpack.c.h.b16 %v834
        %v928 = vunpack.c.l.b16 %v835
        %v929 = vunpack.c.h.b16 %v835
        %v930 = vunpack.c.l.b16 %v836
        %v931 = vunpack.c.h.b16 %v836
        %v932 = vunpack.c.l.b16 %v837
        %v933 = vunpack.c.h.b16 %v837
        %v934 = vunpack.c.l.b16 %v838
        %v935 = vunpack.c.h.b16 %v838
        %v936 = vunpack.c.l.b16 %v839
        %v937 = vunpack.c.h.b16 %v839
        %v938 = vunpack.c.l.b16 %v840
        %v939 = vunpack.c.h.b16 %v840
        %v940 = vunpack.c.l.b16 %v841
        %v941 = vunpack.c.h.b16 %v841
        %v942 = vunpack.c.l.b16 %v842
        %v943 = vunpack.c.h.b16 %v842
        %v944 = vunpack.c.l.b16 %v843
        %v945 = vunpack.c.h.b16 %v843
        %v946 = vunpack.c.l.b16 %v844
        %v947 = vunpack.c.h.b16 %v844
        %v948 = vunpack.c.l.b16 %v845
        %v949 = vunpack.c.h.b16 %v845
        %v950 = vunpack.c.l.b16 %v846
        %v951 = vunpack.c.h.b16 %v846
        %v952 = vunpack.c.l.b16 %v847
        %v953 = vunpack.c.h.b16 %v847
        %v954 = vunpack.c.l.b16 %v848
        %v955 = vunpack.c.h.b16 %v848
        %v956 = vunpack.c.l.b16 %v849
        %v957 = vunpack.c.h.b16 %v849
        %v958 = vunpack.c.l.b16 %v850
        %v959 = vunpack.c.h.b16 %v850
        %v960 = vunpack.c.l.b16 %v851
        %v961 = vunpack.c.h.b16 %v851
        %v962 = vunpack.c.l.b16 %v852
        %v963 = vunpack.c.h.b16 %v852
        %v964 = vunpack.c.l.b16 %v853
        %v965 = vunpack.c.h.b16 %v853
        %v966 = vunpack.c.l.b16 %v854
        %v967 = vunpack.c.h.b16 %v854
        %v968 = vunpack.c.l.b16 %v855
        %v969 = vunpack.c.h.b16 %v855
        %v970 = vunpack.c.l.b16 %v856
        %v971 = vunpack.c.h.b16 %v856
        %v972 = vunpack.c.l.b16 %v857
        %v973 = vunpack.c.h.b16 %v857
        %v974 = vunpack.c.l.b16 %v858
        %v975 = vunpack.c.h.b16 %v858
        %v976 = vunpack.c.l.b16 %v859
        %v977 = vunpack.c.h.b16 %v859
        %v978 = vpack.c.b16 %v918, %v914
        %v979 = vpack.c.b16 %v919, %v915
        %v980 = vpack.c.b16 %v920, %v916
        %v981 = vpack.c.b16 %v921, %v917
        %v982 = vpack.c.b16 %v926, %v922
        %v983 = vpack.c.b16 %v927, %v923
        %v984 = vpack.c.b16 %v928, %v924
        %v985 = vpack.c.b16 %v929, %v925
        %v986 = vpack.c.b16 %v934, %v930
        %v987 = vpack.c.b16 %v935, %v931
        %v988 = vpack.c.b16 %v936, %v932
        %v989 = vpack.c.b16 %v937, %v933
        %v990 = vpack.c.b16 %v942, %v938
        %v991 = vpack.c.b16 %v943, %v939
        %v992 = vpack.c.b16 %v944, %v940
        %v993 = vpack.c.b16 %v945, %v941
        %v994 = vpack.c.b16 %v950, %v946
        %v995 = vpack.c.b16 %v951, %v947
        %v996 = vpack.c.b16 %v952, %v948
        %v997 = vpack.c.b16 %v953, %v949
        %v998 = vpack.c.b16 %v958, %v954
        %v999 = vpack.c.b16 %v959, %v955
        %v1000 = vpack.c.b16 %v960, %v956
        %v1001 = vpack.c.b16 %v961, %v957
        %v1002 = vpack.c.b16 %v966, %v962
        %v1003 = vpack.c.b16 %v967, %v963
        %v1004 = vpack.c.b16 %v968, %v964
        %v1005 = vpack.c.b16 %v969, %v965
        %v1006 = vpack.c.b16 %v974, %v970
        %v1007 = vpack.c.b16 %v975, %v971
        %v1008 = vpack.c.b16 %v976, %v972
        %v1009 = vpack.c.b16 %v977, %v973
        %1042 = vmatprep.subr.bf16.mxu0 %v1007
        %1043 = vmatpush1.bf16.msra.mxu0 %v1006
        %1044 = vmatprep.subr.bf16.mxu0 %v1003
        %1045 = vmatpush1.bf16.msra.mxu0 %v1002
        %1046 = vmatprep.subr.bf16.mxu0 %v999
        %1047 = vmatpush1.bf16.msra.mxu0 %v998
        %1048 = vmatprep.subr.bf16.mxu0 %v995
        %1049 = vmatpush1.bf16.msra.mxu0 %v994
        %1050 = vmatprep.subr.bf16.mxu0 %v991
        %1051 = vmatpush1.bf16.msra.mxu0 %v990
        %1052 = vmatprep.subr.bf16.mxu0 %v987
        %1053 = vmatpush1.bf16.msra.mxu0 %v986
        %1054 = vmatprep.subr.bf16.mxu0 %v983
        %1055 = vmatpush1.bf16.msra.mxu0 %v982
        %1056 = vmatprep.subr.bf16.mxu0 %v979
        %1057 = vmatpush1.bf16.msra.mxu0 %v978
        %1058 = vmatprep.subr.bf16.mxu0 0
        %1059 = vmatpush2.bf16.msra.mxu0 0
        %1060 = vmatprep.subr.bf16.mxu0 0
        %1061 = vmatpush2.bf16.msra.mxu0 0
        %1062 = vmatprep.subr.bf16.mxu0 0
        %1063 = vmatpush2.bf16.msra.mxu0 0
        %1064 = vmatprep.subr.bf16.mxu0 0
        %1065 = vmatpush2.bf16.msra.mxu0 0
        %1066 = vmatprep.subr.bf16.mxu0 0
        %1067 = vmatpush2.bf16.msra.mxu0 0
        %1068 = vmatprep.subr.bf16.mxu0 0
        %1069 = vmatpush2.bf16.msra.mxu0 0
        %1070 = vmatprep.subr.bf16.mxu0 0
        %1071 = vmatpush2.bf16.msra.mxu0 0
        %1072 = vmatprep.subr.bf16.mxu0 0
        %1073 = vmatpush2.bf16.msra.mxu0 0
        %1074 = vmatprep.mubr.bf16.mxu0 0
        %1075 = vmatmul.mubr.bf16.gmra.mxu0 %v352
        %v1076 = vpop.f32.mrf.mxu0
        %v1077 = vadd.f32 %v865, %v1076
        %v1078 = vpop.f32.mrf.mxu0
        %v1079 = vadd.f32 %v869, %v1078
        %v1080 = vpop.f32.mrf.mxu0
        %v1081 = vadd.f32 %v865, %v1080
        %v1082 = vpop.f32.mrf.mxu0
        %v1083 = vadd.f32 %v869, %v1082
        %1084 = vmatprep.mubr.bf16.mxu0 0
        %1085 = vmatmul.mubr.bf16.gmra.mxu0 %v353
        %v1086 = vpop.f32.mrf.mxu0
        %v1087 = vadd.f32 %v865, %v1086
        %v1088 = vpop.f32.mrf.mxu0
        %v1089 = vadd.f32 %v869, %v1088
        %v1090 = vpop.f32.mrf.mxu0
        %v1091 = vadd.f32 %v865, %v1090
        %v1092 = vpop.f32.mrf.mxu0
        %v1093 = vadd.f32 %v869, %v1092
        %1094 = vmatprep.mubr.bf16.mxu0 0
        %1095 = vmatmul.mubr.bf16.gmra.mxu0 %v354
        %v1096 = vpop.f32.mrf.mxu0
        %v1097 = vadd.f32 %v865, %v1096
        %v1098 = vpop.f32.mrf.mxu0
        %v1099 = vadd.f32 %v869, %v1098
        %v1100 = vpop.f32.mrf.mxu0
        %v1101 = vadd.f32 %v865, %v1100
        %v1102 = vpop.f32.mrf.mxu0
        %v1103 = vadd.f32 %v869, %v1102
        %1104 = vmatprep.mubr.bf16.mxu0 0
        %1105 = vmatmul.mubr.bf16.gmra.mxu0 %v355
        %v1106 = vpop.f32.mrf.mxu0
        %v1107 = vadd.f32 %v865, %v1106
        %v1108 = vpop.f32.mrf.mxu0
        %v1109 = vadd.f32 %v869, %v1108
        %v1110 = vpop.f32.mrf.mxu0
        %v1111 = vadd.f32 %v865, %v1110
        %v1112 = vpop.f32.mrf.mxu0
        %v1113 = vadd.f32 %v869, %v1112
        %1114 = vdwg.mxu0
        %1115 = vmatprep.subr.bf16.mxu0 %v1009
        %1116 = vmatpush1.bf16.msra.mxu0 %v1008
        %1117 = vmatprep.subr.bf16.mxu0 %v1005
        %1118 = vmatpush1.bf16.msra.mxu0 %v1004
        %1119 = vmatprep.subr.bf16.mxu0 %v1001
        %1120 = vmatpush1.bf16.msra.mxu0 %v1000
        %1121 = vmatprep.subr.bf16.mxu0 %v997
        %1122 = vmatpush1.bf16.msra.mxu0 %v996
        %1123 = vmatprep.subr.bf16.mxu0 %v993
        %1124 = vmatpush1.bf16.msra.mxu0 %v992
        %1125 = vmatprep.subr.bf16.mxu0 %v989
        %1126 = vmatpush1.bf16.msra.mxu0 %v988
        %1127 = vmatprep.subr.bf16.mxu0 %v985
        %1128 = vmatpush1.bf16.msra.mxu0 %v984
        %1129 = vmatprep.subr.bf16.mxu0 %v981
        %1130 = vmatpush1.bf16.msra.mxu0 %v980
        %1131 = vmatprep.subr.bf16.mxu0 0
        %1132 = vmatpush2.bf16.msra.mxu0 0
        %1133 = vmatprep.subr.bf16.mxu0 0
        %1134 = vmatpush2.bf16.msra.mxu0 0
        %1135 = vmatprep.subr.bf16.mxu0 0
        %1136 = vmatpush2.bf16.msra.mxu0 0
        %1137 = vmatprep.subr.bf16.mxu0 0
        %1138 = vmatpush2.bf16.msra.mxu0 0
        %1139 = vmatprep.subr.bf16.mxu0 0
        %1140 = vmatpush2.bf16.msra.mxu0 0
        %1141 = vmatprep.subr.bf16.mxu0 0
        %1142 = vmatpush2.bf16.msra.mxu0 0
        %1143 = vmatprep.subr.bf16.mxu0 0
        %1144 = vmatpush2.bf16.msra.mxu0 0
        %1145 = vmatprep.subr.bf16.mxu0 0
        %1146 = vmatpush2.bf16.msra.mxu0 0
        %1147 = vmatprep.mubr.bf16.mxu0 0
        %1148 = vmatmul.mubr.bf16.gmra.mxu0 %v352
        %v1149 = vpop.f32.mrf.mxu0
        %v1150 = vadd.f32 %v873, %v1149
        %v1151 = vpop.f32.mrf.mxu0
        %v1152 = vadd.f32 %v877, %v1151
        %v1153 = vpop.f32.mrf.mxu0
        %v1154 = vadd.f32 %v873, %v1153
        %v1155 = vpop.f32.mrf.mxu0
        %v1156 = vadd.f32 %v877, %v1155
        %1157 = vmatprep.mubr.bf16.mxu0 0
        %1158 = vmatmul.mubr.bf16.gmra.mxu0 %v353
        %v1159 = vpop.f32.mrf.mxu0
        %v1160 = vadd.f32 %v873, %v1159
        %v1161 = vpop.f32.mrf.mxu0
        %v1162 = vadd.f32 %v877, %v1161
        %v1163 = vpop.f32.mrf.mxu0
        %v1164 = vadd.f32 %v873, %v1163
        %v1165 = vpop.f32.mrf.mxu0
        %v1166 = vadd.f32 %v877, %v1165
        %1167 = vmatprep.mubr.bf16.mxu0 0
        %1168 = vmatmul.mubr.bf16.gmra.mxu0 %v354
        %v1169 = vpop.f32.mrf.mxu0
        %v1170 = vadd.f32 %v873, %v1169
        %v1171 = vpop.f32.mrf.mxu0
        %v1172 = vadd.f32 %v877, %v1171
        %v1173 = vpop.f32.mrf.mxu0
        %v1174 = vadd.f32 %v873, %v1173
        %v1175 = vpop.f32.mrf.mxu0
        %v1176 = vadd.f32 %v877, %v1175
        %1177 = vmatprep.mubr.bf16.mxu0 0
        %1178 = vmatmul.mubr.bf16.gmra.mxu0 %v355
        %v1179 = vpop.f32.mrf.mxu0
        %v1180 = vadd.f32 %v873, %v1179
        %v1181 = vpop.f32.mrf.mxu0
        %v1182 = vadd.f32 %v877, %v1181
        %v1183 = vpop.f32.mrf.mxu0
        %v1184 = vadd.f32 %v873, %v1183
        %v1185 = vpop.f32.mrf.mxu0
        %v1186 = vadd.f32 %v877, %v1185
        %1187 = vdwg.mxu0
        %v1188 = vmax.f32 %v1077, 0.0
        %v1189 = vmax.f32 %v1079, 0.0
        %v1190 = vmax.f32 %v1150, 0.0
        %v1191 = vmax.f32 %v1152, 0.0
        %v1192 = vmax.f32 %v1081, 0.0
        %v1193 = vmax.f32 %v1083, 0.0
        %v1194 = vmax.f32 %v1154, 0.0
        %v1195 = vmax.f32 %v1156, 0.0
        %v1196 = vmax.f32 %v1087, 0.0
        %v1197 = vmax.f32 %v1089, 0.0
        %v1198 = vmax.f32 %v1160, 0.0
        %v1199 = vmax.f32 %v1162, 0.0
        %v1200 = vmax.f32 %v1091, 0.0
        %v1201 = vmax.f32 %v1093, 0.0
        %v1202 = vmax.f32 %v1164, 0.0
        %v1203 = vmax.f32 %v1166, 0.0
        %v1204 = vmax.f32 %v1097, 0.0
        %v1205 = vmax.f32 %v1099, 0.0
        %v1206 = vmax.f32 %v1170, 0.0
        %v1207 = vmax.f32 %v1172, 0.0
        %v1208 = vmax.f32 %v1101, 0.0
        %v1209 = vmax.f32 %v1103, 0.0
        %v1210 = vmax.f32 %v1174, 0.0
        %v1211 = vmax.f32 %v1176, 0.0
        %v1212 = vmax.f32 %v1107, 0.0
        %v1213 = vmax.f32 %v1109, 0.0
        %v1214 = vmax.f32 %v1180, 0.0
        %v1215 = vmax.f32 %v1182, 0.0
        %v1216 = vmax.f32 %v1111, 0.0
        %v1217 = vmax.f32 %v1113, 0.0
        %v1218 = vmax.f32 %v1184, 0.0
        %v1219 = vmax.f32 %v1186, 0.0
        %v1220 = vpack.c.bf16 %v1192, %v1188
        %v1221 = vpack.c.bf16 %v1193, %v1189
        %v1222 = vpack.c.bf16 %v1194, %v1190
        %v1223 = vpack.c.bf16 %v1195, %v1191
        %v1224 = vpack.c.bf16 %v1200, %v1196
        %v1225 = vpack.c.bf16 %v1201, %v1197
        %v1226 = vpack.c.bf16 %v1202, %v1198
        %v1227 = vpack.c.bf16 %v1203, %v1199
        %v1228 = vpack.c.bf16 %v1208, %v1204
        %v1229 = vpack.c.bf16 %v1209, %v1205
        %v1230 = vpack.c.bf16 %v1210, %v1206
        %v1231 = vpack.c.bf16 %v1211, %v1207
        %v1232 = vpack.c.bf16 %v1216, %v1212
        %v1233 = vpack.c.bf16 %v1217, %v1213
        %v1234 = vpack.c.bf16 %v1218, %v1214
        %v1235 = vpack.c.bf16 %v1219, %v1215
        %v1236 = vld [vmem:[#allocation8 + $0x100] sm:$0xf]
        %v1237 = vld [vmem:[#allocation8 + $0x104] sm:$0xf]
        %v1238 = vld [vmem:[#allocation8 + $0x108] sm:$0xf]
        %v1239 = vld [vmem:[#allocation8 + $0x10c] sm:$0xf]
        %v1240 = vld [vmem:[#allocation8 + $0x110] sm:$0xf]
        %v1241 = vld [vmem:[#allocation8 + $0x114] sm:$0xf]
        %v1242 = vld [vmem:[#allocation8 + $0x118] sm:$0xf]
        %v1243 = vld [vmem:[#allocation8 + $0x11c] sm:$0xf]
        %v1244 = vld [vmem:[#allocation8 + $0x120] sm:$0xf]
        %v1245 = vld [vmem:[#allocation8 + $0x124] sm:$0xf]
        %v1246 = vld [vmem:[#allocation8 + $0x128] sm:$0xf]
        %v1247 = vld [vmem:[#allocation8 + $0x12c] sm:$0xf]
        %v1248 = vld [vmem:[#allocation8 + $0x130] sm:$0xf]
        %v1249 = vld [vmem:[#allocation8 + $0x134] sm:$0xf]
        %v1250 = vld [vmem:[#allocation8 + $0x138] sm:$0xf]
        %v1251 = vld [vmem:[#allocation8 + $0x13c] sm:$0xf]
        %v1252 = vld [vmem:[#allocation8 + $0x140] sm:$0xf]
        %v1253 = vld [vmem:[#allocation8 + $0x144] sm:$0xf]
        %v1254 = vld [vmem:[#allocation8 + $0x148] sm:$0xf]
        %v1255 = vld [vmem:[#allocation8 + $0x14c] sm:$0xf]
        %v1256 = vld [vmem:[#allocation8 + $0x150] sm:$0xf]
        %v1257 = vld [vmem:[#allocation8 + $0x154] sm:$0xf]
        %v1258 = vld [vmem:[#allocation8 + $0x158] sm:$0xf]
        %v1259 = vld [vmem:[#allocation8 + $0x15c] sm:$0xf]
        %v1260 = vld [vmem:[#allocation8 + $0x160] sm:$0xf]
        %v1261 = vld [vmem:[#allocation8 + $0x164] sm:$0xf]
        %v1262 = vld [vmem:[#allocation8 + $0x168] sm:$0xf]
        %v1263 = vld [vmem:[#allocation8 + $0x16c] sm:$0xf]
        %v1264 = vld [vmem:[#allocation8 + $0x170] sm:$0xf]
        %v1265 = vld [vmem:[#allocation8 + $0x174] sm:$0xf]
        %v1266 = vld [vmem:[#allocation8 + $0x178] sm:$0xf]
        %v1267 = vld [vmem:[#allocation8 + $0x17c] sm:$0xf]
        %v1268 = vld [vmem:[#allocation8 + $0x180] sm:$0xf]
        %v1269 = vld [vmem:[#allocation8 + $0x184] sm:$0xf]
        %v1270 = vld [vmem:[#allocation8 + $0x188] sm:$0xf]
        %v1271 = vld [vmem:[#allocation8 + $0x18c] sm:$0xf]
        %v1272 = vld [vmem:[#allocation8 + $0x190] sm:$0xf]
        %v1273 = vld [vmem:[#allocation8 + $0x194] sm:$0xf]
        %v1274 = vld [vmem:[#allocation8 + $0x198] sm:$0xf]
        %v1275 = vld [vmem:[#allocation8 + $0x19c] sm:$0xf]
        %v1276 = vld [vmem:[#allocation8 + $0x1a0] sm:$0xf]
        %v1277 = vld [vmem:[#allocation8 + $0x1a4] sm:$0xf]
        %v1278 = vld [vmem:[#allocation8 + $0x1a8] sm:$0xf]
        %v1279 = vld [vmem:[#allocation8 + $0x1ac] sm:$0xf]
        %v1280 = vld [vmem:[#allocation8 + $0x1b0] sm:$0xf]
        %v1281 = vld [vmem:[#allocation8 + $0x1b4] sm:$0xf]
        %v1282 = vld [vmem:[#allocation8 + $0x1b8] sm:$0xf]
        %v1283 = vld [vmem:[#allocation8 + $0x1bc] sm:$0xf]
        %v1284 = vld [vmem:[#allocation8 + $0x1c0] sm:$0xf]
        %v1285 = vld [vmem:[#allocation8 + $0x1c4] sm:$0xf]
        %v1286 = vld [vmem:[#allocation8 + $0x1c8] sm:$0xf]
        %v1287 = vld [vmem:[#allocation8 + $0x1cc] sm:$0xf]
        %v1288 = vld [vmem:[#allocation8 + $0x1d0] sm:$0xf]
        %v1289 = vld [vmem:[#allocation8 + $0x1d4] sm:$0xf]
        %v1290 = vld [vmem:[#allocation8 + $0x1d8] sm:$0xf]
        %v1291 = vld [vmem:[#allocation8 + $0x1dc] sm:$0xf]
        %v1292 = vld [vmem:[#allocation8 + $0x1e0] sm:$0xf]
        %v1293 = vld [vmem:[#allocation8 + $0x1e4] sm:$0xf]
        %v1294 = vld [vmem:[#allocation8 + $0x1e8] sm:$0xf]
        %v1295 = vld [vmem:[#allocation8 + $0x1ec] sm:$0xf]
        %v1296 = vld [vmem:[#allocation8 + $0x1f0] sm:$0xf]
        %v1297 = vld [vmem:[#allocation8 + $0x1f4] sm:$0xf]
        %v1298 = vld [vmem:[#allocation8 + $0x1f8] sm:$0xf]
        %v1299 = vld [vmem:[#allocation8 + $0x1fc] sm:$0xf]
        %v1364 = vunpack.c.l.b16 %v1236
        %v1365 = vunpack.c.l.b16 %v1237
        %v1366 = vunpack.c.l.b16 %v1238
        %v1367 = vunpack.c.l.b16 %v1239
        %v1368 = vunpack.c.l.b16 %v1240
        %v1369 = vunpack.c.l.b16 %v1241
        %v1370 = vunpack.c.l.b16 %v1242
        %v1371 = vunpack.c.l.b16 %v1243
        %v1372 = vunpack.c.l.b16 %v1244
        %v1373 = vunpack.c.l.b16 %v1245
        %v1374 = vunpack.c.l.b16 %v1246
        %v1375 = vunpack.c.l.b16 %v1247
        %v1376 = vunpack.c.l.b16 %v1248
        %v1377 = vunpack.c.l.b16 %v1249
        %v1378 = vunpack.c.l.b16 %v1250
        %v1379 = vunpack.c.l.b16 %v1251
        %v1380 = vunpack.c.l.b16 %v1252
        %v1381 = vunpack.c.l.b16 %v1253
        %v1382 = vunpack.c.l.b16 %v1254
        %v1383 = vunpack.c.l.b16 %v1255
        %v1384 = vunpack.c.l.b16 %v1256
        %v1385 = vunpack.c.l.b16 %v1257
        %v1386 = vunpack.c.l.b16 %v1258
        %v1387 = vunpack.c.l.b16 %v1259
        %v1388 = vunpack.c.l.b16 %v1260
        %v1389 = vunpack.c.l.b16 %v1261
        %v1390 = vunpack.c.l.b16 %v1262
        %v1391 = vunpack.c.l.b16 %v1263
        %v1392 = vunpack.c.l.b16 %v1264
        %v1393 = vunpack.c.l.b16 %v1265
        %v1394 = vunpack.c.l.b16 %v1266
        %v1395 = vunpack.c.l.b16 %v1267
        %v1396 = vunpack.c.l.b16 %v1268
        %v1397 = vunpack.c.l.b16 %v1269
        %v1398 = vunpack.c.l.b16 %v1270
        %v1399 = vunpack.c.l.b16 %v1271
        %v1400 = vunpack.c.l.b16 %v1272
        %v1401 = vunpack.c.l.b16 %v1273
        %v1402 = vunpack.c.l.b16 %v1274
        %v1403 = vunpack.c.l.b16 %v1275
        %v1404 = vunpack.c.l.b16 %v1276
        %v1405 = vunpack.c.l.b16 %v1277
        %v1406 = vunpack.c.l.b16 %v1278
        %v1407 = vunpack.c.l.b16 %v1279
        %v1408 = vunpack.c.l.b16 %v1280
        %v1409 = vunpack.c.l.b16 %v1281
        %v1410 = vunpack.c.l.b16 %v1282
        %v1411 = vunpack.c.l.b16 %v1283
        %v1412 = vunpack.c.l.b16 %v1284
        %v1413 = vunpack.c.l.b16 %v1285
        %v1414 = vunpack.c.l.b16 %v1286
        %v1415 = vunpack.c.l.b16 %v1287
        %v1416 = vunpack.c.l.b16 %v1288
        %v1417 = vunpack.c.l.b16 %v1289
        %v1418 = vunpack.c.l.b16 %v1290
        %v1419 = vunpack.c.l.b16 %v1291
        %v1420 = vunpack.c.l.b16 %v1292
        %v1421 = vunpack.c.l.b16 %v1293
        %v1422 = vunpack.c.l.b16 %v1294
        %v1423 = vunpack.c.l.b16 %v1295
        %v1424 = vunpack.c.l.b16 %v1296
        %v1425 = vunpack.c.l.b16 %v1297
        %v1426 = vunpack.c.l.b16 %v1298
        %v1427 = vunpack.c.l.b16 %v1299
        %v1428 = vpack.c.b16 %v1365, %v1364
        %v1429 = vpack.c.b16 %v1367, %v1366
        %v1430 = vpack.c.b16 %v1369, %v1368
        %v1431 = vpack.c.b16 %v1371, %v1370
        %v1432 = vpack.c.b16 %v1373, %v1372
        %v1433 = vpack.c.b16 %v1375, %v1374
        %v1434 = vpack.c.b16 %v1377, %v1376
        %v1435 = vpack.c.b16 %v1379, %v1378
        %v1436 = vpack.c.b16 %v1381, %v1380
        %v1437 = vpack.c.b16 %v1383, %v1382
        %v1438 = vpack.c.b16 %v1385, %v1384
        %v1439 = vpack.c.b16 %v1387, %v1386
        %v1440 = vpack.c.b16 %v1389, %v1388
        %v1441 = vpack.c.b16 %v1391, %v1390
        %v1442 = vpack.c.b16 %v1393, %v1392
        %v1443 = vpack.c.b16 %v1395, %v1394
        %v1444 = vpack.c.b16 %v1397, %v1396
        %v1445 = vpack.c.b16 %v1399, %v1398
        %v1446 = vpack.c.b16 %v1401, %v1400
        %v1447 = vpack.c.b16 %v1403, %v1402
        %v1448 = vpack.c.b16 %v1405, %v1404
        %v1449 = vpack.c.b16 %v1407, %v1406
        %v1450 = vpack.c.b16 %v1409, %v1408
        %v1451 = vpack.c.b16 %v1411, %v1410
        %v1452 = vpack.c.b16 %v1413, %v1412
        %v1453 = vpack.c.b16 %v1415, %v1414
        %v1454 = vpack.c.b16 %v1417, %v1416
        %v1455 = vpack.c.b16 %v1419, %v1418
        %v1456 = vpack.c.b16 %v1421, %v1420
        %v1457 = vpack.c.b16 %v1423, %v1422
        %v1458 = vpack.c.b16 %v1425, %v1424
        %v1459 = vpack.c.b16 %v1427, %v1426
        %1492 = vmatprep.subr.bf16.mxu0 0
        %1493 = vmatpush1.bf16.msra.mxu0 %v1435
        %1494 = vmatprep.subr.bf16.mxu0 0
        %1495 = vmatpush1.bf16.msra.mxu0 %v1434
        %1496 = vmatprep.subr.bf16.mxu0 0
        %1497 = vmatpush1.bf16.msra.mxu0 %v1433
        %1498 = vmatprep.subr.bf16.mxu0 0
        %1499 = vmatpush1.bf16.msra.mxu0 %v1432
        %1500 = vmatprep.subr.bf16.mxu0 0
        %1501 = vmatpush1.bf16.msra.mxu0 %v1431
        %1502 = vmatprep.subr.bf16.mxu0 0
        %1503 = vmatpush1.bf16.msra.mxu0 %v1430
        %1504 = vmatprep.subr.bf16.mxu0 0
        %1505 = vmatpush1.bf16.msra.mxu0 %v1429
        %1506 = vmatprep.subr.bf16.mxu0 0
        %1507 = vmatpush1.bf16.msra.mxu0 %v1428
        %1508 = vmatprep.subr.bf16.mxu0 0
        %1509 = vmatpush2.bf16.msra.mxu0 %v1443
        %1510 = vmatprep.subr.bf16.mxu0 0
        %1511 = vmatpush2.bf16.msra.mxu0 %v1442
        %1512 = vmatprep.subr.bf16.mxu0 0
        %1513 = vmatpush2.bf16.msra.mxu0 %v1441
        %1514 = vmatprep.subr.bf16.mxu0 0
        %1515 = vmatpush2.bf16.msra.mxu0 %v1440
        %1516 = vmatprep.subr.bf16.mxu0 0
        %1517 = vmatpush2.bf16.msra.mxu0 %v1439
        %1518 = vmatprep.subr.bf16.mxu0 0
        %1519 = vmatpush2.bf16.msra.mxu0 %v1438
        %1520 = vmatprep.subr.bf16.mxu0 0
        %1521 = vmatpush2.bf16.msra.mxu0 %v1437
        %1522 = vmatprep.subr.bf16.mxu0 0
        %1523 = vmatpush2.bf16.msra.mxu0 %v1436
        %1524 = vmatprep.mubr.bf16.mxu0 %v1221
        %1525 = vmatmul.mubr.bf16.gmra.mxu0 %v1220
        %v1526 = vpop.f32.mrf.mxu0
        %v1527 = vadd.f32 0.0, %v1526
        %v1528 = vpop.f32.mrf.mxu0
        %v1529 = vpop.f32.mrf.mxu0
        %v1530 = vadd.f32 0.0, %v1529
        %v1531 = vpop.f32.mrf.mxu0
        %1532 = vmatprep.mubr.bf16.mxu0 %v1225
        %1533 = vmatmul.mubr.bf16.gmra.mxu0 %v1224
        %v1534 = vpop.f32.mrf.mxu0
        %v1535 = vadd.f32 0.0, %v1534
        %v1536 = vpop.f32.mrf.mxu0
        %v1537 = vpop.f32.mrf.mxu0
        %v1538 = vadd.f32 0.0, %v1537
        %v1539 = vpop.f32.mrf.mxu0
        %1540 = vmatprep.mubr.bf16.mxu0 %v1229
        %1541 = vmatmul.mubr.bf16.gmra.mxu0 %v1228
        %v1542 = vpop.f32.mrf.mxu0
        %v1543 = vadd.f32 0.0, %v1542
        %v1544 = vpop.f32.mrf.mxu0
        %v1545 = vpop.f32.mrf.mxu0
        %v1546 = vadd.f32 0.0, %v1545
        %v1547 = vpop.f32.mrf.mxu0
        %1548 = vmatprep.mubr.bf16.mxu0 %v1233
        %1549 = vmatmul.mubr.bf16.gmra.mxu0 %v1232
        %v1550 = vpop.f32.mrf.mxu0
        %v1551 = vadd.f32 0.0, %v1550
        %v1552 = vpop.f32.mrf.mxu0
        %v1553 = vpop.f32.mrf.mxu0
        %v1554 = vadd.f32 0.0, %v1553
        %v1555 = vpop.f32.mrf.mxu0
        %1556 = vdwg.mxu0
        %1557 = vmatprep.subr.bf16.mxu0 0
        %1558 = vmatpush1.bf16.msra.mxu0 %v1451
        %1559 = vmatprep.subr.bf16.mxu0 0
        %1560 = vmatpush1.bf16.msra.mxu0 %v1450
        %1561 = vmatprep.subr.bf16.mxu0 0
        %1562 = vmatpush1.bf16.msra.mxu0 %v1449
        %1563 = vmatprep.subr.bf16.mxu0 0
        %1564 = vmatpush1.bf16.msra.mxu0 %v1448
        %1565 = vmatprep.subr.bf16.mxu0 0
        %1566 = vmatpush1.bf16.msra.mxu0 %v1447
        %1567 = vmatprep.subr.bf16.mxu0 0
        %1568 = vmatpush1.bf16.msra.mxu0 %v1446
        %1569 = vmatprep.subr.bf16.mxu0 0
        %1570 = vmatpush1.bf16.msra.mxu0 %v1445
        %1571 = vmatprep.subr.bf16.mxu0 0
        %1572 = vmatpush1.bf16.msra.mxu0 %v1444
        %1573 = vmatprep.subr.bf16.mxu0 0
        %1574 = vmatpush2.bf16.msra.mxu0 %v1459
        %1575 = vmatprep.subr.bf16.mxu0 0
        %1576 = vmatpush2.bf16.msra.mxu0 %v1458
        %1577 = vmatprep.subr.bf16.mxu0 0
        %1578 = vmatpush2.bf16.msra.mxu0 %v1457
        %1579 = vmatprep.subr.bf16.mxu0 0
        %1580 = vmatpush2.bf16.msra.mxu0 %v1456
        %1581 = vmatprep.subr.bf16.mxu0 0
        %1582 = vmatpush2.bf16.msra.mxu0 %v1455
        %1583 = vmatprep.subr.bf16.mxu0 0
        %1584 = vmatpush2.bf16.msra.mxu0 %v1454
        %1585 = vmatprep.subr.bf16.mxu0 0
        %1586 = vmatpush2.bf16.msra.mxu0 %v1453
        %1587 = vmatprep.subr.bf16.mxu0 0
        %1588 = vmatpush2.bf16.msra.mxu0 %v1452
        %1589 = vmatprep.mubr.bf16.mxu0 %v1223
        %1590 = vmatmul.mubr.bf16.gmra.mxu0 %v1222
        %v1591 = vpop.f32.mrf.mxu0
        %v1592 = vadd.f32 %v1527, %v1591
        %v1593 = vpop.f32.mrf.mxu0
        %v1594 = vpop.f32.mrf.mxu0
        %v1595 = vadd.f32 %v1530, %v1594
        %v1596 = vpop.f32.mrf.mxu0
        %1597 = vmatprep.mubr.bf16.mxu0 %v1227
        %1598 = vmatmul.mubr.bf16.gmra.mxu0 %v1226
        %v1599 = vpop.f32.mrf.mxu0
        %v1600 = vadd.f32 %v1535, %v1599
        %v1601 = vpop.f32.mrf.mxu0
        %v1602 = vpop.f32.mrf.mxu0
        %v1603 = vadd.f32 %v1538, %v1602
        %v1604 = vpop.f32.mrf.mxu0
        %1605 = vmatprep.mubr.bf16.mxu0 %v1231
        %1606 = vmatmul.mubr.bf16.gmra.mxu0 %v1230
        %v1607 = vpop.f32.mrf.mxu0
        %v1608 = vadd.f32 %v1543, %v1607
        %v1609 = vpop.f32.mrf.mxu0
        %v1610 = vpop.f32.mrf.mxu0
        %v1611 = vadd.f32 %v1546, %v1610
        %v1612 = vpop.f32.mrf.mxu0
        %1613 = vmatprep.mubr.bf16.mxu0 %v1235
        %1614 = vmatmul.mubr.bf16.gmra.mxu0 %v1234
        %v1615 = vpop.f32.mrf.mxu0
        %v1616 = vadd.f32 %v1551, %v1615
        %v1617 = vpop.f32.mrf.mxu0
        %v1618 = vpop.f32.mrf.mxu0
        %v1619 = vadd.f32 %v1554, %v1618
        %v1620 = vpop.f32.mrf.mxu0
        %1621 = vdwg.mxu0
        %v1686 = vunpack.c.l.b16 %v764
        %v1687 = vunpack.c.l.b16 %v765
        %v1688 = vunpack.c.l.b16 %v766
        %v1689 = vunpack.c.l.b16 %v767
        %v1690 = vunpack.c.l.b16 %v768
        %v1691 = vunpack.c.l.b16 %v769
        %v1692 = vunpack.c.l.b16 %v770
        %v1693 = vunpack.c.l.b16 %v771
        %v1694 = vunpack.c.l.b16 %v772
        %v1695 = vunpack.c.l.b16 %v773
        %v1696 = vunpack.c.l.b16 %v774
        %v1697 = vunpack.c.l.b16 %v775
        %v1698 = vunpack.c.l.b16 %v776
        %v1699 = vunpack.c.l.b16 %v777
        %v1700 = vunpack.c.l.b16 %v778
        %v1701 = vunpack.c.l.b16 %v779
        %v1702 = vunpack.c.l.b16 %v780
        %v1703 = vunpack.c.l.b16 %v781
        %v1704 = vunpack.c.l.b16 %v782
        %v1705 = vunpack.c.l.b16 %v783
        %v1706 = vunpack.c.l.b16 %v784
        %v1707 = vunpack.c.l.b16 %v785
        %v1708 = vunpack.c.l.b16 %v786
        %v1709 = vunpack.c.l.b16 %v787
        %v1710 = vunpack.c.l.b16 %v788
        %v1711 = vunpack.c.l.b16 %v789
        %v1712 = vunpack.c.l.b16 %v790
        %v1713 = vunpack.c.l.b16 %v791
        %v1714 = vunpack.c.l.b16 %v792
        %v1715 = vunpack.c.l.b16 %v793
        %v1716 = vunpack.c.l.b16 %v794
        %v1717 = vunpack.c.l.b16 %v795
        %v1718 = vunpack.c.l.b16 %v796
        %v1719 = vunpack.c.l.b16 %v797
        %v1720 = vunpack.c.l.b16 %v798
        %v1721 = vunpack.c.l.b16 %v799
        %v1722 = vunpack.c.l.b16 %v800
        %v1723 = vunpack.c.l.b16 %v801
        %v1724 = vunpack.c.l.b16 %v802
        %v1725 = vunpack.c.l.b16 %v803
        %v1726 = vunpack.c.l.b16 %v804
        %v1727 = vunpack.c.l.b16 %v805
        %v1728 = vunpack.c.l.b16 %v806
        %v1729 = vunpack.c.l.b16 %v807
        %v1730 = vunpack.c.l.b16 %v808
        %v1731 = vunpack.c.l.b16 %v809
        %v1732 = vunpack.c.l.b16 %v810
        %v1733 = vunpack.c.l.b16 %v811
        %v1734 = vunpack.c.l.b16 %v812
        %v1735 = vunpack.c.l.b16 %v813
        %v1736 = vunpack.c.l.b16 %v814
        %v1737 = vunpack.c.l.b16 %v815
        %v1738 = vunpack.c.l.b16 %v816
        %v1739 = vunpack.c.l.b16 %v817
        %v1740 = vunpack.c.l.b16 %v818
        %v1741 = vunpack.c.l.b16 %v819
        %v1742 = vunpack.c.l.b16 %v820
        %v1743 = vunpack.c.l.b16 %v821
        %v1744 = vunpack.c.l.b16 %v822
        %v1745 = vunpack.c.l.b16 %v823
        %v1746 = vunpack.c.l.b16 %v824
        %v1747 = vunpack.c.l.b16 %v825
        %v1748 = vunpack.c.l.b16 %v826
        %v1749 = vunpack.c.l.b16 %v827
        %v1750 = vpack.c.b16 %v1687, %v1686
        %v1751 = vpack.c.b16 %v1689, %v1688
        %v1752 = vpack.c.b16 %v1691, %v1690
        %v1753 = vpack.c.b16 %v1693, %v1692
        %v1754 = vpack.c.b16 %v1695, %v1694
        %v1755 = vpack.c.b16 %v1697, %v1696
        %v1756 = vpack.c.b16 %v1699, %v1698
        %v1757 = vpack.c.b16 %v1701, %v1700
        %v1758 = vpack.c.b16 %v1703, %v1702
        %v1759 = vpack.c.b16 %v1705, %v1704
        %v1760 = vpack.c.b16 %v1707, %v1706
        %v1761 = vpack.c.b16 %v1709, %v1708
        %v1762 = vpack.c.b16 %v1711, %v1710
        %v1763 = vpack.c.b16 %v1713, %v1712
        %v1764 = vpack.c.b16 %v1715, %v1714
        %v1765 = vpack.c.b16 %v1717, %v1716
        %v1766 = vpack.c.b16 %v1719, %v1718
        %v1767 = vpack.c.b16 %v1721, %v1720
        %v1768 = vpack.c.b16 %v1723, %v1722
        %v1769 = vpack.c.b16 %v1725, %v1724
        %v1770 = vpack.c.b16 %v1727, %v1726
        %v1771 = vpack.c.b16 %v1729, %v1728
        %v1772 = vpack.c.b16 %v1731, %v1730
        %v1773 = vpack.c.b16 %v1733, %v1732
        %v1774 = vpack.c.b16 %v1735, %v1734
        %v1775 = vpack.c.b16 %v1737, %v1736
        %v1776 = vpack.c.b16 %v1739, %v1738
        %v1777 = vpack.c.b16 %v1741, %v1740
        %v1778 = vpack.c.b16 %v1743, %v1742
        %v1779 = vpack.c.b16 %v1745, %v1744
        %v1780 = vpack.c.b16 %v1747, %v1746
        %v1781 = vpack.c.b16 %v1749, %v1748
        %1814 = vmatprep.subr.bf16.mxu0 0
        %1815 = vmatpush1.bf16.msra.mxu0 %v1757
        %1816 = vmatprep.subr.bf16.mxu0 0
        %1817 = vmatpush1.bf16.msra.mxu0 %v1756
        %1818 = vmatprep.subr.bf16.mxu0 0
        %1819 = vmatpush1.bf16.msra.mxu0 %v1755
        %1820 = vmatprep.subr.bf16.mxu0 0
        %1821 = vmatpush1.bf16.msra.mxu0 %v1754
        %1822 = vmatprep.subr.bf16.mxu0 0
        %1823 = vmatpush1.bf16.msra.mxu0 %v1753
        %1824 = vmatprep.subr.bf16.mxu0 0
        %1825 = vmatpush1.bf16.msra.mxu0 %v1752
        %1826 = vmatprep.subr.bf16.mxu0 0
        %1827 = vmatpush1.bf16.msra.mxu0 %v1751
        %1828 = vmatprep.subr.bf16.mxu0 0
        %1829 = vmatpush1.bf16.msra.mxu0 %v1750
        %1830 = vmatprep.subr.bf16.mxu0 0
        %1831 = vmatpush2.bf16.msra.mxu0 %v1765
        %1832 = vmatprep.subr.bf16.mxu0 0
        %1833 = vmatpush2.bf16.msra.mxu0 %v1764
        %1834 = vmatprep.subr.bf16.mxu0 0
        %1835 = vmatpush2.bf16.msra.mxu0 %v1763
        %1836 = vmatprep.subr.bf16.mxu0 0
        %1837 = vmatpush2.bf16.msra.mxu0 %v1762
        %1838 = vmatprep.subr.bf16.mxu0 0
        %1839 = vmatpush2.bf16.msra.mxu0 %v1761
        %1840 = vmatprep.subr.bf16.mxu0 0
        %1841 = vmatpush2.bf16.msra.mxu0 %v1760
        %1842 = vmatprep.subr.bf16.mxu0 0
        %1843 = vmatpush2.bf16.msra.mxu0 %v1759
        %1844 = vmatprep.subr.bf16.mxu0 0
        %1845 = vmatpush2.bf16.msra.mxu0 %v1758
        %1846 = vmatprep.mubr.bf16.mxu0 %v749
        %1847 = vmatmul.mubr.bf16.gmra.mxu0 %v748
        %v1848 = vpop.f32.mrf.mxu0
        %v1849 = vadd.f32 %v1592, %v1848
        %v1850 = vpop.f32.mrf.mxu0
        %v1851 = vpop.f32.mrf.mxu0
        %v1852 = vadd.f32 %v1595, %v1851
        %v1853 = vpop.f32.mrf.mxu0
        %1854 = vmatprep.mubr.bf16.mxu0 %v753
        %1855 = vmatmul.mubr.bf16.gmra.mxu0 %v752
        %v1856 = vpop.f32.mrf.mxu0
        %v1857 = vadd.f32 %v1600, %v1856
        %v1858 = vpop.f32.mrf.mxu0
        %v1859 = vpop.f32.mrf.mxu0
        %v1860 = vadd.f32 %v1603, %v1859
        %v1861 = vpop.f32.mrf.mxu0
        %1862 = vmatprep.mubr.bf16.mxu0 %v757
        %1863 = vmatmul.mubr.bf16.gmra.mxu0 %v756
        %v1864 = vpop.f32.mrf.mxu0
        %v1865 = vadd.f32 %v1608, %v1864
        %v1866 = vpop.f32.mrf.mxu0
        %v1867 = vpop.f32.mrf.mxu0
        %v1868 = vadd.f32 %v1611, %v1867
        %v1869 = vpop.f32.mrf.mxu0
        %1870 = vmatprep.mubr.bf16.mxu0 %v761
        %1871 = vmatmul.mubr.bf16.gmra.mxu0 %v760
        %v1872 = vpop.f32.mrf.mxu0
        %v1873 = vadd.f32 %v1616, %v1872
        %v1874 = vpop.f32.mrf.mxu0
        %v1875 = vpop.f32.mrf.mxu0
        %v1876 = vadd.f32 %v1619, %v1875
        %v1877 = vpop.f32.mrf.mxu0
        %1878 = vdwg.mxu0
        %1879 = vmatprep.subr.bf16.mxu0 0
        %1880 = vmatpush1.bf16.msra.mxu0 %v1773
        %1881 = vmatprep.subr.bf16.mxu0 0
        %1882 = vmatpush1.bf16.msra.mxu0 %v1772
        %1883 = vmatprep.subr.bf16.mxu0 0
        %1884 = vmatpush1.bf16.msra.mxu0 %v1771
        %1885 = vmatprep.subr.bf16.mxu0 0
        %1886 = vmatpush1.bf16.msra.mxu0 %v1770
        %1887 = vmatprep.subr.bf16.mxu0 0
        %1888 = vmatpush1.bf16.msra.mxu0 %v1769
        %1889 = vmatprep.subr.bf16.mxu0 0
        %1890 = vmatpush1.bf16.msra.mxu0 %v1768
        %1891 = vmatprep.subr.bf16.mxu0 0
        %1892 = vmatpush1.bf16.msra.mxu0 %v1767
        %1893 = vmatprep.subr.bf16.mxu0 0
        %1894 = vmatpush1.bf16.msra.mxu0 %v1766
        %1895 = vmatprep.subr.bf16.mxu0 0
        %1896 = vmatpush2.bf16.msra.mxu0 %v1781
        %1897 = vmatprep.subr.bf16.mxu0 0
        %1898 = vmatpush2.bf16.msra.mxu0 %v1780
        %1899 = vmatprep.subr.bf16.mxu0 0
        %1900 = vmatpush2.bf16.msra.mxu0 %v1779
        %1901 = vmatprep.subr.bf16.mxu0 0
        %1902 = vmatpush2.bf16.msra.mxu0 %v1778
        %1903 = vmatprep.subr.bf16.mxu0 0
        %1904 = vmatpush2.bf16.msra.mxu0 %v1777
        %1905 = vmatprep.subr.bf16.mxu0 0
        %1906 = vmatpush2.bf16.msra.mxu0 %v1776
        %1907 = vmatprep.subr.bf16.mxu0 0
        %1908 = vmatpush2.bf16.msra.mxu0 %v1775
        %1909 = vmatprep.subr.bf16.mxu0 0
        %1910 = vmatpush2.bf16.msra.mxu0 %v1774
        %1911 = vmatprep.mubr.bf16.mxu0 %v751
        %1912 = vmatmul.mubr.bf16.gmra.mxu0 %v750
        %v1913 = vpop.f32.mrf.mxu0
        %v1914 = vadd.f32 %v1849, %v1913
        %v1915 = vpop.f32.mrf.mxu0
        %v1916 = vpop.f32.mrf.mxu0
        %v1917 = vadd.f32 %v1852, %v1916
        %v1918 = vpop.f32.mrf.mxu0
        %1919 = vmatprep.mubr.bf16.mxu0 %v755
        %1920 = vmatmul.mubr.bf16.gmra.mxu0 %v754
        %v1921 = vpop.f32.mrf.mxu0
        %v1922 = vadd.f32 %v1857, %v1921
        %v1923 = vpop.f32.mrf.mxu0
        %v1924 = vpop.f32.mrf.mxu0
        %v1925 = vadd.f32 %v1860, %v1924
        %v1926 = vpop.f32.mrf.mxu0
        %1927 = vmatprep.mubr.bf16.mxu0 %v759
        %1928 = vmatmul.mubr.bf16.gmra.mxu0 %v758
        %v1929 = vpop.f32.mrf.mxu0
        %v1930 = vadd.f32 %v1865, %v1929
        %v1931 = vpop.f32.mrf.mxu0
        %v1932 = vpop.f32.mrf.mxu0
        %v1933 = vadd.f32 %v1868, %v1932
        %v1934 = vpop.f32.mrf.mxu0
        %1935 = vmatprep.mubr.bf16.mxu0 %v763
        %1936 = vmatmul.mubr.bf16.gmra.mxu0 %v762
        %v1937 = vpop.f32.mrf.mxu0
        %v1938 = vadd.f32 %v1873, %v1937
        %v1939 = vpop.f32.mrf.mxu0
        %v1940 = vpop.f32.mrf.mxu0
        %v1941 = vadd.f32 %v1876, %v1940
        %v1942 = vpop.f32.mrf.mxu0
        %1943 = vdwg.mxu0
        %v1944 = vld [vmem:[%s4] sm:$0x1]
        %v1946 = vlaneseq
        %v1947 = vshrl.u32 %v1946, 7
        %v1948 = vsub.s32 0, %v1947
        %v1949 = vrot.slane %v1944, %v1948
        %v1951 = vadd.f32 %v1914, %v1949
        %v1952 = vadd.f32 %v1917, %v1949
        %v1953 = vadd.f32 %v1922, %v1949
        %v1954 = vadd.f32 %v1925, %v1949
        %v1955 = vadd.f32 %v1930, %v1949
        %v1956 = vadd.f32 %v1933, %v1949
        %v1957 = vadd.f32 %v1938, %v1949
        %v1958 = vadd.f32 %v1941, %v1949
        %1959 = vadd.xlane.f32.xlu0 %v1951
        %v1960 = vpop.xlane.xlu0 %1959
        %1961 = vadd.xlane.f32.xlu0 %v1952
        %v1962 = vpop.xlane.xlu0 %1961
        %1963 = vadd.xlane.f32.xlu0 %v1953
        %v1964 = vpop.xlane.xlu0 %1963
        %1965 = vadd.xlane.f32.xlu0 %v1954
        %v1966 = vpop.xlane.xlu0 %1965
        %1967 = vadd.xlane.f32.xlu0 %v1955
        %v1968 = vpop.xlane.xlu0 %1967
        %1969 = vadd.xlane.f32.xlu0 %v1956
        %v1970 = vpop.xlane.xlu0 %1969
        %1971 = vadd.xlane.f32.xlu0 %v1957
        %v1972 = vpop.xlane.xlu0 %1971
        %1973 = vadd.xlane.f32.xlu0 %v1958
        %v1974 = vpop.xlane.xlu0 %1973
        %v1975 = vrcp.pop 128.0
        %v1976 = vmul.f32 %v1960, %v1975
        %v1977 = vmul.f32 %v1962, %v1975
        %v1978 = vmul.f32 %v1964, %v1975
        %v1979 = vmul.f32 %v1966, %v1975
        %v1980 = vmul.f32 %v1968, %v1975
        %v1981 = vmul.f32 %v1970, %v1975
        %v1982 = vmul.f32 %v1972, %v1975
        %v1983 = vmul.f32 %v1974, %v1975
        %v1984 = vsub.f32 %v1951, %v1976
        %v1985 = vsub.f32 %v1952, %v1977
        %v1986 = vsub.f32 %v1953, %v1978
        %v1987 = vsub.f32 %v1954, %v1979
        %v1988 = vsub.f32 %v1955, %v1980
        %v1989 = vsub.f32 %v1956, %v1981
        %v1990 = vsub.f32 %v1957, %v1982
        %v1991 = vsub.f32 %v1958, %v1983
        %v1992 = vmul.f32 %v1984, %v1984
        %v1993 = vmul.f32 %v1985, %v1985
        %v1994 = vmul.f32 %v1986, %v1986
        %v1995 = vmul.f32 %v1987, %v1987
        %v1996 = vmul.f32 %v1988, %v1988
        %v1997 = vmul.f32 %v1989, %v1989
        %v1998 = vmul.f32 %v1990, %v1990
        %v1999 = vmul.f32 %v1991, %v1991
        %2000 = vadd.xlane.f32.xlu0 %v1992
        %v2001 = vpop.xlane.xlu0 %2000
        %2002 = vadd.xlane.f32.xlu0 %v1993
        %v2003 = vpop.xlane.xlu0 %2002
        %2004 = vadd.xlane.f32.xlu0 %v1994
        %v2005 = vpop.xlane.xlu0 %2004
        %2006 = vadd.xlane.f32.xlu0 %v1995
        %v2007 = vpop.xlane.xlu0 %2006
        %2008 = vadd.xlane.f32.xlu0 %v1996
        %v2009 = vpop.xlane.xlu0 %2008
        %2010 = vadd.xlane.f32.xlu0 %v1997
        %v2011 = vpop.xlane.xlu0 %2010
        %2012 = vadd.xlane.f32.xlu0 %v1998
        %v2013 = vpop.xlane.xlu0 %2012
        %2014 = vadd.xlane.f32.xlu0 %v1999
        %v2015 = vpop.xlane.xlu0 %2014
        %v2016 = vmul.f32 %v2001, %v1975
        %v2017 = vmul.f32 %v2003, %v1975
        %v2018 = vmul.f32 %v2005, %v1975
        %v2019 = vmul.f32 %v2007, %v1975
        %v2020 = vmul.f32 %v2009, %v1975
        %v2021 = vmul.f32 %v2011, %v1975
        %v2022 = vmul.f32 %v2013, %v1975
        %v2023 = vmul.f32 %v2015, %v1975
        %v2024 = vadd.f32 %v2016, 1e-05
        %v2025 = vadd.f32 %v2017, 1e-05
        %v2026 = vadd.f32 %v2018, 1e-05
        %v2027 = vadd.f32 %v2019, 1e-05
        %v2028 = vadd.f32 %v2020, 1e-05
        %v2029 = vadd.f32 %v2021, 1e-05
        %v2030 = vadd.f32 %v2022, 1e-05
        %v2031 = vadd.f32 %v2023, 1e-05
        %v2032 = vrsqrt.pop %v2024
        %v2033 = vrsqrt.pop %v2025
        %v2034 = vrsqrt.pop %v2026
        %v2035 = vrsqrt.pop %v2027
        %v2036 = vrsqrt.pop %v2028
        %v2037 = vrsqrt.pop %v2029
        %v2038 = vrsqrt.pop %v2030
        %v2039 = vrsqrt.pop %v2031
        %v2040 = vmul.f32 %v1984, %v2032
        %v2041 = vmul.f32 %v1985, %v2033
        %v2042 = vmul.f32 %v1986, %v2034
        %v2043 = vmul.f32 %v1987, %v2035
        %v2044 = vmul.f32 %v1988, %v2036
        %v2045 = vmul.f32 %v1989, %v2037
        %v2046 = vmul.f32 %v1990, %v2038
        %v2047 = vmul.f32 %v1991, %v2039
        %v2049 = vlaneseq
        %v2050 = vshrl.u32 %v2049, 7
        %v2051 = vsub.s32 0, %v2050
        %v2052 = vrot.slane %v350, %v2051
        %v2054 = vmul.f32 %v2040, %v2052
        %v2055 = vmul.f32 %v2041, %v2052
        %v2056 = vmul.f32 %v2042, %v2052
        %v2057 = vmul.f32 %v2043, %v2052
        %v2058 = vmul.f32 %v2044, %v2052
        %v2059 = vmul.f32 %v2045, %v2052
        %v2060 = vmul.f32 %v2046, %v2052
        %v2061 = vmul.f32 %v2047, %v2052
        %v2063 = vlaneseq
        %v2064 = vshrl.u32 %v2063, 7
        %v2065 = vsub.s32 0, %v2064
        %v2066 = vrot.slane %v351, %v2065
        %v2068 = vadd.f32 %v2054, %v2066
        %v2069 = vadd.f32 %v2055, %v2066
        %v2070 = vadd.f32 %v2056, %v2066
        %v2071 = vadd.f32 %v2057, %v2066
        %v2072 = vadd.f32 %v2058, %v2066
        %v2073 = vadd.f32 %v2059, %v2066
        %v2074 = vadd.f32 %v2060, %v2066
        %v2075 = vadd.f32 %v2061, %v2066
        %v2076 = vadd.f32 %v342, %v2068
        %v2077 = vadd.f32 %v343, %v2069
        %v2078 = vadd.f32 %v344, %v2070
        %v2079 = vadd.f32 %v345, %v2071
        %v2080 = vadd.f32 %v346, %v2072
        %v2081 = vadd.f32 %v347, %v2073
        %v2082 = vadd.f32 %v348, %v2074
        %v2083 = vadd.f32 %v349, %v2075
        %2084 = vst [vmem:[%s338] sm:$0xff] %v2076
        %2085 = vst [vmem:[%s338 + $0x8] sm:$0xff] %v2077
        %2086 = vst [vmem:[%s338 + $0x10] sm:$0xff] %v2078
        %2087 = vst [vmem:[%s338 + $0x18] sm:$0xff] %v2079
        %2088 = vst [vmem:[%s338 + $0x20] sm:$0xff] %v2080
        %2089 = vst [vmem:[%s338 + $0x28] sm:$0xff] %v2081
        %2090 = vst [vmem:[%s338 + $0x30] sm:$0xff] %v2082
        %2091 = vst [vmem:[%s338 + $0x38] sm:$0xff] %v2083
        %s2092 = sand.u32 %s186, 1
        %s2093 = scalar_lea.sflag [#allocation4], %s2092
        %s2094 = sand.u32 %s186, 1
        %s2095 = smul.addr %s2094, 64
        %s2096 = scalar_lea.vmem [#allocation10], %s2095
        // Predicated region
        $region65: #{tpu_custom_call.1} parent=47 // pred_check
          %p2097 = pneg %p196
        $region66: #{tpu_custom_call.1} parent=47 // pred_check_branch
          %2099 = sbr.rel (%p2097) target = $region68
        $region67: #{tpu_custom_call.1} parent=47 // pred_region
          %s2100 = smul.u32 8, %s26
          %s2102 = ssub.s32 1024, 1024
          %2103 = vsyncadd %s2093, %s2102
          %s2104 = smul.addr %s2100, 128
          %s2105 = scalar_lea.hbm %s7, %s2104
          %s2106 = sshll.u32 %s2096, 4
          %s2107 = int_to_ptr.vmem [resolvable:$true] %s2106
          %2112 = dma.vmem_to_hbm [thread:$0]  %s2107, 1024, %s2105, %s2093, 128, 128, 8
        $region68: #{tpu_custom_call.1} parent=47 // pred_fallthru
          _
      $region48: #{tpu_custom_call.1} parent=5 // pred_fallthru
        _
      %p2113 = scmp.le.s32.totalorder 2, %s21
      // Predicated region
      $region69: #{tpu_custom_call.1} parent=5 // pred_check
        %p2114 = pneg %p2113
      $region70: #{tpu_custom_call.1} parent=5 // pred_check_branch
        %2116 = sbr.rel (%p2114) target = $region72
      $region71: #{tpu_custom_call.1} parent=5 // pred_region
        %s2117 = ssub.s32 %s21, 2
        // Predicated region
        $region73: #{tpu_custom_call.1} parent=71 // pred_check
          %p2118 = pneg %p202
        $region74: #{tpu_custom_call.1} parent=71 // pred_check_branch
          %2120 = sbr.rel (%p2118) target = $region76
        $region75: #{tpu_custom_call.1} parent=71 // pred_region
          %s2121 = sand.u32 %s187, 1
          %s2122 = scalar_lea.sflag [#allocation4], %s2121
          %s2123 = sand.u32 %s187, 1
          %s2124 = smul.addr %s2123, 64
          %s2125 = scalar_lea.vmem [#allocation10], %s2124
          %2126 = dma.done %s2122, 1024
        $region76: #{tpu_custom_call.1} parent=71 // pred_fallthru
          _
      $region72: #{tpu_custom_call.1} parent=5 // pred_fallthru
        _
    $region6: #{tpu_custom_call.1} parent=1 // loop_footer
      %s25 = sadd.s32 1, %s21
    $region7: #{tpu_custom_call.1} parent=1 // loop_footer_branch
      %20 = sbr.rel target = $region3
    $region8: #{tpu_custom_call.1} parent=1 // loop_exit
      _
    %2127 = vsyncpa [#allocation3], 1
    %s2128 = scalar_lea.sflag [#allocation3], 1
    %2129 = vsyncpa %s2128, 1
    %2130 = vsyncpa [#allocation6], 1
    %2131 = vsyncpa [#allocation9], 1
    %2132 = vsyncpa [#allocation4], 1
    %s2133 = scalar_lea.sflag [#allocation4], 1
    %2134 = vsyncpa %s2133, 1

// kernel: tpu_custom_call.1
$region0: #{tpu_custom_call.1}
  #allocation0 [shape = 'u32[]', space=smem, size = 0x4, offset = 0x4, fixed_abs, tag = 'smem constant byte address 0x4 - core index']
  #allocation1 [shape = 'u32[144,128]{1,0:T(1,128)}', space=vmem, size = 0x12000, scoped, tag = 'internal scratch']
  %s0 = inlined_call_operand.hbm [shape: f32[512,128], index: 0, kind: input, shape index: {}]
  %s1 = inlined_call_operand.hbm [shape: bf16[128,1024], index: 1, kind: input, shape index: {}]
  %s2 = inlined_call_operand.hbm [shape: f32[1,1024], index: 2, kind: input, shape index: {}]
  %s3 = inlined_call_operand.hbm [shape: bf16[1024,128], index: 3, kind: input, shape index: {}]
  %s4 = inlined_call_operand.vmem [shape: f32[1,128], index: 4, kind: input, shape index: {}]
  %s5 = inlined_call_operand.vmem [shape: f32[1,128], index: 5, kind: input, shape index: {}]
  %s6 = inlined_call_operand.vmem [shape: f32[1,128], index: 6, kind: input, shape index: {}]
  %s7 = inlined_call_operand.hbm [shape: f32[512,128], index: 7, kind: output, shape index: {}]
  %s8 = sld [smem:[#allocation0]]
  $region77: #{tpu_custom_call.1} parent=0
    _
  %s10 = ssub.s32 1, %s8
  %s11 = scalar_select 0, %s10, %s8
  $region1: #{tpu_custom_call.1} parent=0
    #allocation2 [shape = 'u8[65536]{0}', space=vmem, size = 0x10000, scoped, tag = 'input window, operand 0']
    #allocation3 [shape = 's32[2]{0}', space=sflag, size = 0x8, scoped, tag = 'scoped memory for tpu_custom_call.1']
    #allocation4 [shape = 's32[2]{0}', space=sflag, size = 0x8, scoped, tag = 'scoped memory for tpu_custom_call.1']
    #allocation5 [shape = 'u8[262144]{0}', space=vmem, size = 0x40000, scoped, tag = 'input window, operand 1, single buffered']
    #allocation6 [shape = 's32[1]{0}', space=sflag, size = 0x4, scoped, tag = 'scoped memory for tpu_custom_call.1']
    #allocation7 [shape = 'u8[4096]{0}', space=vmem, size = 0x1000, scoped, tag = 'input window, operand 2, single buffered']
    #allocation8 [shape = 'u8[262144]{0}', space=vmem, size = 0x40000, scoped, tag = 'input window, operand 3, single buffered']
    #allocation9 [shape = 's32[1]{0}', space=sflag, size = 0x4, scoped, tag = 'scoped memory for tpu_custom_call.1']
    #allocation10 [shape = 'u8[65536]{0}', space=vmem, size = 0x10000, scoped, tag = 'output window, operand 0']
    %12 = vsyncpa [#allocation3], 0
    %s13 = scalar_lea.sflag [#allocation3], 1
    %14 = vsyncpa %s13, 0
    %15 = vsyncpa [#allocation6], 0
    %16 = vsyncpa [#allocation9], 0
    %17 = vsyncpa [#allocation4], 0
    %s18 = scalar_lea.sflag [#allocation4], 1
    %19 = vsyncpa %s18, 0
    loop: start=0, step=1, limit=10
    $region2: #{tpu_custom_call.1} parent=1 // loop_pre_header
      _
    $region3: #{tpu_custom_call.1} parent=1 // loop_header
      %s21 = sphi 0, %s25
      %p22 = scmp.ge.s32.totalorder %s21, 10
      %s31 = sphi 0, %s33
      %s34 = sphi 0, %s31
      %s35 = sphi 0, %s34
      %s51 = sphi 0, %s35
      %s55 = sphi 0, %s55
      %s57 = sphi 0, %s55
      %s58 = sphi 0, %s57
      %s72 = sphi 0, %s58
      %s76 = sphi 0, %s76
      %s78 = sphi 0, %s76
      %s79 = sphi 0, %s78
      %s93 = sphi 0, %s79
      %s97 = sphi 0, %s97
      %s99 = sphi 0, %s97
      %s100 = sphi 0, %s99
      %s114 = sphi 0, %s100
      %s118 = sphi 0, %s118
      %s120 = sphi 0, %s118
      %s121 = sphi 0, %s120
      %s135 = sphi 0, %s121
      %s139 = sphi 0, %s139
      %s141 = sphi 0, %s139
      %s142 = sphi 0, %s141
      %s156 = sphi 0, %s142
      %s160 = sphi 0, %s160
      %s162 = sphi 0, %s160
      %s163 = sphi 0, %s162
      %s177 = sphi 0, %s163
      %s183 = sphi 0, %s185
      %s186 = sphi 0, %s183
      %s187 = sphi 0, %s186
      %s203 = sphi 0, %s187
    $region4: #{tpu_custom_call.1} parent=1 // loop_header_branch
      %24 = sbr.rel (%p22) target = $region8
    $region5: #{tpu_custom_call.1} parent=1 // loop_body
      %s26 = ssub.s32 %s21, 1
      %s27 = ssub.s32 %s21, 2
      %s28 = sadd.s32 %s21, 1
      %s29 = ssub.s32 %s21, %s28
      %p30 = scmp.eq.s32.totalorder %s29, 0
      %s32 = sadd.s32 %s31, 1
      %s33 = scalar_select %p30, %s31, %s32
      %p36 = pneg %p30
      %p37 = scmp.eq.s32.totalorder %s21, 7
      %p38 = por %p36, %p37
      %p39 = scmp.ne.s32.totalorder %s31, %s34
      %p40 = scmp.eq.s32.totalorder %s21, 0
      %p41 = por %p39, %p40
      %p42 = scmp.ne.s32.totalorder %s31, %s34
      %p43 = scmp.eq.s32.totalorder %s26, 7
      %p44 = por %p42, %p43
      %p45 = scmp.ne.s32.totalorder %s34, %s35
      %p46 = scmp.eq.s32.totalorder %s26, 0
      %p47 = por %p45, %p46
      %p48 = scmp.ne.s32.totalorder %s34, %s35
      %p49 = scmp.eq.s32.totalorder %s27, 7
      %p50 = por %p48, %p49
      %p52 = scmp.ne.s32.totalorder %s35, %s51
      %p53 = scmp.eq.s32.totalorder %s27, 0
      %p54 = por %p52, %p53
      %s56 = sadd.s32 %s55, 1
      %p59 = scmp.eq.s32.totalorder %s21, 7
      %p60 = scmp.ne.s32.totalorder %s55, %s57
      %p61 = scmp.eq.s32.totalorder %s21, 0
      %p62 = por %p60, %p61
      %p63 = scmp.ne.s32.totalorder %s55, %s57
      %p64 = scmp.eq.s32.totalorder %s26, 7
      %p65 = por %p63, %p64
      %p66 = scmp.ne.s32.totalorder %s57, %s58
      %p67 = scmp.eq.s32.totalorder %s26, 0
      %p68 = por %p66, %p67
      %p69 = scmp.ne.s32.totalorder %s57, %s58
      %p70 = scmp.eq.s32.totalorder %s27, 7
      %p71 = por %p69, %p70
      %p73 = scmp.ne.s32.totalorder %s58, %s72
      %p74 = scmp.eq.s32.totalorder %s27, 0
      %p75 = por %p73, %p74
      %s77 = sadd.s32 %s76, 1
      %p80 = scmp.eq.s32.totalorder %s21, 7
      %p81 = scmp.ne.s32.totalorder %s76, %s78
      %p82 = scmp.eq.s32.totalorder %s21, 0
      %p83 = por %p81, %p82
      %p84 = scmp.ne.s32.totalorder %s76, %s78
      %p85 = scmp.eq.s32.totalorder %s26, 7
      %p86 = por %p84, %p85
      %p87 = scmp.ne.s32.totalorder %s78, %s79
      %p88 = scmp.eq.s32.totalorder %s26, 0
      %p89 = por %p87, %p88
      %p90 = scmp.ne.s32.totalorder %s78, %s79
      %p91 = scmp.eq.s32.totalorder %s27, 7
      %p92 = por %p90, %p91
      %p94 = scmp.ne.s32.totalorder %s79, %s93
      %p95 = scmp.eq.s32.totalorder %s27, 0
      %p96 = por %p94, %p95
      %s98 = sadd.s32 %s97, 1
      %p101 = scmp.eq.s32.totalorder %s21, 7
      %p102 = scmp.ne.s32.totalorder %s97, %s99
      %p103 = scmp.eq.s32.totalorder %s21, 0
      %p104 = por %p102, %p103
      %p105 = scmp.ne.s32.totalorder %s97, %s99
      %p106 = scmp.eq.s32.totalorder %s26, 7
      %p107 = por %p105, %p106
      %p108 = scmp.ne.s32.totalorder %s99, %s100
      %p109 = scmp.eq.s32.totalorder %s26, 0
      %p110 = por %p108, %p109
      %p111 = scmp.ne.s32.totalorder %s99, %s100
      %p112 = scmp.eq.s32.totalorder %s27, 7
      %p113 = por %p111, %p112
      %p115 = scmp.ne.s32.totalorder %s100, %s114
      %p116 = scmp.eq.s32.totalorder %s27, 0
      %p117 = por %p115, %p116
      %s119 = sadd.s32 %s118, 1
      %p122 = scmp.eq.s32.totalorder %s21, 7
      %p123 = scmp.ne.s32.totalorder %s118, %s120
      %p124 = scmp.eq.s32.totalorder %s21, 0
      %p125 = por %p123, %p124
      %p126 = scmp.ne.s32.totalorder %s118, %s120
      %p127 = scmp.eq.s32.totalorder %s26, 7
      %p128 = por %p126, %p127
      %p129 = scmp.ne.s32.totalorder %s120, %s121
      %p130 = scmp.eq.s32.totalorder %s26, 0
      %p131 = por %p129, %p130
      %p132 = scmp.ne.s32.totalorder %s120, %s121
      %p133 = scmp.eq.s32.totalorder %s27, 7
      %p134 = por %p132, %p133
      %p136 = scmp.ne.s32.totalorder %s121, %s135
      %p137 = scmp.eq.s32.totalorder %s27, 0
      %p138 = por %p136, %p137
      %s140 = sadd.s32 %s139, 1
      %p143 = scmp.eq.s32.totalorder %s21, 7
      %p144 = scmp.ne.s32.totalorder %s139, %s141
      %p145 = scmp.eq.s32.totalorder %s21, 0
      %p146 = por %p144, %p145
      %p147 = scmp.ne.s32.totalorder %s139, %s141
      %p148 = scmp.eq.s32.totalorder %s26, 7
      %p149 = por %p147, %p148
      %p150 = scmp.ne.s32.totalorder %s141, %s142
      %p151 = scmp.eq.s32.totalorder %s26, 0
      %p152 = por %p150, %p151
      %p153 = scmp.ne.s32.totalorder %s141, %s142
      %p154 = scmp.eq.s32.totalorder %s27, 7
      %p155 = por %p153, %p154
      %p157 = scmp.ne.s32.totalorder %s142, %s156
      %p158 = scmp.eq.s32.totalorder %s27, 0
      %p159 = por %p157, %p158
      %s161 = sadd.s32 %s160, 1
      %p164 = scmp.eq.s32.totalorder %s21, 7
      %p165 = scmp.ne.s32.totalorder %s160, %s162
      %p166 = scmp.eq.s32.totalorder %s21, 0
      %p167 = por %p165, %p166
      %p168 = scmp.ne.s32.totalorder %s160, %s162
      %p169 = scmp.eq.s32.totalorder %s26, 7
      %p170 = por %p168, %p169
      %p171 = scmp.ne.s32.totalorder %s162, %s163
      %p172 = scmp.eq.s32.totalorder %s26, 0
      %p173 = por %p171, %p172
      %p174 = scmp.ne.s32.totalorder %s162, %s163
      %p175 = scmp.eq.s32.totalorder %s27, 7
      %p176 = por %p174, %p175
      %p178 = scmp.ne.s32.totalorder %s163, %s177
      %p179 = scmp.eq.s32.totalorder %s27, 0
      %p180 = por %p178, %p179
      %s181 = ssub.s32 %s21, %s28
      %p182 = scmp.eq.s32.totalorder %s181, 0
      %s184 = sadd.s32 %s183, 1
      %s185 = scalar_select %p182, %s183, %s184
      %p188 = pneg %p182
      %p189 = scmp.eq.s32.totalorder %s21, 7
      %p190 = por %p188, %p189
      %p191 = scmp.ne.s32.totalorder %s183, %s186
      %p192 = scmp.eq.s32.totalorder %s21, 0
      %p193 = por %p191, %p192
      %p194 = scmp.ne.s32.totalorder %s183, %s186
      %p195 = scmp.eq.s32.totalorder %s26, 7
      %p196 = por %p194, %p195
      %p197 = scmp.ne.s32.totalorder %s186, %s187
      %p198 = scmp.eq.s32.totalorder %s26, 0
      %p199 = por %p197, %p198
      %p200 = scmp.ne.s32.totalorder %s186, %s187
      %p201 = scmp.eq.s32.totalorder %s27, 7
      %p202 = por %p200, %p201
      %p204 = scmp.ne.s32.totalorder %s187, %s203
      %p205 = scmp.eq.s32.totalorder %s27, 0
      %p206 = por %p204, %p205
      %p207 = scmp.le.s32.totalorder 1, %s21
      %p208 = scmp.lt.s32.totalorder %s21, 9
      %p209 = pnand %p207, %p208
      %p210 = pneg %p209
      // Predicated region
      $region9: #{tpu_custom_call.1} parent=5 // pred_check
        _
      $region10: #{tpu_custom_call.1} parent=5 // pred_check_branch
        %212 = sbr.rel (%p209) target = $region12
      $region11: #{tpu_custom_call.1} parent=5 // pred_region
        %s213 = ssub.s32 %s21, 1
        // Predicated region
        $region13: #{tpu_custom_call.1} parent=11 // pred_check
          %p214 = pneg %p68
        $region14: #{tpu_custom_call.1} parent=11 // pred_check_branch
          %216 = sbr.rel (%p214) target = $region16
        $region15: #{tpu_custom_call.1} parent=11 // pred_region
          %s218 = ssub.s32 8192, 8192
          %219 = vsyncadd [#allocation6], %s218
          %s220 = sshll.u32 [#allocation5], 4
          %s221 = int_to_ptr.vmem [resolvable:$true] %s220
          %226 = dma.hbm_to_vmem [thread:$0]  %s1, 8192, %s221, [#allocation6], 512, 512, 32
        $region16: #{tpu_custom_call.1} parent=11 // pred_fallthru
          _
        // Predicated region
        $region17: #{tpu_custom_call.1} parent=11 // pred_check
          %p227 = pneg %p89
        $region18: #{tpu_custom_call.1} parent=11 // pred_check_branch
          %229 = sbr.rel (%p227) target = $region20
        $region19: #{tpu_custom_call.1} parent=11 // pred_region
          %s231 = ssub.s32 128, 128
          %232 = vsyncadd [#allocation6], %s231
          %s234 = sshll.u32 [#allocation7], 4
          %s235 = int_to_ptr.vmem [resolvable:$true] %s234
          %237 = dma.hbm_to_vmem [thread:$0]  %s2, 128, %s235, [#allocation6]
        $region20: #{tpu_custom_call.1} parent=11 // pred_fallthru
          _
        // Predicated region
        $region21: #{tpu_custom_call.1} parent=11 // pred_check
          %p238 = pneg %p110
        $region22: #{tpu_custom_call.1} parent=11 // pred_check_branch
          %240 = sbr.rel (%p238) target = $region24
        $region23: #{tpu_custom_call.1} parent=11 // pred_region
          %s242 = ssub.s32 8192, 8192
          %243 = vsyncadd [#allocation9], %s242
          %s244 = sshll.u32 [#allocation8], 4
          %s245 = int_to_ptr.vmem [resolvable:$true] %s244
          %250 = dma.hbm_to_vmem [thread:$0]  %s3, 8192, %s245, [#allocation9], 64, 64, 4
        $region24: #{tpu_custom_call.1} parent=11 // pred_fallthru
          _
        // Predicated region
        $region25: #{tpu_custom_call.1} parent=11 // pred_check
          %p251 = pneg %p131
        $region26: #{tpu_custom_call.1} parent=11 // pred_check_branch
          %253 = sbr.rel (%p251) target = $region28
        $region27: #{tpu_custom_call.1} parent=11 // pred_region
          _
        $region28: #{tpu_custom_call.1} parent=11 // pred_fallthru
          _
        // Predicated region
        $region29: #{tpu_custom_call.1} parent=11 // pred_check
          %p254 = pneg %p152
        $region30: #{tpu_custom_call.1} parent=11 // pred_check_branch
          %256 = sbr.rel (%p254) target = $region32
        $region31: #{tpu_custom_call.1} parent=11 // pred_region
          _
        $region32: #{tpu_custom_call.1} parent=11 // pred_fallthru
          _
        // Predicated region
        $region33: #{tpu_custom_call.1} parent=11 // pred_check
          %p257 = pneg %p173
        $region34: #{tpu_custom_call.1} parent=11 // pred_check_branch
          %259 = sbr.rel (%p257) target = $region36
        $region35: #{tpu_custom_call.1} parent=11 // pred_region
          _
        $region36: #{tpu_custom_call.1} parent=11 // pred_fallthru
          _
      $region12: #{tpu_custom_call.1} parent=5 // pred_fallthru
        _
      %p260 = scmp.lt.s32.totalorder %s21, 8
      // Predicated region
      $region37: #{tpu_custom_call.1} parent=5 // pred_check
        %p261 = pneg %p260
      $region38: #{tpu_custom_call.1} parent=5 // pred_check_branch
        %263 = sbr.rel (%p261) target = $region40
      $region39: #{tpu_custom_call.1} parent=5 // pred_region
        // Predicated region
        $region41: #{tpu_custom_call.1} parent=39 // pred_check
          %p264 = pneg %p41
        $region42: #{tpu_custom_call.1} parent=39 // pred_check_branch
          %266 = sbr.rel (%p264) target = $region44
        $region43: #{tpu_custom_call.1} parent=39 // pred_region
          %s267 = sand.u32 %s31, 1
          %s268 = scalar_lea.sflag [#allocation3], %s267
          %s269 = sand.u32 %s31, 1
          %s270 = smul.addr %s269, 64
          %s271 = scalar_lea.vmem [#allocation2], %s270
          %s272 = smul.u32 8, %s21
          %s274 = ssub.s32 1024, 1024
          %275 = vsyncadd %s268, %s274
          %s276 = smul.addr %s272, 128
          %s277 = scalar_lea.hbm %s0, %s276
          %s278 = sshll.u32 %s271, 4
          %s279 = int_to_ptr.vmem [resolvable:$true] %s278
          %284 = dma.hbm_to_vmem [thread:$0]  %s277, 1024, %s279, %s268, 128, 128, 8
        $region44: #{tpu_custom_call.1} parent=39 // pred_fallthru
          _
      $region40: #{tpu_custom_call.1} parent=5 // pred_fallthru
        _
      %p285 = scmp.le.s32.totalorder 1, %s21
      %p286 = scmp.lt.s32.totalorder %s21, 9
      %p287 = pnand %p285, %p286
      %p288 = pneg %p287
      // Predicated region
      $region45: #{tpu_custom_call.1} parent=5 // pred_check
        _
      $region46: #{tpu_custom_call.1} parent=5 // pred_check_branch
        %290 = sbr.rel (%p287) target = $region48
      $region47: #{tpu_custom_call.1} parent=5 // pred_region
        %s291 = ssub.s32 %s21, 1
        %s292 = sand.u32 %s34, 1
        %s293 = scalar_lea.sflag [#allocation3], %s292
        %s294 = sand.u32 %s34, 1
        %s295 = smul.addr %s294, 64
        %s296 = scalar_lea.vmem [#allocation2], %s295
        // Predicated region
        $region49: #{tpu_custom_call.1} parent=47 // pred_check
          %p297 = pneg %p47
        $region50: #{tpu_custom_call.1} parent=47 // pred_check_branch
          %299 = sbr.rel (%p297) target = $region52
        $region51: #{tpu_custom_call.1} parent=47 // pred_region
          %300 = dma.done %s293, 1024
        $region52: #{tpu_custom_call.1} parent=47 // pred_fallthru
          _
        // Predicated region
        $region53: #{tpu_custom_call.1} parent=47 // pred_check
          %p301 = pneg %p68
        $region54: #{tpu_custom_call.1} parent=47 // pred_check_branch
          %303 = sbr.rel (%p301) target = $region56
        $region55: #{tpu_custom_call.1} parent=47 // pred_region
          %304 = dma.done [#allocation6], 8192
        $region56: #{tpu_custom_call.1} parent=47 // pred_fallthru
          _
        // Predicated region
        $region57: #{tpu_custom_call.1} parent=47 // pred_check
          %p305 = pneg %p89
        $region58: #{tpu_custom_call.1} parent=47 // pred_check_branch
          %307 = sbr.rel (%p305) target = $region60
        $region59: #{tpu_custom_call.1} parent=47 // pred_region
          %308 = dma.done [#allocation6], 128
        $region60: #{tpu_custom_call.1} parent=47 // pred_fallthru
          _
        // Predicated region
        $region61: #{tpu_custom_call.1} parent=47 // pred_check
          %p309 = pneg %p110
        $region62: #{tpu_custom_call.1} parent=47 // pred_check_branch
          %311 = sbr.rel (%p309) target = $region64
        $region63: #{tpu_custom_call.1} parent=47 // pred_region
          %312 = dma.done [#allocation9], 8192
        $region64: #{tpu_custom_call.1} parent=47 // pred_fallthru
          _
        %s313 = sand.u32 %s34, 1
        %s314 = scalar_lea.sflag [#allocation3], %s313
        %s315 = sand.u32 %s34, 1
        %s316 = smul.addr %s315, 64
        %s317 = scalar_lea.vmem [#allocation2], %s316
        %p318 = pneg %p47
        %p319 = pneg %p44
        %p320 = pneg %p68
        %p321 = pneg %p65
        %p322 = pneg %p89
        %p323 = pneg %p86
        %p324 = pneg %p110
        %p325 = pneg %p107
        %p326 = pneg %p131
        %p327 = pneg %p128
        %p328 = pneg %p152
        %p329 = pneg %p149
        %p330 = pneg %p173
        %p331 = pneg %p170
        %p332 = pneg %p199
        %p333 = pneg %p196
        %s334 = sand.u32 %s186, 1
        %s335 = scalar_lea.sflag [#allocation4], %s334
        %s336 = sand.u32 %s186, 1
        %s337 = smul.addr %s336, 64
        %s338 = scalar_lea.vmem [#allocation10], %s337
        %s339 = smul.u32 8, %s26
        %s340 = smul.u32 8, %s26
        %v342 = vld [vmem:[%s296] sm:$0xff]
        %v343 = vld [vmem:[%s296 + $0x8] sm:$0xff]
        %v344 = vld [vmem:[%s296 + $0x10] sm:$0xff]
        %v345 = vld [vmem:[%s296 + $0x18] sm:$0xff]
        %v346 = vld [vmem:[%s296 + $0x20] sm:$0xff]
        %v347 = vld [vmem:[%s296 + $0x28] sm:$0xff]
        %v348 = vld [vmem:[%s296 + $0x30] sm:$0xff]
        %v349 = vld [vmem:[%s296 + $0x38] sm:$0xff]
        %v350 = vld [vmem:[%s5] sm:$0x1]
        %v351 = vld [vmem:[%s6] sm:$0x1]
        %v352 = vpack.c.bf16 %v343, %v342
        %v353 = vpack.c.bf16 %v345, %v344
        %v354 = vpack.c.bf16 %v347, %v346
        %v355 = vpack.c.bf16 %v349, %v348
        %v356 = vld [vmem:[#allocation5] sm:$0xff]
        %v357 = vld [vmem:[#allocation5 + $0x8] sm:$0xff]
        %v358 = vld [vmem:[#allocation5 + $0x20] sm:$0xff]
        %v359 = vld [vmem:[#allocation5 + $0x28] sm:$0xff]
        %v360 = vld [vmem:[#allocation5 + $0x40] sm:$0xff]
        %v361 = vld [vmem:[#allocation5 + $0x48] sm:$0xff]
        %v362 = vld [vmem:[#allocation5 + $0x60] sm:$0xff]
        %v363 = vld [vmem:[#allocation5 + $0x68] sm:$0xff]
        %v364 = vld [vmem:[#allocation5 + $0x80] sm:$0xff]
        %v365 = vld [vmem:[#allocation5 + $0x88] sm:$0xff]
        %v366 = vld [vmem:[#allocation5 + $0xa0] sm:$0xff]
        %v367 = vld [vmem:[#allocation5 + $0xa8] sm:$0xff]
        %v368 = vld [vmem:[#allocation5 + $0xc0] sm:$0xff]
        %v369 = vld [vmem:[#allocation5 + $0xc8] sm:$0xff]
        %v370 = vld [vmem:[#allocation5 + $0xe0] sm:$0xff]
        %v371 = vld [vmem:[#allocation5 + $0xe8] sm:$0xff]
        %v372 = vld [vmem:[#allocation5 + $0x100] sm:$0xff]
        %v373 = vld [vmem:[#allocation5 + $0x108] sm:$0xff]
        %v374 = vld [vmem:[#allocation5 + $0x120] sm:$0xff]
        %v375 = vld [vmem:[#allocation5 + $0x128] sm:$0xff]
        %v376 = vld [vmem:[#allocation5 + $0x140] sm:$0xff]
        %v377 = vld [vmem:[#allocation5 + $0x148] sm:$0xff]
        %v378 = vld [vmem:[#allocation5 + $0x160] sm:$0xff]
        %v379 = vld [vmem:[#allocation5 + $0x168] sm:$0xff]
        %v380 = vld [vmem:[#allocation5 + $0x180] sm:$0xff]
        %v381 = vld [vmem:[#allocation5 + $0x188] sm:$0xff]
        %v382 = vld [vmem:[#allocation5 + $0x1a0] sm:$0xff]
        %v383 = vld [vmem:[#allocation5 + $0x1a8] sm:$0xff]
        %v384 = vld [vmem:[#allocation5 + $0x1c0] sm:$0xff]
        %v385 = vld [vmem:[#allocation5 + $0x1c8] sm:$0xff]
        %v386 = vld [vmem:[#allocation5 + $0x1e0] sm:$0xff]
        %v387 = vld [vmem:[#allocation5 + $0x1e8] sm:$0xff]
        %v388 = vld [vmem:[#allocation7] sm:$0xf]
        %v390 = vlaneseq
        %v391 = vshrl.u32 %v390, 7
        %v392 = vsub.s32 0, %v391
        %v393 = vrot.slane %v388, %v392
        %v394 = vlaneseq
        %v395 = vshrl.u32 %v394, 7
        %v396 = vsub.s32 1, %v395
        %v397 = vrot.slane %v388, %v396
        %v398 = vlaneseq
        %v399 = vshrl.u32 %v398, 7
        %v400 = vsub.s32 2, %v399
        %v401 = vrot.slane %v388, %v400
        %v402 = vlaneseq
        %v403 = vshrl.u32 %v402, 7
        %v404 = vsub.s32 3, %v403
        %v405 = vrot.slane %v388, %v404
        %v442 = vunpack.c.l.b16 %v356
        %v443 = vunpack.c.h.b16 %v356
        %v444 = vunpack.c.l.b16 %v357
        %v445 = vunpack.c.h.b16 %v357
        %v446 = vunpack.c.l.b16 %v358
        %v447 = vunpack.c.h.b16 %v358
        %v448 = vunpack.c.l.b16 %v359
        %v449 = vunpack.c.h.b16 %v359
        %v450 = vunpack.c.l.b16 %v360
        %v451 = vunpack.c.h.b16 %v360
        %v452 = vunpack.c.l.b16 %v361
        %v453 = vunpack.c.h.b16 %v361
        %v454 = vunpack.c.l.b16 %v362
        %v455 = vunpack.c.h.b16 %v362
        %v456 = vunpack.c.l.b16 %v363
        %v457 = vunpack.c.h.b16 %v363
        %v458 = vunpack.c.l.b16 %v364
        %v459 = vunpack.c.h.b16 %v364
        %v460 = vunpack.c.l.b16 %v365
        %v461 = vunpack.c.h.b16 %v365
        %v462 = vunpack.c.l.b16 %v366
        %v463 = vunpack.c.h.b16 %v366
        %v464 = vunpack.c.l.b16 %v367
        %v465 = vunpack.c.h.b16 %v367
        %v466 = vunpack.c.l.b16 %v368
        %v467 = vunpack.c.h.b16 %v368
        %v468 = vunpack.c.l.b16 %v369
        %v469 = vunpack.c.h.b16 %v369
        %v470 = vunpack.c.l.b16 %v370
        %v471 = vunpack.c.h.b16 %v370
        %v472 = vunpack.c.l.b16 %v371
        %v473 = vunpack.c.h.b16 %v371
        %v474 = vunpack.c.l.b16 %v372
        %v475 = vunpack.c.h.b16 %v372
        %v476 = vunpack.c.l.b16 %v373
        %v477 = vunpack.c.h.b16 %v373
        %v478 = vunpack.c.l.b16 %v374
        %v479 = vunpack.c.h.b16 %v374
        %v480 = vunpack.c.l.b16 %v375
        %v481 = vunpack.c.h.b16 %v375
        %v482 = vunpack.c.l.b16 %v376
        %v483 = vunpack.c.h.b16 %v376
        %v484 = vunpack.c.l.b16 %v377
        %v485 = vunpack.c.h.b16 %v377
        %v486 = vunpack.c.l.b16 %v378
        %v487 = vunpack.c.h.b16 %v378
        %v488 = vunpack.c.l.b16 %v379
        %v489 = vunpack.c.h.b16 %v379
        %v490 = vunpack.c.l.b16 %v380
        %v491 = vunpack.c.h.b16 %v380
        %v492 = vunpack.c.l.b16 %v381
        %v493 = vunpack.c.h.b16 %v381
        %v494 = vunpack.c.l.b16 %v382
        %v495 = vunpack.c.h.b16 %v382
        %v496 = vunpack.c.l.b16 %v383
        %v497 = vunpack.c.h.b16 %v383
        %v498 = vunpack.c.l.b16 %v384
        %v499 = vunpack.c.h.b16 %v384
        %v500 = vunpack.c.l.b16 %v385
        %v501 = vunpack.c.h.b16 %v385
        %v502 = vunpack.c.l.b16 %v386
        %v503 = vunpack.c.h.b16 %v386
        %v504 = vunpack.c.l.b16 %v387
        %v505 = vunpack.c.h.b16 %v387
        %v506 = vpack.c.b16 %v446, %v442
        %v507 = vpack.c.b16 %v447, %v443
        %v508 = vpack.c.b16 %v448, %v444
        %v509 = vpack.c.b16 %v449, %v445
        %v510 = vpack.c.b16 %v454, %v450
        %v511 = vpack.c.b16 %v455, %v451
        %v512 = vpack.c.b16 %v456, %v452
        %v513 = vpack.c.b16 %v457, %v453
        %v514 = vpack.c.b16 %v462, %v458
        %v515 = vpack.c.b16 %v463, %v459
        %v516 = vpack.c.b16 %v464, %v460
        %v517 = vpack.c.b16 %v465, %v461
        %v518 = vpack.c.b16 %v470, %v466
        %v519 = vpack.c.b16 %v471, %v467
        %v520 = vpack.c.b16 %v472, %v468
        %v521 = vpack.c.b16 %v473, %v469
        %v522 = vpack.c.b16 %v478, %v474
        %v523 = vpack.c.b16 %v479, %v475
        %v524 = vpack.c.b16 %v480, %v476
        %v525 = vpack.c.b16 %v481, %v477
        %v526 = vpack.c.b16 %v486, %v482
        %v527 = vpack.c.b16 %v487, %v483
        %v528 = vpack.c.b16 %v488, %v484
        %v529 = vpack.c.b16 %v489, %v485
        %v530 = vpack.c.b16 %v494, %v490
        %v531 = vpack.c.b16 %v495, %v491
        %v532 = vpack.c.b16 %v496, %v492
        %v533 = vpack.c.b16 %v497, %v493
        %v534 = vpack.c.b16 %v502, %v498
        %v535 = vpack.c.b16 %v503, %v499
        %v536 = vpack.c.b16 %v504, %v500
        %v537 = vpack.c.b16 %v505, %v501
        %570 = vmatprep.subr.bf16.mxu0 %v535
        %571 = vmatpush1.bf16.msra.mxu0 %v534
        %572 = vmatprep.subr.bf16.mxu0 %v531
        %573 = vmatpush1.bf16.msra.mxu0 %v530
        %574 = vmatprep.subr.bf16.mxu0 %v527
        %575 = vmatpush1.bf16.msra.mxu0 %v526
        %576 = vmatprep.subr.bf16.mxu0 %v523
        %577 = vmatpush1.bf16.msra.mxu0 %v522
        %578 = vmatprep.subr.bf16.mxu0 %v519
        %579 = vmatpush1.bf16.msra.mxu0 %v518
        %580 = vmatprep.subr.bf16.mxu0 %v515
        %581 = vmatpush1.bf16.msra.mxu0 %v514
        %582 = vmatprep.subr.bf16.mxu0 %v511
        %583 = vmatpush1.bf16.msra.mxu0 %v510
        %584 = vmatprep.subr.bf16.mxu0 %v507
        %585 = vmatpush1.bf16.msra.mxu0 %v506
        %586 = vmatprep.subr.bf16.mxu0 0
        %587 = vmatpush2.bf16.msra.mxu0 0
        %588 = vmatprep.subr.bf16.mxu0 0
        %589 = vmatpush2.bf16.msra.mxu0 0
        %590 = vmatprep.subr.bf16.mxu0 0
        %591 = vmatpush2.bf16.msra.mxu0 0
        %592 = vmatprep.subr.bf16.mxu0 0
        %593 = vmatpush2.bf16.msra.mxu0 0
        %594 = vmatprep.subr.bf16.mxu0 0
        %595 = vmatpush2.bf16.msra.mxu0 0
        %596 = vmatprep.subr.bf16.mxu0 0
        %597 = vmatpush2.bf16.msra.mxu0 0
        %598 = vmatprep.subr.bf16.mxu0 0
        %599 = vmatpush2.bf16.msra.mxu0 0
        %600 = vmatprep.subr.bf16.mxu0 0
        %601 = vmatpush2.bf16.msra.mxu0 0
        %602 = vmatprep.mubr.bf16.mxu0 0
        %603 = vmatmul.mubr.bf16.gmra.mxu0 %v352
        %v604 = vpop.f32.mrf.mxu0
        %v605 = vadd.f32 %v393, %v604
        %v606 = vpop.f32.mrf.mxu0
        %v607 = vadd.f32 %v397, %v606
        %v608 = vpop.f32.mrf.mxu0
        %v609 = vadd.f32 %v393, %v608
        %v610 = vpop.f32.mrf.mxu0
        %v611 = vadd.f32 %v397, %v610
        %612 = vmatprep.mubr.bf16.mxu0 0
        %613 = vmatmul.mubr.bf16.gmra.mxu0 %v353
        %v614 = vpop.f32.mrf.mxu0
        %v615 = vadd.f32 %v393, %v614
        %v616 = vpop.f32.mrf.mxu0
        %v617 = vadd.f32 %v397, %v616
        %v618 = vpop.f32.mrf.mxu0
        %v619 = vadd.f32 %v393, %v618
        %v620 = vpop.f32.mrf.mxu0
        %v621 = vadd.f32 %v397, %v620
        %622 = vmatprep.mubr.bf16.mxu0 0
        %623 = vmatmul.mubr.bf16.gmra.mxu0 %v354
        %v624 = vpop.f32.mrf.mxu0
        %v625 = vadd.f32 %v393, %v624
        %v626 = vpop.f32.mrf.mxu0
        %v627 = vadd.f32 %v397, %v626
        %v628 = vpop.f32.mrf.mxu0
        %v629 = vadd.f32 %v393, %v628
        %v630 = vpop.f32.mrf.mxu0
        %v631 = vadd.f32 %v397, %v630
        %632 = vmatprep.mubr.bf16.mxu0 0
        %633 = vmatmul.mubr.bf16.gmra.mxu0 %v355
        %v634 = vpop.f32.mrf.mxu0
        %v635 = vadd.f32 %v393, %v634
        %v636 = vpop.f32.mrf.mxu0
        %v637 = vadd.f32 %v397, %v636
        %v638 = vpop.f32.mrf.mxu0
        %v639 = vadd.f32 %v393, %v638
        %v640 = vpop.f32.mrf.mxu0
        %v641 = vadd.f32 %v397, %v640
        %642 = vdwg.mxu0
        %643 = vmatprep.subr.bf16.mxu0 %v537
        %644 = vmatpush1.bf16.msra.mxu0 %v536
        %645 = vmatprep.subr.bf16.mxu0 %v533
        %646 = vmatpush1.bf16.msra.mxu0 %v532
        %647 = vmatprep.subr.bf16.mxu0 %v529
        %648 = vmatpush1.bf16.msra.mxu0 %v528
        %649 = vmatprep.subr.bf16.mxu0 %v525
        %650 = vmatpush1.bf16.msra.mxu0 %v524
        %651 = vmatprep.subr.bf16.mxu0 %v521
        %652 = vmatpush1.bf16.msra.mxu0 %v520
        %653 = vmatprep.subr.bf16.mxu0 %v517
        %654 = vmatpush1.bf16.msra.mxu0 %v516
        %655 = vmatprep.subr.bf16.mxu0 %v513
        %656 = vmatpush1.bf16.msra.mxu0 %v512
        %657 = vmatprep.subr.bf16.mxu0 %v509
        %658 = vmatpush1.bf16.msra.mxu0 %v508
        %659 = vmatprep.subr.bf16.mxu0 0
        %660 = vmatpush2.bf16.msra.mxu0 0
        %661 = vmatprep.subr.bf16.mxu0 0
        %662 = vmatpush2.bf16.msra.mxu0 0
        %663 = vmatprep.subr.bf16.mxu0 0
        %664 = vmatpush2.bf16.msra.mxu0 0
        %665 = vmatprep.subr.bf16.mxu0 0
        %666 = vmatpush2.bf16.msra.mxu0 0
        %667 = vmatprep.subr.bf16.mxu0 0
        %668 = vmatpush2.bf16.msra.mxu0 0
        %669 = vmatprep.subr.bf16.mxu0 0
        %670 = vmatpush2.bf16.msra.mxu0 0
        %671 = vmatprep.subr.bf16.mxu0 0
        %672 = vmatpush2.bf16.msra.mxu0 0
        %673 = vmatprep.subr.bf16.mxu0 0
        %674 = vmatpush2.bf16.msra.mxu0 0
        %675 = vmatprep.mubr.bf16.mxu0 0
        %676 = vmatmul.mubr.bf16.gmra.mxu0 %v352
        %v677 = vpop.f32.mrf.mxu0
        %v678 = vadd.f32 %v401, %v677
        %v679 = vpop.f32.mrf.mxu0
        %v680 = vadd.f32 %v405, %v679
        %v681 = vpop.f32.mrf.mxu0
        %v682 = vadd.f32 %v401, %v681
        %v683 = vpop.f32.mrf.mxu0
        %v684 = vadd.f32 %v405, %v683
        %685 = vmatprep.mubr.bf16.mxu0 0
        %686 = vmatmul.mubr.bf16.gmra.mxu0 %v353
        %v687 = vpop.f32.mrf.mxu0
        %v688 = vadd.f32 %v401, %v687
        %v689 = vpop.f32.mrf.mxu0
        %v690 = vadd.f32 %v405, %v689
        %v691 = vpop.f32.mrf.mxu0
        %v692 = vadd.f32 %v401, %v691
        %v693 = vpop.f32.mrf.mxu0
        %v694 = vadd.f32 %v405, %v693
        %695 = vmatprep.mubr.bf16.mxu0 0
        %696 = vmatmul.mubr.bf16.gmra.mxu0 %v354
        %v697 = vpop.f32.mrf.mxu0
        %v698 = vadd.f32 %v401, %v697
        %v699 = vpop.f32.mrf.mxu0
        %v700 = vadd.f32 %v405, %v699
        %v701 = vpop.f32.mrf.mxu0
        %v702 = vadd.f32 %v401, %v701
        %v703 = vpop.f32.mrf.mxu0
        %v704 = vadd.f32 %v405, %v703
        %705 = vmatprep.mubr.bf16.mxu0 0
        %706 = vmatmul.mubr.bf16.gmra.mxu0 %v355
        %v707 = vpop.f32.mrf.mxu0
        %v708 = vadd.f32 %v401, %v707
        %v709 = vpop.f32.mrf.mxu0
        %v710 = vadd.f32 %v405, %v709
        %v711 = vpop.f32.mrf.mxu0
        %v712 = vadd.f32 %v401, %v711
        %v713 = vpop.f32.mrf.mxu0
        %v714 = vadd.f32 %v405, %v713
        %715 = vdwg.mxu0
        %v716 = vmax.f32 %v605, 0.0
        %v717 = vmax.f32 %v607, 0.0
        %v718 = vmax.f32 %v678, 0.0
        %v719 = vmax.f32 %v680, 0.0
        %v720 = vmax.f32 %v609, 0.0
        %v721 = vmax.f32 %v611, 0.0
        %v722 = vmax.f32 %v682, 0.0
        %v723 = vmax.f32 %v684, 0.0
        %v724 = vmax.f32 %v615, 0.0
        %v725 = vmax.f32 %v617, 0.0
        %v726 = vmax.f32 %v688, 0.0
        %v727 = vmax.f32 %v690, 0.0
        %v728 = vmax.f32 %v619, 0.0
        %v729 = vmax.f32 %v621, 0.0
        %v730 = vmax.f32 %v692, 0.0
        %v731 = vmax.f32 %v694, 0.0
        %v732 = vmax.f32 %v625, 0.0
        %v733 = vmax.f32 %v627, 0.0
        %v734 = vmax.f32 %v698, 0.0
        %v735 = vmax.f32 %v700, 0.0
        %v736 = vmax.f32 %v629, 0.0
        %v737 = vmax.f32 %v631, 0.0
        %v738 = vmax.f32 %v702, 0.0
        %v739 = vmax.f32 %v704, 0.0
        %v740 = vmax.f32 %v635, 0.0
        %v741 = vmax.f32 %v637, 0.0
        %v742 = vmax.f32 %v708, 0.0
        %v743 = vmax.f32 %v710, 0.0
        %v744 = vmax.f32 %v639, 0.0
        %v745 = vmax.f32 %v641, 0.0
        %v746 = vmax.f32 %v712, 0.0
        %v747 = vmax.f32 %v714, 0.0
        %v748 = vpack.c.bf16 %v720, %v716
        %v749 = vpack.c.bf16 %v721, %v717
        %v750 = vpack.c.bf16 %v722, %v718
        %v751 = vpack.c.bf16 %v723, %v719
        %v752 = vpack.c.bf16 %v728, %v724
        %v753 = vpack.c.bf16 %v729, %v725
        %v754 = vpack.c.bf16 %v730, %v726
        %v755 = vpack.c.bf16 %v731, %v727
        %v756 = vpack.c.bf16 %v736, %v732
        %v757 = vpack.c.bf16 %v737, %v733
        %v758 = vpack.c.bf16 %v738, %v734
        %v759 = vpack.c.bf16 %v739, %v735
        %v760 = vpack.c.bf16 %v744, %v740
        %v761 = vpack.c.bf16 %v745, %v741
        %v762 = vpack.c.bf16 %v746, %v742
        %v763 = vpack.c.bf16 %v747, %v743
        %v764 = vld [vmem:[#allocation8] sm:$0xf]
        %v765 = vld [vmem:[#allocation8 + $0x4] sm:$0xf]
        %v766 = vld [vmem:[#allocation8 + $0x8] sm:$0xf]
        %v767 = vld [vmem:[#allocation8 + $0xc] sm:$0xf]
        %v768 = vld [vmem:[#allocation8 + $0x10] sm:$0xf]
        %v769 = vld [vmem:[#allocation8 + $0x14] sm:$0xf]
        %v770 = vld [vmem:[#allocation8 + $0x18] sm:$0xf]
        %v771 = vld [vmem:[#allocation8 + $0x1c] sm:$0xf]
        %v772 = vld [vmem:[#allocation8 + $0x20] sm:$0xf]
        %v773 = vld [vmem:[#allocation8 + $0x24] sm:$0xf]
        %v774 = vld [vmem:[#allocation8 + $0x28] sm:$0xf]
        %v775 = vld [vmem:[#allocation8 + $0x2c] sm:$0xf]
        %v776 = vld [vmem:[#allocation8 + $0x30] sm:$0xf]
        %v777 = vld [vmem:[#allocation8 + $0x34] sm:$0xf]
        %v778 = vld [vmem:[#allocation8 + $0x38] sm:$0xf]
        %v779 = vld [vmem:[#allocation8 + $0x3c] sm:$0xf]
        %v780 = vld [vmem:[#allocation8 + $0x40] sm:$0xf]
        %v781 = vld [vmem:[#allocation8 + $0x44] sm:$0xf]
        %v782 = vld [vmem:[#allocation8 + $0x48] sm:$0xf]
        %v783 = vld [vmem:[#allocation8 + $0x4c] sm:$0xf]
        %v784 = vld [vmem:[#allocation8 + $0x50] sm:$0xf]
        %v785 = vld [vmem:[#allocation8 + $0x54] sm:$0xf]
        %v786 = vld [vmem:[#allocation8 + $0x58] sm:$0xf]
        %v787 = vld [vmem:[#allocation8 + $0x5c] sm:$0xf]
        %v788 = vld [vmem:[#allocation8 + $0x60] sm:$0xf]
        %v789 = vld [vmem:[#allocation8 + $0x64] sm:$0xf]
        %v790 = vld [vmem:[#allocation8 + $0x68] sm:$0xf]
        %v791 = vld [vmem:[#allocation8 + $0x6c] sm:$0xf]
        %v792 = vld [vmem:[#allocation8 + $0x70] sm:$0xf]
        %v793 = vld [vmem:[#allocation8 + $0x74] sm:$0xf]
        %v794 = vld [vmem:[#allocation8 + $0x78] sm:$0xf]
        %v795 = vld [vmem:[#allocation8 + $0x7c] sm:$0xf]
        %v796 = vld [vmem:[#allocation8 + $0x80] sm:$0xf]
        %v797 = vld [vmem:[#allocation8 + $0x84] sm:$0xf]
        %v798 = vld [vmem:[#allocation8 + $0x88] sm:$0xf]
        %v799 = vld [vmem:[#allocation8 + $0x8c] sm:$0xf]
        %v800 = vld [vmem:[#allocation8 + $0x90] sm:$0xf]
        %v801 = vld [vmem:[#allocation8 + $0x94] sm:$0xf]
        %v802 = vld [vmem:[#allocation8 + $0x98] sm:$0xf]
        %v803 = vld [vmem:[#allocation8 + $0x9c] sm:$0xf]
        %v804 = vld [vmem:[#allocation8 + $0xa0] sm:$0xf]
        %v805 = vld [vmem:[#allocation8 + $0xa4] sm:$0xf]
        %v806 = vld [vmem:[#allocation8 + $0xa8] sm:$0xf]
        %v807 = vld [vmem:[#allocation8 + $0xac] sm:$0xf]
        %v808 = vld [vmem:[#allocation8 + $0xb0] sm:$0xf]
        %v809 = vld [vmem:[#allocation8 + $0xb4] sm:$0xf]
        %v810 = vld [vmem:[#allocation8 + $0xb8] sm:$0xf]
        %v811 = vld [vmem:[#allocation8 + $0xbc] sm:$0xf]
        %v812 = vld [vmem:[#allocation8 + $0xc0] sm:$0xf]
        %v813 = vld [vmem:[#allocation8 + $0xc4] sm:$0xf]
        %v814 = vld [vmem:[#allocation8 + $0xc8] sm:$0xf]
        %v815 = vld [vmem:[#allocation8 + $0xcc] sm:$0xf]
        %v816 = vld [vmem:[#allocation8 + $0xd0] sm:$0xf]
        %v817 = vld [vmem:[#allocation8 + $0xd4] sm:$0xf]
        %v818 = vld [vmem:[#allocation8 + $0xd8] sm:$0xf]
        %v819 = vld [vmem:[#allocation8 + $0xdc] sm:$0xf]
        %v820 = vld [vmem:[#allocation8 + $0xe0] sm:$0xf]
        %v821 = vld [vmem:[#allocation8 + $0xe4] sm:$0xf]
        %v822 = vld [vmem:[#allocation8 + $0xe8] sm:$0xf]
        %v823 = vld [vmem:[#allocation8 + $0xec] sm:$0xf]
        %v824 = vld [vmem:[#allocation8 + $0xf0] sm:$0xf]
        %v825 = vld [vmem:[#allocation8 + $0xf4] sm:$0xf]
        %v826 = vld [vmem:[#allocation8 + $0xf8] sm:$0xf]
        %v827 = vld [vmem:[#allocation8 + $0xfc] sm:$0xf]
        %v828 = vld [vmem:[#allocation5 + $0x10] sm:$0xff]
        %v829 = vld [vmem:[#allocation5 + $0x18] sm:$0xff]
        %v830 = vld [vmem:[#allocation5 + $0x30] sm:$0xff]
        %v831 = vld [vmem:[#allocation5 + $0x38] sm:$0xff]
        %v832 = vld [vmem:[#allocation5 + $0x50] sm:$0xff]
        %v833 = vld [vmem:[#allocation5 + $0x58] sm:$0xff]
        %v834 = vld [vmem:[#allocation5 + $0x70] sm:$0xff]
        %v835 = vld [vmem:[#allocation5 + $0x78] sm:$0xff]
        %v836 = vld [vmem:[#allocation5 + $0x90] sm:$0xff]
        %v837 = vld [vmem:[#allocation5 + $0x98] sm:$0xff]
        %v838 = vld [vmem:[#allocation5 + $0xb0] sm:$0xff]
        %v839 = vld [vmem:[#allocation5 + $0xb8] sm:$0xff]
        %v840 = vld [vmem:[#allocation5 + $0xd0] sm:$0xff]
        %v841 = vld [vmem:[#allocation5 + $0xd8] sm:$0xff]
        %v842 = vld [vmem:[#allocation5 + $0xf0] sm:$0xff]
        %v843 = vld [vmem:[#allocation5 + $0xf8] sm:$0xff]
        %v844 = vld [vmem:[#allocation5 + $0x110] sm:$0xff]
        %v845 = vld [vmem:[#allocation5 + $0x118] sm:$0xff]
        %v846 = vld [vmem:[#allocation5 + $0x130] sm:$0xff]
        %v847 = vld [vmem:[#allocation5 + $0x138] sm:$0xff]
        %v848 = vld [vmem:[#allocation5 + $0x150] sm:$0xff]
        %v849 = vld [vmem:[#allocation5 + $0x158] sm:$0xff]
        %v850 = vld [vmem:[#allocation5 + $0x170] sm:$0xff]
        %v851 = vld [vmem:[#allocation5 + $0x178] sm:$0xff]
        %v852 = vld [vmem:[#allocation5 + $0x190] sm:$0xff]
        %v853 = vld [vmem:[#allocation5 + $0x198] sm:$0xff]
        %v854 = vld [vmem:[#allocation5 + $0x1b0] sm:$0xff]
        %v855 = vld [vmem:[#allocation5 + $0x1b8] sm:$0xff]
        %v856 = vld [vmem:[#allocation5 + $0x1d0] sm:$0xff]
        %v857 = vld [vmem:[#allocation5 + $0x1d8] sm:$0xff]
        %v858 = vld [vmem:[#allocation5 + $0x1f0] sm:$0xff]
        %v859 = vld [vmem:[#allocation5 + $0x1f8] sm:$0xff]
        %v860 = vld [vmem:[#allocation7 + $0x4] sm:$0xf]
        %v862 = vlaneseq
        %v863 = vshrl.u32 %v862, 7
        %v864 = vsub.s32 0, %v863
        %v865 = vrot.slane %v860, %v864
        %v866 = vlaneseq
        %v867 = vshrl.u32 %v866, 7
        %v868 = vsub.s32 1, %v867
        %v869 = vrot.slane %v860, %v868
        %v870 = vlaneseq
        %v871 = vshrl.u32 %v870, 7
        %v872 = vsub.s32 2, %v871
        %v873 = vrot.slane %v860, %v872
        %v874 = vlaneseq
        %v875 = vshrl.u32 %v874, 7
        %v876 = vsub.s32 3, %v875
        %v877 = vrot.slane %v860, %v876
        %v914 = vunpack.c.l.b16 %v828
        %v915 = vunpack.c.h.b16 %v828
        %v916 = vunpack.c.l.b16 %v829
        %v917 = vunpack.c.h.b16 %v829
        %v918 = vunpack.c.l.b16 %v830
        %v919 = vunpack.c.h.b16 %v830
        %v920 = vunpack.c.l.b16 %v831
        %v921 = vunpack.c.h.b16 %v831
        %v922 = vunpack.c.l.b16 %v832
        %v923 = vunpack.c.h.b16 %v832
        %v924 = vunpack.c.l.b16 %v833
        %v925 = vunpack.c.h.b16 %v833
        %v926 = vunpack.c.l.b16 %v834
        %v927 = vunpack.c.h.b16 %v834
        %v928 = vunpack.c.l.b16 %v835
        %v929 = vunpack.c.h.b16 %v835
        %v930 = vunpack.c.l.b16 %v836
        %v931 = vunpack.c.h.b16 %v836
        %v932 = vunpack.c.l.b16 %v837
        %v933 = vunpack.c.h.b16 %v837
        %v934 = vunpack.c.l.b16 %v838
        %v935 = vunpack.c.h.b16 %v838
        %v936 = vunpack.c.l.b16 %v839
        %v937 = vunpack.c.h.b16 %v839
        %v938 = vunpack.c.l.b16 %v840
        %v939 = vunpack.c.h.b16 %v840
        %v940 = vunpack.c.l.b16 %v841
        %v941 = vunpack.c.h.b16 %v841
        %v942 = vunpack.c.l.b16 %v842
        %v943 = vunpack.c.h.b16 %v842
        %v944 = vunpack.c.l.b16 %v843
        %v945 = vunpack.c.h.b16 %v843
        %v946 = vunpack.c.l.b16 %v844
        %v947 = vunpack.c.h.b16 %v844
        %v948 = vunpack.c.l.b16 %v845
        %v949 = vunpack.c.h.b16 %v845
        %v950 = vunpack.c.l.b16 %v846
        %v951 = vunpack.c.h.b16 %v846
        %v952 = vunpack.c.l.b16 %v847
        %v953 = vunpack.c.h.b16 %v847
        %v954 = vunpack.c.l.b16 %v848
        %v955 = vunpack.c.h.b16 %v848
        %v956 = vunpack.c.l.b16 %v849
        %v957 = vunpack.c.h.b16 %v849
        %v958 = vunpack.c.l.b16 %v850
        %v959 = vunpack.c.h.b16 %v850
        %v960 = vunpack.c.l.b16 %v851
        %v961 = vunpack.c.h.b16 %v851
        %v962 = vunpack.c.l.b16 %v852
        %v963 = vunpack.c.h.b16 %v852
        %v964 = vunpack.c.l.b16 %v853
        %v965 = vunpack.c.h.b16 %v853
        %v966 = vunpack.c.l.b16 %v854
        %v967 = vunpack.c.h.b16 %v854
        %v968 = vunpack.c.l.b16 %v855
        %v969 = vunpack.c.h.b16 %v855
        %v970 = vunpack.c.l.b16 %v856
        %v971 = vunpack.c.h.b16 %v856
        %v972 = vunpack.c.l.b16 %v857
        %v973 = vunpack.c.h.b16 %v857
        %v974 = vunpack.c.l.b16 %v858
        %v975 = vunpack.c.h.b16 %v858
        %v976 = vunpack.c.l.b16 %v859
        %v977 = vunpack.c.h.b16 %v859
        %v978 = vpack.c.b16 %v918, %v914
        %v979 = vpack.c.b16 %v919, %v915
        %v980 = vpack.c.b16 %v920, %v916
        %v981 = vpack.c.b16 %v921, %v917
        %v982 = vpack.c.b16 %v926, %v922
        %v983 = vpack.c.b16 %v927, %v923
        %v984 = vpack.c.b16 %v928, %v924
        %v985 = vpack.c.b16 %v929, %v925
        %v986 = vpack.c.b16 %v934, %v930
        %v987 = vpack.c.b16 %v935, %v931
        %v988 = vpack.c.b16 %v936, %v932
        %v989 = vpack.c.b16 %v937, %v933
        %v990 = vpack.c.b16 %v942, %v938
        %v991 = vpack.c.b16 %v943, %v939
        %v992 = vpack.c.b16 %v944, %v940
        %v993 = vpack.c.b16 %v945, %v941
        %v994 = vpack.c.b16 %v950, %v946
        %v995 = vpack.c.b16 %v951, %v947
        %v996 = vpack.c.b16 %v952, %v948
        %v997 = vpack.c.b16 %v953, %v949
        %v998 = vpack.c.b16 %v958, %v954
        %v999 = vpack.c.b16 %v959, %v955
        %v1000 = vpack.c.b16 %v960, %v956
        %v1001 = vpack.c.b16 %v961, %v957
        %v1002 = vpack.c.b16 %v966, %v962
        %v1003 = vpack.c.b16 %v967, %v963
        %v1004 = vpack.c.b16 %v968, %v964
        %v1005 = vpack.c.b16 %v969, %v965
        %v1006 = vpack.c.b16 %v974, %v970
        %v1007 = vpack.c.b16 %v975, %v971
        %v1008 = vpack.c.b16 %v976, %v972
        %v1009 = vpack.c.b16 %v977, %v973
        %1042 = vmatprep.subr.bf16.mxu0 %v1007
        %1043 = vmatpush1.bf16.msra.mxu0 %v1006
        %1044 = vmatprep.subr.bf16.mxu0 %v1003
        %1045 = vmatpush1.bf16.msra.mxu0 %v1002
        %1046 = vmatprep.subr.bf16.mxu0 %v999
        %1047 = vmatpush1.bf16.msra.mxu0 %v998
        %1048 = vmatprep.subr.bf16.mxu0 %v995
        %1049 = vmatpush1.bf16.msra.mxu0 %v994
        %1050 = vmatprep.subr.bf16.mxu0 %v991
        %1051 = vmatpush1.bf16.msra.mxu0 %v990
        %1052 = vmatprep.subr.bf16.mxu0 %v987
        %1053 = vmatpush1.bf16.msra.mxu0 %v986
        %1054 = vmatprep.subr.bf16.mxu0 %v983
        %1055 = vmatpush1.bf16.msra.mxu0 %v982
        %1056 = vmatprep.subr.bf16.mxu0 %v979
        %1057 = vmatpush1.bf16.msra.mxu0 %v978
        %1058 = vmatprep.subr.bf16.mxu0 0
        %1059 = vmatpush2.bf16.msra.mxu0 0
        %1060 = vmatprep.subr.bf16.mxu0 0
        %1061 = vmatpush2.bf16.msra.mxu0 0
        %1062 = vmatprep.subr.bf16.mxu0 0
        %1063 = vmatpush2.bf16.msra.mxu0 0
        %1064 = vmatprep.subr.bf16.mxu0 0
        %1065 = vmatpush2.bf16.msra.mxu0 0
        %1066 = vmatprep.subr.bf16.mxu0 0
        %1067 = vmatpush2.bf16.msra.mxu0 0
        %1068 = vmatprep.subr.bf16.mxu0 0
        %1069 = vmatpush2.bf16.msra.mxu0 0
        %1070 = vmatprep.subr.bf16.mxu0 0
        %1071 = vmatpush2.bf16.msra.mxu0 0
        %1072 = vmatprep.subr.bf16.mxu0 0
        %1073 = vmatpush2.bf16.msra.mxu0 0
        %1074 = vmatprep.mubr.bf16.mxu0 0
        %1075 = vmatmul.mubr.bf16.gmra.mxu0 %v352
        %v1076 = vpop.f32.mrf.mxu0
        %v1077 = vadd.f32 %v865, %v1076
        %v1078 = vpop.f32.mrf.mxu0
        %v1079 = vadd.f32 %v869, %v1078
        %v1080 = vpop.f32.mrf.mxu0
        %v1081 = vadd.f32 %v865, %v1080
        %v1082 = vpop.f32.mrf.mxu0
        %v1083 = vadd.f32 %v869, %v1082
        %1084 = vmatprep.mubr.bf16.mxu0 0
        %1085 = vmatmul.mubr.bf16.gmra.mxu0 %v353
        %v1086 = vpop.f32.mrf.mxu0
        %v1087 = vadd.f32 %v865, %v1086
        %v1088 = vpop.f32.mrf.mxu0
        %v1089 = vadd.f32 %v869, %v1088
        %v1090 = vpop.f32.mrf.mxu0
        %v1091 = vadd.f32 %v865, %v1090
        %v1092 = vpop.f32.mrf.mxu0
        %v1093 = vadd.f32 %v869, %v1092
        %1094 = vmatprep.mubr.bf16.mxu0 0
        %1095 = vmatmul.mubr.bf16.gmra.mxu0 %v354
        %v1096 = vpop.f32.mrf.mxu0
        %v1097 = vadd.f32 %v865, %v1096
        %v1098 = vpop.f32.mrf.mxu0
        %v1099 = vadd.f32 %v869, %v1098
        %v1100 = vpop.f32.mrf.mxu0
        %v1101 = vadd.f32 %v865, %v1100
        %v1102 = vpop.f32.mrf.mxu0
        %v1103 = vadd.f32 %v869, %v1102
        %1104 = vmatprep.mubr.bf16.mxu0 0
        %1105 = vmatmul.mubr.bf16.gmra.mxu0 %v355
        %v1106 = vpop.f32.mrf.mxu0
        %v1107 = vadd.f32 %v865, %v1106
        %v1108 = vpop.f32.mrf.mxu0
        %v1109 = vadd.f32 %v869, %v1108
        %v1110 = vpop.f32.mrf.mxu0
        %v1111 = vadd.f32 %v865, %v1110
        %v1112 = vpop.f32.mrf.mxu0
        %v1113 = vadd.f32 %v869, %v1112
        %1114 = vdwg.mxu0
        %1115 = vmatprep.subr.bf16.mxu0 %v1009
        %1116 = vmatpush1.bf16.msra.mxu0 %v1008
        %1117 = vmatprep.subr.bf16.mxu0 %v1005
        %1118 = vmatpush1.bf16.msra.mxu0 %v1004
        %1119 = vmatprep.subr.bf16.mxu0 %v1001
        %1120 = vmatpush1.bf16.msra.mxu0 %v1000
        %1121 = vmatprep.subr.bf16.mxu0 %v997
        %1122 = vmatpush1.bf16.msra.mxu0 %v996
        %1123 = vmatprep.subr.bf16.mxu0 %v993
        %1124 = vmatpush1.bf16.msra.mxu0 %v992
        %1125 = vmatprep.subr.bf16.mxu0 %v989
        %1126 = vmatpush1.bf16.msra.mxu0 %v988
        %1127 = vmatprep.subr.bf16.mxu0 %v985
        %1128 = vmatpush1.bf16.msra.mxu0 %v984
        %1129 = vmatprep.subr.bf16.mxu0 %v981
        %1130 = vmatpush1.bf16.msra.mxu0 %v980
        %1131 = vmatprep.subr.bf16.mxu0 0
        %1132 = vmatpush2.bf16.msra.mxu0 0
        %1133 = vmatprep.subr.bf16.mxu0 0
        %1134 = vmatpush2.bf16.msra.mxu0 0
        %1135 = vmatprep.subr.bf16.mxu0 0
        %1136 = vmatpush2.bf16.msra.mxu0 0
        %1137 = vmatprep.subr.bf16.mxu0 0
        %1138 = vmatpush2.bf16.msra.mxu0 0
        %1139 = vmatprep.subr.bf16.mxu0 0
        %1140 = vmatpush2.bf16.msra.mxu0 0
        %1141 = vmatprep.subr.bf16.mxu0 0
        %1142 = vmatpush2.bf16.msra.mxu0 0
        %1143 = vmatprep.subr.bf16.mxu0 0
        %1144 = vmatpush2.bf16.msra.mxu0 0
        %1145 = vmatprep.subr.bf16.mxu0 0
        %1146 = vmatpush2.bf16.msra.mxu0 0
        %1147 = vmatprep.mubr.bf16.mxu0 0
        %1148 = vmatmul.mubr.bf16.gmra.mxu0 %v352
        %v1149 = vpop.f32.mrf.mxu0
        %v1150 = vadd.f32 %v873, %v1149
        %v1151 = vpop.f32.mrf.mxu0
        %v1152 = vadd.f32 %v877, %v1151
        %v1153 = vpop.f32.mrf.mxu0
        %v1154 = vadd.f32 %v873, %v1153
        %v1155 = vpop.f32.mrf.mxu0
        %v1156 = vadd.f32 %v877, %v1155
        %1157 = vmatprep.mubr.bf16.mxu0 0
        %1158 = vmatmul.mubr.bf16.gmra.mxu0 %v353
        %v1159 = vpop.f32.mrf.mxu0
        %v1160 = vadd.f32 %v873, %v1159
        %v1161 = vpop.f32.mrf.mxu0
        %v1162 = vadd.f32 %v877, %v1161
        %v1163 = vpop.f32.mrf.mxu0
        %v1164 = vadd.f32 %v873, %v1163
        %v1165 = vpop.f32.mrf.mxu0
        %v1166 = vadd.f32 %v877, %v1165
        %1167 = vmatprep.mubr.bf16.mxu0 0
        %1168 = vmatmul.mubr.bf16.gmra.mxu0 %v354
        %v1169 = vpop.f32.mrf.mxu0
        %v1170 = vadd.f32 %v873, %v1169
        %v1171 = vpop.f32.mrf.mxu0
        %v1172 = vadd.f32 %v877, %v1171
        %v1173 = vpop.f32.mrf.mxu0
        %v1174 = vadd.f32 %v873, %v1173
        %v1175 = vpop.f32.mrf.mxu0
        %v1176 = vadd.f32 %v877, %v1175
        %1177 = vmatprep.mubr.bf16.mxu0 0
        %1178 = vmatmul.mubr.bf16.gmra.mxu0 %v355
        %v1179 = vpop.f32.mrf.mxu0
        %v1180 = vadd.f32 %v873, %v1179
        %v1181 = vpop.f32.mrf.mxu0
        %v1182 = vadd.f32 %v877, %v1181
        %v1183 = vpop.f32.mrf.mxu0
        %v1184 = vadd.f32 %v873, %v1183
        %v1185 = vpop.f32.mrf.mxu0
        %v1186 = vadd.f32 %v877, %v1185
        %1187 = vdwg.mxu0
        %v1188 = vmax.f32 %v1077, 0.0
        %v1189 = vmax.f32 %v1079, 0.0
        %v1190 = vmax.f32 %v1150, 0.0
        %v1191 = vmax.f32 %v1152, 0.0
        %v1192 = vmax.f32 %v1081, 0.0
        %v1193 = vmax.f32 %v1083, 0.0
        %v1194 = vmax.f32 %v1154, 0.0
        %v1195 = vmax.f32 %v1156, 0.0
        %v1196 = vmax.f32 %v1087, 0.0
        %v1197 = vmax.f32 %v1089, 0.0
        %v1198 = vmax.f32 %v1160, 0.0
        %v1199 = vmax.f32 %v1162, 0.0
        %v1200 = vmax.f32 %v1091, 0.0
        %v1201 = vmax.f32 %v1093, 0.0
        %v1202 = vmax.f32 %v1164, 0.0
        %v1203 = vmax.f32 %v1166, 0.0
        %v1204 = vmax.f32 %v1097, 0.0
        %v1205 = vmax.f32 %v1099, 0.0
        %v1206 = vmax.f32 %v1170, 0.0
        %v1207 = vmax.f32 %v1172, 0.0
        %v1208 = vmax.f32 %v1101, 0.0
        %v1209 = vmax.f32 %v1103, 0.0
        %v1210 = vmax.f32 %v1174, 0.0
        %v1211 = vmax.f32 %v1176, 0.0
        %v1212 = vmax.f32 %v1107, 0.0
        %v1213 = vmax.f32 %v1109, 0.0
        %v1214 = vmax.f32 %v1180, 0.0
        %v1215 = vmax.f32 %v1182, 0.0
        %v1216 = vmax.f32 %v1111, 0.0
        %v1217 = vmax.f32 %v1113, 0.0
        %v1218 = vmax.f32 %v1184, 0.0
        %v1219 = vmax.f32 %v1186, 0.0
        %v1220 = vpack.c.bf16 %v1192, %v1188
        %v1221 = vpack.c.bf16 %v1193, %v1189
        %v1222 = vpack.c.bf16 %v1194, %v1190
        %v1223 = vpack.c.bf16 %v1195, %v1191
        %v1224 = vpack.c.bf16 %v1200, %v1196
        %v1225 = vpack.c.bf16 %v1201, %v1197
        %v1226 = vpack.c.bf16 %v1202, %v1198
        %v1227 = vpack.c.bf16 %v1203, %v1199
        %v1228 = vpack.c.bf16 %v1208, %v1204
        %v1229 = vpack.c.bf16 %v1209, %v1205
        %v1230 = vpack.c.bf16 %v1210, %v1206
        %v1231 = vpack.c.bf16 %v1211, %v1207
        %v1232 = vpack.c.bf16 %v1216, %v1212
        %v1233 = vpack.c.bf16 %v1217, %v1213
        %v1234 = vpack.c.bf16 %v1218, %v1214
        %v1235 = vpack.c.bf16 %v1219, %v1215
        %v1236 = vld [vmem:[#allocation8 + $0x100] sm:$0xf]
        %v1237 = vld [vmem:[#allocation8 + $0x104] sm:$0xf]
        %v1238 = vld [vmem:[#allocation8 + $0x108] sm:$0xf]
        %v1239 = vld [vmem:[#allocation8 + $0x10c] sm:$0xf]
        %v1240 = vld [vmem:[#allocation8 + $0x110] sm:$0xf]
        %v1241 = vld [vmem:[#allocation8 + $0x114] sm:$0xf]
        %v1242 = vld [vmem:[#allocation8 + $0x118] sm:$0xf]
        %v1243 = vld [vmem:[#allocation8 + $0x11c] sm:$0xf]
        %v1244 = vld [vmem:[#allocation8 + $0x120] sm:$0xf]
        %v1245 = vld [vmem:[#allocation8 + $0x124] sm:$0xf]
        %v1246 = vld [vmem:[#allocation8 + $0x128] sm:$0xf]
        %v1247 = vld [vmem:[#allocation8 + $0x12c] sm:$0xf]
        %v1248 = vld [vmem:[#allocation8 + $0x130] sm:$0xf]
        %v1249 = vld [vmem:[#allocation8 + $0x134] sm:$0xf]
        %v1250 = vld [vmem:[#allocation8 + $0x138] sm:$0xf]
        %v1251 = vld [vmem:[#allocation8 + $0x13c] sm:$0xf]
        %v1252 = vld [vmem:[#allocation8 + $0x140] sm:$0xf]
        %v1253 = vld [vmem:[#allocation8 + $0x144] sm:$0xf]
        %v1254 = vld [vmem:[#allocation8 + $0x148] sm:$0xf]
        %v1255 = vld [vmem:[#allocation8 + $0x14c] sm:$0xf]
        %v1256 = vld [vmem:[#allocation8 + $0x150] sm:$0xf]
        %v1257 = vld [vmem:[#allocation8 + $0x154] sm:$0xf]
        %v1258 = vld [vmem:[#allocation8 + $0x158] sm:$0xf]
        %v1259 = vld [vmem:[#allocation8 + $0x15c] sm:$0xf]
        %v1260 = vld [vmem:[#allocation8 + $0x160] sm:$0xf]
        %v1261 = vld [vmem:[#allocation8 + $0x164] sm:$0xf]
        %v1262 = vld [vmem:[#allocation8 + $0x168] sm:$0xf]
        %v1263 = vld [vmem:[#allocation8 + $0x16c] sm:$0xf]
        %v1264 = vld [vmem:[#allocation8 + $0x170] sm:$0xf]
        %v1265 = vld [vmem:[#allocation8 + $0x174] sm:$0xf]
        %v1266 = vld [vmem:[#allocation8 + $0x178] sm:$0xf]
        %v1267 = vld [vmem:[#allocation8 + $0x17c] sm:$0xf]
        %v1268 = vld [vmem:[#allocation8 + $0x180] sm:$0xf]
        %v1269 = vld [vmem:[#allocation8 + $0x184] sm:$0xf]
        %v1270 = vld [vmem:[#allocation8 + $0x188] sm:$0xf]
        %v1271 = vld [vmem:[#allocation8 + $0x18c] sm:$0xf]
        %v1272 = vld [vmem:[#allocation8 + $0x190] sm:$0xf]
        %v1273 = vld [vmem:[#allocation8 + $0x194] sm:$0xf]
        %v1274 = vld [vmem:[#allocation8 + $0x198] sm:$0xf]
        %v1275 = vld [vmem:[#allocation8 + $0x19c] sm:$0xf]
        %v1276 = vld [vmem:[#allocation8 + $0x1a0] sm:$0xf]
        %v1277 = vld [vmem:[#allocation8 + $0x1a4] sm:$0xf]
        %v1278 = vld [vmem:[#allocation8 + $0x1a8] sm:$0xf]
        %v1279 = vld [vmem:[#allocation8 + $0x1ac] sm:$0xf]
        %v1280 = vld [vmem:[#allocation8 + $0x1b0] sm:$0xf]
        %v1281 = vld [vmem:[#allocation8 + $0x1b4] sm:$0xf]
        %v1282 = vld [vmem:[#allocation8 + $0x1b8] sm:$0xf]
        %v1283 = vld [vmem:[#allocation8 + $0x1bc] sm:$0xf]
        %v1284 = vld [vmem:[#allocation8 + $0x1c0] sm:$0xf]
        %v1285 = vld [vmem:[#allocation8 + $0x1c4] sm:$0xf]
        %v1286 = vld [vmem:[#allocation8 + $0x1c8] sm:$0xf]
        %v1287 = vld [vmem:[#allocation8 + $0x1cc] sm:$0xf]
        %v1288 = vld [vmem:[#allocation8 + $0x1d0] sm:$0xf]
        %v1289 = vld [vmem:[#allocation8 + $0x1d4] sm:$0xf]
        %v1290 = vld [vmem:[#allocation8 + $0x1d8] sm:$0xf]
        %v1291 = vld [vmem:[#allocation8 + $0x1dc] sm:$0xf]
        %v1292 = vld [vmem:[#allocation8 + $0x1e0] sm:$0xf]
        %v1293 = vld [vmem:[#allocation8 + $0x1e4] sm:$0xf]
        %v1294 = vld [vmem:[#allocation8 + $0x1e8] sm:$0xf]
        %v1295 = vld [vmem:[#allocation8 + $0x1ec] sm:$0xf]
        %v1296 = vld [vmem:[#allocation8 + $0x1f0] sm:$0xf]
        %v1297 = vld [vmem:[#allocation8 + $0x1f4] sm:$0xf]
        %v1298 = vld [vmem:[#allocation8 + $0x1f8] sm:$0xf]
        %v1299 = vld [vmem:[#allocation8 + $0x1fc] sm:$0xf]
        %v1364 = vunpack.c.l.b16 %v1236
        %v1365 = vunpack.c.l.b16 %v1237
        %v1366 = vunpack.c.l.b16 %v1238
        %v1367 = vunpack.c.l.b16 %v1239
        %v1368 = vunpack.c.l.b16 %v1240
        %v1369 = vunpack.c.l.b16 %v1241
        %v1370 = vunpack.c.l.b16 %v1242
        %v1371 = vunpack.c.l.b16 %v1243
        %v1372 = vunpack.c.l.b16 %v1244
        %v1373 = vunpack.c.l.b16 %v1245
        %v1374 = vunpack.c.l.b16 %v1246
        %v1375 = vunpack.c.l.b16 %v1247
        %v1376 = vunpack.c.l.b16 %v1248
        %v1377 = vunpack.c.l.b16 %v1249
        %v1378 = vunpack.c.l.b16 %v1250
        %v1379 = vunpack.c.l.b16 %v1251
        %v1380 = vunpack.c.l.b16 %v1252
        %v1381 = vunpack.c.l.b16 %v1253
        %v1382 = vunpack.c.l.b16 %v1254
        %v1383 = vunpack.c.l.b16 %v1255
        %v1384 = vunpack.c.l.b16 %v1256
        %v1385 = vunpack.c.l.b16 %v1257
        %v1386 = vunpack.c.l.b16 %v1258
        %v1387 = vunpack.c.l.b16 %v1259
        %v1388 = vunpack.c.l.b16 %v1260
        %v1389 = vunpack.c.l.b16 %v1261
        %v1390 = vunpack.c.l.b16 %v1262
        %v1391 = vunpack.c.l.b16 %v1263
        %v1392 = vunpack.c.l.b16 %v1264
        %v1393 = vunpack.c.l.b16 %v1265
        %v1394 = vunpack.c.l.b16 %v1266
        %v1395 = vunpack.c.l.b16 %v1267
        %v1396 = vunpack.c.l.b16 %v1268
        %v1397 = vunpack.c.l.b16 %v1269
        %v1398 = vunpack.c.l.b16 %v1270
        %v1399 = vunpack.c.l.b16 %v1271
        %v1400 = vunpack.c.l.b16 %v1272
        %v1401 = vunpack.c.l.b16 %v1273
        %v1402 = vunpack.c.l.b16 %v1274
        %v1403 = vunpack.c.l.b16 %v1275
        %v1404 = vunpack.c.l.b16 %v1276
        %v1405 = vunpack.c.l.b16 %v1277
        %v1406 = vunpack.c.l.b16 %v1278
        %v1407 = vunpack.c.l.b16 %v1279
        %v1408 = vunpack.c.l.b16 %v1280
        %v1409 = vunpack.c.l.b16 %v1281
        %v1410 = vunpack.c.l.b16 %v1282
        %v1411 = vunpack.c.l.b16 %v1283
        %v1412 = vunpack.c.l.b16 %v1284
        %v1413 = vunpack.c.l.b16 %v1285
        %v1414 = vunpack.c.l.b16 %v1286
        %v1415 = vunpack.c.l.b16 %v1287
        %v1416 = vunpack.c.l.b16 %v1288
        %v1417 = vunpack.c.l.b16 %v1289
        %v1418 = vunpack.c.l.b16 %v1290
        %v1419 = vunpack.c.l.b16 %v1291
        %v1420 = vunpack.c.l.b16 %v1292
        %v1421 = vunpack.c.l.b16 %v1293
        %v1422 = vunpack.c.l.b16 %v1294
        %v1423 = vunpack.c.l.b16 %v1295
        %v1424 = vunpack.c.l.b16 %v1296
        %v1425 = vunpack.c.l.b16 %v1297
        %v1426 = vunpack.c.l.b16 %v1298
        %v1427 = vunpack.c.l.b16 %v1299
        %v1428 = vpack.c.b16 %v1365, %v1364
        %v1429 = vpack.c.b16 %v1367, %v1366
        %v1430 = vpack.c.b16 %v1369, %v1368
        %v1431 = vpack.c.b16 %v1371, %v1370
        %v1432 = vpack.c.b16 %v1373, %v1372
        %v1433 = vpack.c.b16 %v1375, %v1374
        %v1434 = vpack.c.b16 %v1377, %v1376
        %v1435 = vpack.c.b16 %v1379, %v1378
        %v1436 = vpack.c.b16 %v1381, %v1380
        %v1437 = vpack.c.b16 %v1383, %v1382
        %v1438 = vpack.c.b16 %v1385, %v1384
        %v1439 = vpack.c.b16 %v1387, %v1386
        %v1440 = vpack.c.b16 %v1389, %v1388
        %v1441 = vpack.c.b16 %v1391, %v1390
        %v1442 = vpack.c.b16 %v1393, %v1392
        %v1443 = vpack.c.b16 %v1395, %v1394
        %v1444 = vpack.c.b16 %v1397, %v1396
        %v1445 = vpack.c.b16 %v1399, %v1398
        %v1446 = vpack.c.b16 %v1401, %v1400
        %v1447 = vpack.c.b16 %v1403, %v1402
        %v1448 = vpack.c.b16 %v1405, %v1404
        %v1449 = vpack.c.b16 %v1407, %v1406
        %v1450 = vpack.c.b16 %v1409, %v1408
        %v1451 = vpack.c.b16 %v1411, %v1410
        %v1452 = vpack.c.b16 %v1413, %v1412
        %v1453 = vpack.c.b16 %v1415, %v1414
        %v1454 = vpack.c.b16 %v1417, %v1416
        %v1455 = vpack.c.b16 %v1419, %v1418
        %v1456 = vpack.c.b16 %v1421, %v1420
        %v1457 = vpack.c.b16 %v1423, %v1422
        %v1458 = vpack.c.b16 %v1425, %v1424
        %v1459 = vpack.c.b16 %v1427, %v1426
        %1492 = vmatprep.subr.bf16.mxu0 0
        %1493 = vmatpush1.bf16.msra.mxu0 %v1435
        %1494 = vmatprep.subr.bf16.mxu0 0
        %1495 = vmatpush1.bf16.msra.mxu0 %v1434
        %1496 = vmatprep.subr.bf16.mxu0 0
        %1497 = vmatpush1.bf16.msra.mxu0 %v1433
        %1498 = vmatprep.subr.bf16.mxu0 0
        %1499 = vmatpush1.bf16.msra.mxu0 %v1432
        %1500 = vmatprep.subr.bf16.mxu0 0
        %1501 = vmatpush1.bf16.msra.mxu0 %v1431
        %1502 = vmatprep.subr.bf16.mxu0 0
        %1503 = vmatpush1.bf16.msra.mxu0 %v1430
        %1504 = vmatprep.subr.bf16.mxu0 0
        %1505 = vmatpush1.bf16.msra.mxu0 %v1429
        %1506 = vmatprep.subr.bf16.mxu0 0
        %1507 = vmatpush1.bf16.msra.mxu0 %v1428
        %1508 = vmatprep.subr.bf16.mxu0 0
        %1509 = vmatpush2.bf16.msra.mxu0 %v1443
        %1510 = vmatprep.subr.bf16.mxu0 0
        %1511 = vmatpush2.bf16.msra.mxu0 %v1442
        %1512 = vmatprep.subr.bf16.mxu0 0
        %1513 = vmatpush2.bf16.msra.mxu0 %v1441
        %1514 = vmatprep.subr.bf16.mxu0 0
        %1515 = vmatpush2.bf16.msra.mxu0 %v1440
        %1516 = vmatprep.subr.bf16.mxu0 0
        %1517 = vmatpush2.bf16.msra.mxu0 %v1439
        %1518 = vmatprep.subr.bf16.mxu0 0
        %1519 = vmatpush2.bf16.msra.mxu0 %v1438
        %1520 = vmatprep.subr.bf16.mxu0 0
        %1521 = vmatpush2.bf16.msra.mxu0 %v1437
        %1522 = vmatprep.subr.bf16.mxu0 0
        %1523 = vmatpush2.bf16.msra.mxu0 %v1436
        %1524 = vmatprep.mubr.bf16.mxu0 %v1221
        %1525 = vmatmul.mubr.bf16.gmra.mxu0 %v1220
        %v1526 = vpop.f32.mrf.mxu0
        %v1527 = vadd.f32 0.0, %v1526
        %v1528 = vpop.f32.mrf.mxu0
        %v1529 = vpop.f32.mrf.mxu0
        %v1530 = vadd.f32 0.0, %v1529
        %v1531 = vpop.f32.mrf.mxu0
        %1532 = vmatprep.mubr.bf16.mxu0 %v1225
        %1533 = vmatmul.mubr.bf16.gmra.mxu0 %v1224
        %v1534 = vpop.f32.mrf.mxu0
        %v1535 = vadd.f32 0.0, %v1534
        %v1536 = vpop.f32.mrf.mxu0
        %v1537 = vpop.f32.mrf.mxu0
        %v1538 = vadd.f32 0.0, %v1537
        %v1539 = vpop.f32.mrf.mxu0
        %1540 = vmatprep.mubr.bf16.mxu0 %v1229
        %1541 = vmatmul.mubr.bf16.gmra.mxu0 %v1228
        %v1542 = vpop.f32.mrf.mxu0
        %v1543 = vadd.f32 0.0, %v1542
        %v1544 = vpop.f32.mrf.mxu0
        %v1545 = vpop.f32.mrf.mxu0
        %v1546 = vadd.f32 0.0, %v1545
        %v1547 = vpop.f32.mrf.mxu0
        %1548 = vmatprep.mubr.bf16.mxu0 %v1233
        %1549 = vmatmul.mubr.bf16.gmra.mxu0 %v1232
        %v1550 = vpop.f32.mrf.mxu0
        %v1551 = vadd.f32 0.0, %v1550
        %v1552 = vpop.f32.mrf.mxu0
        %v1553 = vpop.f32.mrf.mxu0
        %v1554 = vadd.f32 0.0, %v1553
        %v1555 = vpop.f32.mrf.mxu0
        %1556 = vdwg.mxu0
        %1557 = vmatprep.subr.bf16.mxu0 0
        %1558 = vmatpush1.bf16.msra.mxu0 %v1451
        %1559 = vmatprep.subr.bf16.mxu0 0
        %1560 = vmatpush1.bf16.msra.mxu0 %v1450
        %1561 = vmatprep.subr.bf16.mxu0 0
        %1562 = vmatpush1.bf16.msra.mxu0 %v1449
        %1563 = vmatprep.subr.bf16.mxu0 0
        %1564 = vmatpush1.bf16.msra.mxu0 %v1448
        %1565 = vmatprep.subr.bf16.mxu0 0
        %1566 = vmatpush1.bf16.msra.mxu0 %v1447
        %1567 = vmatprep.subr.bf16.mxu0 0
        %1568 = vmatpush1.bf16.msra.mxu0 %v1446
        %1569 = vmatprep.subr.bf16.mxu0 0
        %1570 = vmatpush1.bf16.msra.mxu0 %v1445
        %1571 = vmatprep.subr.bf16.mxu0 0
        %1572 = vmatpush1.bf16.msra.mxu0 %v1444
        %1573 = vmatprep.subr.bf16.mxu0 0
        %1574 = vmatpush2.bf16.msra.mxu0 %v1459
        %1575 = vmatprep.subr.bf16.mxu0 0
        %1576 = vmatpush2.bf16.msra.mxu0 %v1458
        %1577 = vmatprep.subr.bf16.mxu0 0
        %1578 = vmatpush2.bf16.msra.mxu0 %v1457
        %1579 = vmatprep.subr.bf16.mxu0 0
        %1580 = vmatpush2.bf16.msra.mxu0 %v1456
        %1581 = vmatprep.subr.bf16.mxu0 0
        %1582 = vmatpush2.bf16.msra.mxu0 %v1455
        %1583 = vmatprep.subr.bf16.mxu0 0
        %1584 = vmatpush2.bf16.msra.mxu0 %v1454
        %1585 = vmatprep.subr.bf16.mxu0 0
        %1586 = vmatpush2.bf16.msra.mxu0 %v1453
        %1587 = vmatprep.subr.bf16.mxu0 0
        %1588 = vmatpush2.bf16.msra.mxu0 %v1452
        %1589 = vmatprep.mubr.bf16.mxu0 %v1223
        %1590 = vmatmul.mubr.bf16.gmra.mxu0 %v1222
        %v1591 = vpop.f32.mrf.mxu0
        %v1592 = vadd.f32 %v1527, %v1591
        %v1593 = vpop.f32.mrf.mxu0
        %v1594 = vpop.f32.mrf.mxu0
        %v1595 = vadd.f32 %v1530, %v1594
        %v1596 = vpop.f32.mrf.mxu0
        %1597 = vmatprep.mubr.bf16.mxu0 %v1227
        %1598 = vmatmul.mubr.bf16.gmra.mxu0 %v1226
        %v1599 = vpop.f32.mrf.mxu0
        %v1600 = vadd.f32 %v1535, %v1599
        %v1601 = vpop.f32.mrf.mxu0
        %v1602 = vpop.f32.mrf.mxu0
        %v1603 = vadd.f32 %v1538, %v1602
        %v1604 = vpop.f32.mrf.mxu0
        %1605 = vmatprep.mubr.bf16.mxu0 %v1231
        %1606 = vmatmul.mubr.bf16.gmra.mxu0 %v1230
        %v1607 = vpop.f32.mrf.mxu0
        %v1608 = vadd.f32 %v1543, %v1607
        %v1609 = vpop.f32.mrf.mxu0
        %v1610 = vpop.f32.mrf.mxu0
        %v1611 = vadd.f32 %v1546, %v1610
        %v1612 = vpop.f32.mrf.mxu0
        %1613 = vmatprep.mubr.bf16.mxu0 %v1235
        %1614 = vmatmul.mubr.bf16.gmra.mxu0 %v1234
        %v1615 = vpop.f32.mrf.mxu0
        %v1616 = vadd.f32 %v1551, %v1615
        %v1617 = vpop.f32.mrf.mxu0
        %v1618 = vpop.f32.mrf.mxu0
        %v1619 = vadd.f32 %v1554, %v1618
        %v1620 = vpop.f32.mrf.mxu0
        %1621 = vdwg.mxu0
        %v1686 = vunpack.c.l.b16 %v764
        %v1687 = vunpack.c.l.b16 %v765
        %v1688 = vunpack.c.l.b16 %v766
        %v1689 = vunpack.c.l.b16 %v767
        %v1690 = vunpack.c.l.b16 %v768
        %v1691 = vunpack.c.l.b16 %v769
        %v1692 = vunpack.c.l.b16 %v770
        %v1693 = vunpack.c.l.b16 %v771
        %v1694 = vunpack.c.l.b16 %v772
        %v1695 = vunpack.c.l.b16 %v773
        %v1696 = vunpack.c.l.b16 %v774
        %v1697 = vunpack.c.l.b16 %v775
        %v1698 = vunpack.c.l.b16 %v776
        %v1699 = vunpack.c.l.b16 %v777
        %v1700 = vunpack.c.l.b16 %v778
        %v1701 = vunpack.c.l.b16 %v779
        %v1702 = vunpack.c.l.b16 %v780
        %v1703 = vunpack.c.l.b16 %v781
        %v1704 = vunpack.c.l.b16 %v782
        %v1705 = vunpack.c.l.b16 %v783
        %v1706 = vunpack.c.l.b16 %v784
        %v1707 = vunpack.c.l.b16 %v785
        %v1708 = vunpack.c.l.b16 %v786
        %v1709 = vunpack.c.l.b16 %v787
        %v1710 = vunpack.c.l.b16 %v788
        %v1711 = vunpack.c.l.b16 %v789
        %v1712 = vunpack.c.l.b16 %v790
        %v1713 = vunpack.c.l.b16 %v791
        %v1714 = vunpack.c.l.b16 %v792
        %v1715 = vunpack.c.l.b16 %v793
        %v1716 = vunpack.c.l.b16 %v794
        %v1717 = vunpack.c.l.b16 %v795
        %v1718 = vunpack.c.l.b16 %v796
        %v1719 = vunpack.c.l.b16 %v797
        %v1720 = vunpack.c.l.b16 %v798
        %v1721 = vunpack.c.l.b16 %v799
        %v1722 = vunpack.c.l.b16 %v800
        %v1723 = vunpack.c.l.b16 %v801
        %v1724 = vunpack.c.l.b16 %v802
        %v1725 = vunpack.c.l.b16 %v803
        %v1726 = vunpack.c.l.b16 %v804
        %v1727 = vunpack.c.l.b16 %v805
        %v1728 = vunpack.c.l.b16 %v806
        %v1729 = vunpack.c.l.b16 %v807
        %v1730 = vunpack.c.l.b16 %v808
        %v1731 = vunpack.c.l.b16 %v809
        %v1732 = vunpack.c.l.b16 %v810
        %v1733 = vunpack.c.l.b16 %v811
        %v1734 = vunpack.c.l.b16 %v812
        %v1735 = vunpack.c.l.b16 %v813
        %v1736 = vunpack.c.l.b16 %v814
        %v1737 = vunpack.c.l.b16 %v815
        %v1738 = vunpack.c.l.b16 %v816
        %v1739 = vunpack.c.l.b16 %v817
        %v1740 = vunpack.c.l.b16 %v818
        %v1741 = vunpack.c.l.b16 %v819
        %v1742 = vunpack.c.l.b16 %v820
        %v1743 = vunpack.c.l.b16 %v821
        %v1744 = vunpack.c.l.b16 %v822
        %v1745 = vunpack.c.l.b16 %v823
        %v1746 = vunpack.c.l.b16 %v824
        %v1747 = vunpack.c.l.b16 %v825
        %v1748 = vunpack.c.l.b16 %v826
        %v1749 = vunpack.c.l.b16 %v827
        %v1750 = vpack.c.b16 %v1687, %v1686
        %v1751 = vpack.c.b16 %v1689, %v1688
        %v1752 = vpack.c.b16 %v1691, %v1690
        %v1753 = vpack.c.b16 %v1693, %v1692
        %v1754 = vpack.c.b16 %v1695, %v1694
        %v1755 = vpack.c.b16 %v1697, %v1696
        %v1756 = vpack.c.b16 %v1699, %v1698
        %v1757 = vpack.c.b16 %v1701, %v1700
        %v1758 = vpack.c.b16 %v1703, %v1702
        %v1759 = vpack.c.b16 %v1705, %v1704
        %v1760 = vpack.c.b16 %v1707, %v1706
        %v1761 = vpack.c.b16 %v1709, %v1708
        %v1762 = vpack.c.b16 %v1711, %v1710
        %v1763 = vpack.c.b16 %v1713, %v1712
        %v1764 = vpack.c.b16 %v1715, %v1714
        %v1765 = vpack.c.b16 %v1717, %v1716
        %v1766 = vpack.c.b16 %v1719, %v1718
        %v1767 = vpack.c.b16 %v1721, %v1720
        %v1768 = vpack.c.b16 %v1723, %v1722
        %v1769 = vpack.c.b16 %v1725, %v1724
        %v1770 = vpack.c.b16 %v1727, %v1726
        %v1771 = vpack.c.b16 %v1729, %v1728
        %v1772 = vpack.c.b16 %v1731, %v1730
        %v1773 = vpack.c.b16 %v1733, %v1732
        %v1774 = vpack.c.b16 %v1735, %v1734
        %v1775 = vpack.c.b16 %v1737, %v1736
        %v1776 = vpack.c.b16 %v1739, %v1738
        %v1777 = vpack.c.b16 %v1741, %v1740
        %v1778 = vpack.c.b16 %v1743, %v1742
        %v1779 = vpack.c.b16 %v1745, %v1744
        %v1780 = vpack.c.b16 %v1747, %v1746
        %v1781 = vpack.c.b16 %v1749, %v1748
        %1814 = vmatprep.subr.bf16.mxu0 0
        %1815 = vmatpush1.bf16.msra.mxu0 %v1757
        %1816 = vmatprep.subr.bf16.mxu0 0
        %1817 = vmatpush1.bf16.msra.mxu0 %v1756
        %1818 = vmatprep.subr.bf16.mxu0 0
        %1819 = vmatpush1.bf16.msra.mxu0 %v1755
        %1820 = vmatprep.subr.bf16.mxu0 0
        %1821 = vmatpush1.bf16.msra.mxu0 %v1754
        %1822 = vmatprep.subr.bf16.mxu0 0
        %1823 = vmatpush1.bf16.msra.mxu0 %v1753
        %1824 = vmatprep.subr.bf16.mxu0 0
        %1825 = vmatpush1.bf16.msra.mxu0 %v1752
        %1826 = vmatprep.subr.bf16.mxu0 0
        %1827 = vmatpush1.bf16.msra.mxu0 %v1751
        %1828 = vmatprep.subr.bf16.mxu0 0
        %1829 = vmatpush1.bf16.msra.mxu0 %v1750
        %1830 = vmatprep.subr.bf16.mxu0 0
        %1831 = vmatpush2.bf16.msra.mxu0 %v1765
        %1832 = vmatprep.subr.bf16.mxu0 0
        %1833 = vmatpush2.bf16.msra.mxu0 %v1764
        %1834 = vmatprep.subr.bf16.mxu0 0
        %1835 = vmatpush2.bf16.msra.mxu0 %v1763
        %1836 = vmatprep.subr.bf16.mxu0 0
        %1837 = vmatpush2.bf16.msra.mxu0 %v1762
        %1838 = vmatprep.subr.bf16.mxu0 0
        %1839 = vmatpush2.bf16.msra.mxu0 %v1761
        %1840 = vmatprep.subr.bf16.mxu0 0
        %1841 = vmatpush2.bf16.msra.mxu0 %v1760
        %1842 = vmatprep.subr.bf16.mxu0 0
        %1843 = vmatpush2.bf16.msra.mxu0 %v1759
        %1844 = vmatprep.subr.bf16.mxu0 0
        %1845 = vmatpush2.bf16.msra.mxu0 %v1758
        %1846 = vmatprep.mubr.bf16.mxu0 %v749
        %1847 = vmatmul.mubr.bf16.gmra.mxu0 %v748
        %v1848 = vpop.f32.mrf.mxu0
        %v1849 = vadd.f32 %v1592, %v1848
        %v1850 = vpop.f32.mrf.mxu0
        %v1851 = vpop.f32.mrf.mxu0
        %v1852 = vadd.f32 %v1595, %v1851
        %v1853 = vpop.f32.mrf.mxu0
        %1854 = vmatprep.mubr.bf16.mxu0 %v753
        %1855 = vmatmul.mubr.bf16.gmra.mxu0 %v752
        %v1856 = vpop.f32.mrf.mxu0
        %v1857 = vadd.f32 %v1600, %v1856
        %v1858 = vpop.f32.mrf.mxu0
        %v1859 = vpop.f32.mrf.mxu0
        %v1860 = vadd.f32 %v1603, %v1859
        %v1861 = vpop.f32.mrf.mxu0
        %1862 = vmatprep.mubr.bf16.mxu0 %v757
        %1863 = vmatmul.mubr.bf16.gmra.mxu0 %v756
        %v1864 = vpop.f32.mrf.mxu0
        %v1865 = vadd.f32 %v1608, %v1864
        %v1866 = vpop.f32.mrf.mxu0
        %v1867 = vpop.f32.mrf.mxu0
        %v1868 = vadd.f32 %v1611, %v1867
        %v1869 = vpop.f32.mrf.mxu0
        %1870 = vmatprep.mubr.bf16.mxu0 %v761
        %1871 = vmatmul.mubr.bf16.gmra.mxu0 %v760
        %v1872 = vpop.f32.mrf.mxu0
        %v1873 = vadd.f32 %v1616, %v1872
        %v1874 = vpop.f32.mrf.mxu0
        %v1875 = vpop.f32.mrf.mxu0
        %v1876 = vadd.f32 %v1619, %v1875
        %v1877 = vpop.f32.mrf.mxu0
        %1878 = vdwg.mxu0
        %1879 = vmatprep.subr.bf16.mxu0 0
        %1880 = vmatpush1.bf16.msra.mxu0 %v1773
        %1881 = vmatprep.subr.bf16.mxu0 0
        %1882 = vmatpush1.bf16.msra.mxu0 %v1772
        %1883 = vmatprep.subr.bf16.mxu0 0
        %1884 = vmatpush1.bf16.msra.mxu0 %v1771
        %1885 = vmatprep.subr.bf16.mxu0 0
        %1886 = vmatpush1.bf16.msra.mxu0 %v1770
        %1887 = vmatprep.subr.bf16.mxu0 0
        %1888 = vmatpush1.bf16.msra.mxu0 %v1769
        %1889 = vmatprep.subr.bf16.mxu0 0
        %1890 = vmatpush1.bf16.msra.mxu0 %v1768
        %1891 = vmatprep.subr.bf16.mxu0 0
        %1892 = vmatpush1.bf16.msra.mxu0 %v1767
        %1893 = vmatprep.subr.bf16.mxu0 0
        %1894 = vmatpush1.bf16.msra.mxu0 %v1766
        %1895 = vmatprep.subr.bf16.mxu0 0
        %1896 = vmatpush2.bf16.msra.mxu0 %v1781
        %1897 = vmatprep.subr.bf16.mxu0 0
        %1898 = vmatpush2.bf16.msra.mxu0 %v1780
        %1899 = vmatprep.subr.bf16.mxu0 0
        %1900 = vmatpush2.bf16.msra.mxu0 %v1779
        %1901 = vmatprep.subr.bf16.mxu0 0
        %1902 = vmatpush2.bf16.msra.mxu0 %v1778
        %1903 = vmatprep.subr.bf16.mxu0 0
        %1904 = vmatpush2.bf16.msra.mxu0 %v1777
        %1905 = vmatprep.subr.bf16.mxu0 0
        %1906 = vmatpush2.bf16.msra.mxu0 %v1776
        %1907 = vmatprep.subr.bf16.mxu0 0
        %1908 = vmatpush2.bf16.msra.mxu0 %v1775
        %1909 = vmatprep.subr.bf16.mxu0 0
        %1910 = vmatpush2.bf16.msra.mxu0 %v1774
        %1911 = vmatprep.mubr.bf16.mxu0 %v751
        %1912 = vmatmul.mubr.bf16.gmra.mxu0 %v750
        %v1913 = vpop.f32.mrf.mxu0
        %v1914 = vadd.f32 %v1849, %v1913
        %v1915 = vpop.f32.mrf.mxu0
        %v1916 = vpop.f32.mrf.mxu0
        %v1917 = vadd.f32 %v1852, %v1916
        %v1918 = vpop.f32.mrf.mxu0
        %1919 = vmatprep.mubr.bf16.mxu0 %v755
        %1920 = vmatmul.mubr.bf16.gmra.mxu0 %v754
        %v1921 = vpop.f32.mrf.mxu0
        %v1922 = vadd.f32 %v1857, %v1921
        %v1923 = vpop.f32.mrf.mxu0
        %v1924 = vpop.f32.mrf.mxu0
        %v1925 = vadd.f32 %v1860, %v1924
        %v1926 = vpop.f32.mrf.mxu0
        %1927 = vmatprep.mubr.bf16.mxu0 %v759
        %1928 = vmatmul.mubr.bf16.gmra.mxu0 %v758
        %v1929 = vpop.f32.mrf.mxu0
        %v1930 = vadd.f32 %v1865, %v1929
        %v1931 = vpop.f32.mrf.mxu0
        %v1932 = vpop.f32.mrf.mxu0
        %v1933 = vadd.f32 %v1868, %v1932
        %v1934 = vpop.f32.mrf.mxu0
        %1935 = vmatprep.mubr.bf16.mxu0 %v763
        %1936 = vmatmul.mubr.bf16.gmra.mxu0 %v762
        %v1937 = vpop.f32.mrf.mxu0
        %v1938 = vadd.f32 %v1873, %v1937
        %v1939 = vpop.f32.mrf.mxu0
        %v1940 = vpop.f32.mrf.mxu0
        %v1941 = vadd.f32 %v1876, %v1940
        %v1942 = vpop.f32.mrf.mxu0
        %1943 = vdwg.mxu0
        %v1944 = vld [vmem:[%s4] sm:$0x1]
        %v1946 = vlaneseq
        %v1947 = vshrl.u32 %v1946, 7
        %v1948 = vsub.s32 0, %v1947
        %v1949 = vrot.slane %v1944, %v1948
        %v1951 = vadd.f32 %v1914, %v1949
        %v1952 = vadd.f32 %v1917, %v1949
        %v1953 = vadd.f32 %v1922, %v1949
        %v1954 = vadd.f32 %v1925, %v1949
        %v1955 = vadd.f32 %v1930, %v1949
        %v1956 = vadd.f32 %v1933, %v1949
        %v1957 = vadd.f32 %v1938, %v1949
        %v1958 = vadd.f32 %v1941, %v1949
        %1959 = vadd.xlane.f32.xlu0 %v1951
        %v1960 = vpop.xlane.xlu0 %1959
        %1961 = vadd.xlane.f32.xlu0 %v1952
        %v1962 = vpop.xlane.xlu0 %1961
        %1963 = vadd.xlane.f32.xlu0 %v1953
        %v1964 = vpop.xlane.xlu0 %1963
        %1965 = vadd.xlane.f32.xlu0 %v1954
        %v1966 = vpop.xlane.xlu0 %1965
        %1967 = vadd.xlane.f32.xlu0 %v1955
        %v1968 = vpop.xlane.xlu0 %1967
        %1969 = vadd.xlane.f32.xlu0 %v1956
        %v1970 = vpop.xlane.xlu0 %1969
        %1971 = vadd.xlane.f32.xlu0 %v1957
        %v1972 = vpop.xlane.xlu0 %1971
        %1973 = vadd.xlane.f32.xlu0 %v1958
        %v1974 = vpop.xlane.xlu0 %1973
        %v1975 = vrcp.pop 128.0
        %v1976 = vmul.f32 %v1960, %v1975
        %v1977 = vmul.f32 %v1962, %v1975
        %v1978 = vmul.f32 %v1964, %v1975
        %v1979 = vmul.f32 %v1966, %v1975
        %v1980 = vmul.f32 %v1968, %v1975
        %v1981 = vmul.f32 %v1970, %v1975
        %v1982 = vmul.f32 %v1972, %v1975
        %v1983 = vmul.f32 %v1974, %v1975
        %v1984 = vsub.f32 %v1951, %v1976
        %v1985 = vsub.f32 %v1952, %v1977
        %v1986 = vsub.f32 %v1953, %v1978
        %v1987 = vsub.f32 %v1954, %v1979
        %v1988 = vsub.f32 %v1955, %v1980
        %v1989 = vsub.f32 %v1956, %v1981
        %v1990 = vsub.f32 %v1957, %v1982
        %v1991 = vsub.f32 %v1958, %v1983
        %v1992 = vmul.f32 %v1984, %v1984
        %v1993 = vmul.f32 %v1985, %v1985
        %v1994 = vmul.f32 %v1986, %v1986
        %v1995 = vmul.f32 %v1987, %v1987
        %v1996 = vmul.f32 %v1988, %v1988
        %v1997 = vmul.f32 %v1989, %v1989
        %v1998 = vmul.f32 %v1990, %v1990
        %v1999 = vmul.f32 %v1991, %v1991
        %2000 = vadd.xlane.f32.xlu0 %v1992
        %v2001 = vpop.xlane.xlu0 %2000
        %2002 = vadd.xlane.f32.xlu0 %v1993
        %v2003 = vpop.xlane.xlu0 %2002
        %2004 = vadd.xlane.f32.xlu0 %v1994
        %v2005 = vpop.xlane.xlu0 %2004
        %2006 = vadd.xlane.f32.xlu0 %v1995
        %v2007 = vpop.xlane.xlu0 %2006
        %2008 = vadd.xlane.f32.xlu0 %v1996
        %v2009 = vpop.xlane.xlu0 %2008
        %2010 = vadd.xlane.f32.xlu0 %v1997
        %v2011 = vpop.xlane.xlu0 %2010
        %2012 = vadd.xlane.f32.xlu0 %v1998
        %v2013 = vpop.xlane.xlu0 %2012
        %2014 = vadd.xlane.f32.xlu0 %v1999
        %v2015 = vpop.xlane.xlu0 %2014
        %v2016 = vmul.f32 %v2001, %v1975
        %v2017 = vmul.f32 %v2003, %v1975
        %v2018 = vmul.f32 %v2005, %v1975
        %v2019 = vmul.f32 %v2007, %v1975
        %v2020 = vmul.f32 %v2009, %v1975
        %v2021 = vmul.f32 %v2011, %v1975
        %v2022 = vmul.f32 %v2013, %v1975
        %v2023 = vmul.f32 %v2015, %v1975
        %v2024 = vadd.f32 %v2016, 1e-05
        %v2025 = vadd.f32 %v2017, 1e-05
        %v2026 = vadd.f32 %v2018, 1e-05
        %v2027 = vadd.f32 %v2019, 1e-05
        %v2028 = vadd.f32 %v2020, 1e-05
        %v2029 = vadd.f32 %v2021, 1e-05
        %v2030 = vadd.f32 %v2022, 1e-05
        %v2031 = vadd.f32 %v2023, 1e-05
        %v2032 = vrsqrt.pop %v2024
        %v2033 = vrsqrt.pop %v2025
        %v2034 = vrsqrt.pop %v2026
        %v2035 = vrsqrt.pop %v2027
        %v2036 = vrsqrt.pop %v2028
        %v2037 = vrsqrt.pop %v2029
        %v2038 = vrsqrt.pop %v2030
        %v2039 = vrsqrt.pop %v2031
        %v2040 = vmul.f32 %v1984, %v2032
        %v2041 = vmul.f32 %v1985, %v2033
        %v2042 = vmul.f32 %v1986, %v2034
        %v2043 = vmul.f32 %v1987, %v2035
        %v2044 = vmul.f32 %v1988, %v2036
        %v2045 = vmul.f32 %v1989, %v2037
        %v2046 = vmul.f32 %v1990, %v2038
        %v2047 = vmul.f32 %v1991, %v2039
        %v2049 = vlaneseq
        %v2050 = vshrl.u32 %v2049, 7
        %v2051 = vsub.s32 0, %v2050
        %v2052 = vrot.slane %v350, %v2051
        %v2054 = vmul.f32 %v2040, %v2052
        %v2055 = vmul.f32 %v2041, %v2052
        %v2056 = vmul.f32 %v2042, %v2052
        %v2057 = vmul.f32 %v2043, %v2052
        %v2058 = vmul.f32 %v2044, %v2052
        %v2059 = vmul.f32 %v2045, %v2052
        %v2060 = vmul.f32 %v2046, %v2052
        %v2061 = vmul.f32 %v2047, %v2052
        %v2063 = vlaneseq
        %v2064 = vshrl.u32 %v2063, 7
        %v2065 = vsub.s32 0, %v2064
        %v2066 = vrot.slane %v351, %v2065
        %v2068 = vadd.f32 %v2054, %v2066
        %v2069 = vadd.f32 %v2055, %v2066
        %v2070 = vadd.f32 %v2056, %v2066
        %v2071 = vadd.f32 %v2057, %v2066
        %v2072 = vadd.f32 %v2058, %v2066
        %v2073 = vadd.f32 %v2059, %v2066
        %v2074 = vadd.f32 %v2060, %v2066
        %v2075 = vadd.f32 %v2061, %v2066
        %v2076 = vadd.f32 %v342, %v2068
        %v2077 = vadd.f32 %v343, %v2069
        %v2078 = vadd.f32 %v344, %v2070
        %v2079 = vadd.f32 %v345, %v2071
        %v2080 = vadd.f32 %v346, %v2072
        %v2081 = vadd.f32 %v347, %v2073
        %v2082 = vadd.f32 %v348, %v2074
        %v2083 = vadd.f32 %v349, %v2075
        %2084 = vst [vmem:[%s338] sm:$0xff] %v2076
        %2085 = vst [vmem:[%s338 + $0x8] sm:$0xff] %v2077
        %2086 = vst [vmem:[%s338 + $0x10] sm:$0xff] %v2078
        %2087 = vst [vmem:[%s338 + $0x18] sm:$0xff] %v2079
        %2088 = vst [vmem:[%s338 + $0x20] sm:$0xff] %v2080
        %2089 = vst [vmem:[%s338 + $0x28] sm:$0xff] %v2081
        %2090 = vst [vmem:[%s338 + $0x30] sm:$0xff] %v2082
        %2091 = vst [vmem:[%s338 + $0x38] sm:$0xff] %v2083
        %s2092 = sand.u32 %s186, 1
        %s2093 = scalar_lea.sflag [#allocation4], %s2092
        %s2094 = sand.u32 %s186, 1
        %s2095 = smul.addr %s2094, 64
        %s2096 = scalar_lea.vmem [#allocation10], %s2095
        // Predicated region
        $region65: #{tpu_custom_call.1} parent=47 // pred_check
          %p2097 = pneg %p196
        $region66: #{tpu_custom_call.1} parent=47 // pred_check_branch
          %2099 = sbr.rel (%p2097) target = $region68
        $region67: #{tpu_custom_call.1} parent=47 // pred_region
          %s2100 = smul.u32 8, %s26
          %s2102 = ssub.s32 1024, 1024
          %2103 = vsyncadd %s2093, %s2102
          %s2104 = smul.addr %s2100, 128
          %s2105 = scalar_lea.hbm %s7, %s2104
          %s2106 = sshll.u32 %s2096, 4
          %s2107 = int_to_ptr.vmem [resolvable:$true] %s2106
          %2112 = dma.vmem_to_hbm [thread:$0]  %s2107, 1024, %s2105, %s2093, 128, 128, 8
        $region68: #{tpu_custom_call.1} parent=47 // pred_fallthru
          _
      $region48: #{tpu_custom_call.1} parent=5 // pred_fallthru
        _
      %p2113 = scmp.le.s32.totalorder 2, %s21
      // Predicated region
      $region69: #{tpu_custom_call.1} parent=5 // pred_check
        %p2114 = pneg %p2113
      $region70: #{tpu_custom_call.1} parent=5 // pred_check_branch
        %2116 = sbr.rel (%p2114) target = $region72
      $region71: #{tpu_custom_call.1} parent=5 // pred_region
        %s2117 = ssub.s32 %s21, 2
        // Predicated region
        $region73: #{tpu_custom_call.1} parent=71 // pred_check
          %p2118 = pneg %p202
        $region74: #{tpu_custom_call.1} parent=71 // pred_check_branch
          %2120 = sbr.rel (%p2118) target = $region76
        $region75: #{tpu_custom_call.1} parent=71 // pred_region
          %s2121 = sand.u32 %s187, 1
          %s2122 = scalar_lea.sflag [#allocation4], %s2121
          %s2123 = sand.u32 %s187, 1
          %s2124 = smul.addr %s2123, 64
          %s2125 = scalar_lea.vmem [#allocation10], %s2124
          %2126 = dma.done %s2122, 1024
        $region76: #{tpu_custom_call.1} parent=71 // pred_fallthru
          _
      $region72: #{tpu_custom_call.1} parent=5 // pred_fallthru
        _
    $region6: #{tpu_custom_call.1} parent=1 // loop_footer
      %s25 = sadd.s32 1, %s21
    $region7: #{tpu_custom_call.1} parent=1 // loop_footer_branch
      %20 = sbr.rel target = $region3
    $region8: #{tpu_custom_call.1} parent=1 // loop_exit
      _
    %2127 = vsyncpa [#allocation3], 1
    %s2128 = scalar_lea.sflag [#allocation3], 1
    %2129 = vsyncpa %s2128, 1
    %2130 = vsyncpa [#allocation6], 1
    %2131 = vsyncpa [#allocation9], 1
    %2132 = vsyncpa [#allocation4], 1
    %s2133 = scalar_lea.sflag [#allocation4], 1
    %2134 = vsyncpa %s2133, 1

</llo_original>
